<compile_context>
chip_gen: v5e
topology: v5e:2x2
jax: 0.10.0
libtpu: 0.0.40
codegen_flags: <defaults>
</compile_context>

<pallas_src>
import functools

import jax
import jax.numpy as jnp
from jax import lax
from jax.experimental import pallas as pl
from jax.experimental.pallas import tpu as pltpu

EPS = 1e-5
LANE = 128


def _round_up(x, m):
    return (x + m - 1) // m * m


def _group_norm(y, M, MT, gamma, beta, denom):
    """GroupNorm on a flattened (HW, Cp) tile.

    M:  (Cp, G) channel->group indicator (zero rows for padded channels).
    MT: (G, Cp).  gamma/beta: (1, Cp) (zero for padded channels).
    denom: number of *real* elements per group (HW * C_real/G), Python float.
    """
    s_c = jnp.sum(y, axis=0, keepdims=True)                            # (1, Cp)
    s_g = jnp.dot(s_c, M, preferred_element_type=jnp.float32)          # (1, G)
    mean_c = jnp.dot(s_g / denom, MT,
                     preferred_element_type=jnp.float32)               # (1, Cp)
    d = y - mean_c
    sq_c = jnp.sum(d * d, axis=0, keepdims=True)                       # (1, Cp)
    sq_g = jnp.dot(sq_c, M, preferred_element_type=jnp.float32)        # (1, G)
    inv_c = jnp.dot(lax.rsqrt(sq_g / denom + EPS), MT,
                    preferred_element_type=jnp.float32)                # (1, Cp)
    scale = inv_c * gamma                      # fold per-channel factors first
    return d * scale + beta                    # single (HW,Cp) mul + add


def _bottleneck_kernel(x_ref, w1_ref, b1_ref, w2_ref, b2_ref, w3_ref, b3_ref,
                       g1_ref, bt1_ref, g2_ref, bt2_ref, g3_ref, bt3_ref,
                       m1_ref, m1t_ref, m3_ref, m3t_ref,
                       out_ref, *, H, W, denom1, denom3):
    HW = H * W
    C1p = w1_ref.shape[1]

    xf = x_ref[0]                                          # (HW, Cinp) f32

    # ---- conv1 (1x1) + GroupNorm + relu (bf16 MXU, f32 accumulate) ---------
    y = jnp.dot(xf.astype(jnp.bfloat16), w1_ref[...],
                preferred_element_type=jnp.float32) + b1_ref[...]
    y = _group_norm(y, m1_ref[...], m1t_ref[...], g1_ref[...], bt1_ref[...],
                    denom1)
    y = jnp.maximum(y, 0.0)                                # (HW, C1p)

    # ---- conv2 (3x3, pad 1, stride 1): 9 accumulating tap matmuls ----------
    y_hwc = y.reshape(H, W, C1p)
    zc = jnp.zeros((H, 1, C1p), jnp.float32)
    yp = jnp.concatenate([zc, y_hwc, zc], axis=1)          # (H, W+2, C1p)
    zr = jnp.zeros((1, W + 2, C1p), jnp.float32)
    yp = jnp.concatenate([zr, yp, zr], axis=0)             # (H+2, W+2, C1p)

    acc2 = None
    for t in range(9):                                     # static unroll
        dy, dx = divmod(t, 3)                              # y[i+dy-1, j+dx-1]
        tap = yp[dy:dy + H, dx:dx + W, :].reshape(HW, C1p)
        part = jnp.dot(tap.astype(jnp.bfloat16), w2_ref[t],
                       preferred_element_type=jnp.float32)
        acc2 = part if acc2 is None else acc2 + part
    y2 = acc2 + b2_ref[...]
    y2 = _group_norm(y2, m1_ref[...], m1t_ref[...], g2_ref[...], bt2_ref[...],
                     denom1)
    y2 = jnp.maximum(y2, 0.0)                              # (HW, C1p)

    # ---- conv3 (1x1) + GroupNorm + relu ------------------------------------
    y3 = jnp.dot(y2.astype(jnp.bfloat16), w3_ref[...],
                 preferred_element_type=jnp.float32) + b3_ref[...]
    y3 = _group_norm(y3, m3_ref[...], m3t_ref[...], g3_ref[...], bt3_ref[...],
                     denom3)
    y3 = jnp.maximum(y3, 0.0)                              # (HW, Coutp)

    # ---- residual add + relu (in_planes == planes, stride == 1) ------------
    out_ref[0] = jnp.maximum(xf + y3, 0.0)


def _group_matrix(c_real, c_pad, groups):
    """(c_pad, groups) one-hot channel->group indicator; padded rows are zero."""
    cg = c_real // groups
    c = jnp.arange(c_pad)
    return ((c[:, None] < c_real) &
            ((c[:, None] // cg) == jnp.arange(groups)[None, :])
            ).astype(jnp.float32)


def bottleneck_block(x_nchw, params, planes):
    """params holds PyTorch-layout weights; x_nchw is (N, Cin, H, W) f32."""
    N, Cin, H, W = x_nchw.shape
    C1 = planes // 4
    G = planes // 8
    Cout = planes
    assert Cin == Cout, "stride=1 residual add requires in_planes == planes"
    assert W % 8 == 0, "layout-free (HW,C) <-> (H,W,C) reshape needs W % 8 == 0"
    HW = H * W

    Cinp = _round_up(Cin, LANE)
    C1p = _round_up(C1, LANE)
    Coutp = _round_up(Cout, LANE)

    def padc(a, axis, target):
        pad = [(0, 0)] * a.ndim
        pad[axis] = (0, target - a.shape[axis])
        return jnp.pad(a, pad)

    # NCHW -> (N, HW, Cinp) f32 (residual path stays f32; matmuls cast to bf16).
    x = jnp.transpose(x_nchw, (0, 2, 3, 1)).astype(jnp.float32)
    x = padc(x.reshape(N, HW, Cin), 2, Cinp)

    # PyTorch OIHW conv weights -> MXU-friendly, zero-padded, bf16 layouts.
    # Zero-padded channels stay exactly 0 through conv -> GN -> relu because
    # weights / bias / gamma / beta / group-indicator rows are zero there.
    w1 = padc(padc(jnp.transpose(params["w1"][:, :, 0, 0], (1, 0)), 0, Cinp),
              1, C1p).astype(jnp.bfloat16)                        # (Cinp, C1p)
    w2 = jnp.transpose(params["w2"], (2, 3, 1, 0))                # (kh,kw,ci,co)
    w2 = padc(padc(w2, 2, C1p), 3, C1p)
    w2 = w2.reshape(9, C1p, C1p).astype(jnp.bfloat16)             # per-tap slabs
    w3 = padc(padc(jnp.transpose(params["w3"][:, :, 0, 0], (1, 0)), 0, C1p),
              1, Coutp).astype(jnp.bfloat16)                      # (C1p, Coutp)

    b1 = padc(params["b1"].reshape(1, C1), 1, C1p)
    b2 = padc(params["b2"].reshape(1, C1), 1, C1p)
    b3 = padc(params["b3"].reshape(1, Cout), 1, Coutp)
    g1 = padc(params["g1"].reshape(1, C1), 1, C1p)
    bt1 = padc(params["bt1"].reshape(1, C1), 1, C1p)
    g2 = padc(params["g2"].reshape(1, C1), 1, C1p)
    bt2 = padc(params["bt2"].reshape(1, C1), 1, C1p)
    g3 = padc(params["g3"].reshape(1, Cout), 1, Coutp)
    bt3 = padc(params["bt3"].reshape(1, Cout), 1, Coutp)

    m1 = _group_matrix(C1, C1p, G)
    m3 = _group_matrix(Cout, Coutp, G)
    m1t = m1.T
    m3t = m3.T

    kernel = functools.partial(_bottleneck_kernel, H=H, W=W,
                               denom1=float(HW * (C1 // G)),
                               denom3=float(HW * (Cout // G)))

    def full_spec(shape):
        nd = len(shape)
        return pl.BlockSpec(shape, lambda n, _nd=nd: (0,) * _nd)

    inputs = (x, w1, b1, w2, b2, w3, b3, g1, bt1, g2, bt2, g3, bt3,
              m1, m1t, m3, m3t)
    in_specs = [pl.BlockSpec((1, HW, Cinp), lambda n: (n, 0, 0))]
    in_specs += [full_spec(a.shape) for a in inputs[1:]]

    out = pl.pallas_call(
        kernel,
        out_shape=jax.ShapeDtypeStruct((N, HW, Coutp), jnp.float32),
        grid_spec=pltpu.PrefetchScalarGridSpec(
            num_scalar_prefetch=0,
            grid=(N,),
            in_specs=in_specs,
            out_specs=pl.BlockSpec((1, HW, Coutp), lambda n: (n, 0, 0)),
        ),
        compiler_params=pltpu.CompilerParams(
            dimension_semantics=("parallel",)),
    )(*inputs)

    # (N, HW, Coutp) -> NCHW, drop channel padding.
    out = out.reshape(N, H, W, Coutp)[..., :Cout]
    return jnp.transpose(out, (0, 3, 1, 2))


# ---------------------------------------------------------------------------
# Pure-JAX f32 reference (mirrors the PyTorch module) for a correctness check.
# ---------------------------------------------------------------------------
def _ref_forward(x, params, planes):
    G = planes // 8

    def conv(x, w, b, pad):
        y = lax.conv_general_dilated(
            x, w, (1, 1), [(pad, pad), (pad, pad)],
            dimension_numbers=("NCHW", "OIHW", "NCHW"))
        return y + b[None, :, None, None]

    def gn(x, g, bt):
        N, C, H, W = x.shape
        t = x.reshape(N, G, C // G, H, W)
        mean = t.mean(axis=(2, 3, 4), keepdims=True)
        var = ((t - mean) ** 2).mean(axis=(2, 3, 4), keepdims=True)
        t = (t - mean) / jnp.sqrt(var + EPS)
        return (t.reshape(N, C, H, W) * g[None, :, None, None]
                + bt[None, :, None, None])

    y = jax.nn.relu(gn(conv(x, params["w1"], params["b1"], 0),
                       params["g1"], params["bt1"]))
    y = jax.nn.relu(gn(conv(y, params["w2"], params["b2"], 1),
                       params["g2"], params["bt2"]))
    y = jax.nn.relu(gn(conv(y, params["w3"], params["b3"], 0),
                       params["g3"], params["bt3"]))
    return jax.nn.relu(x + y)


if __name__ == "__main__":
    N, H, W = 2, 16, 16
    planes = 32
    in_planes = planes          # stride=1 => residual add requires Cin == Cout
    C1 = planes // 4

    key = jax.random.PRNGKey(0)
    ks = jax.random.split(key, 14)
    params = {
        "w1": 0.2 * jax.random.normal(ks[0], (C1, in_planes, 1, 1), jnp.float32),
        "b1": 0.1 * jax.random.normal(ks[1], (C1,), jnp.float32),
        "w2": 0.2 * jax.random.normal(ks[2], (C1, C1, 3, 3), jnp.float32),
        "b2": 0.1 * jax.random.normal(ks[3], (C1,), jnp.float32),
        "w3": 0.2 * jax.random.normal(ks[4], (planes, C1, 1, 1), jnp.float32),
        "b3": 0.1 * jax.random.normal(ks[5], (planes,), jnp.float32),
        "g1": 1.0 + 0.1 * jax.random.normal(ks[6], (C1,), jnp.float32),
        "bt1": 0.1 * jax.random.normal(ks[7], (C1,), jnp.float32),
        "g2": 1.0 + 0.1 * jax.random.normal(ks[8], (C1,), jnp.float32),
        "bt2": 0.1 * jax.random.normal(ks[9], (C1,), jnp.float32),
        "g3": 1.0 + 0.1 * jax.random.normal(ks[10], (planes,), jnp.float32),
        "bt3": 0.1 * jax.random.normal(ks[11], (planes,), jnp.float32),
    }
    x = jax.random.normal(ks[12], (N, in_planes, H, W), jnp.float32)

    out = jax.block_until_ready(bottleneck_block(x, params, planes))
    ref = jax.block_until_ready(_ref_forward(x, params, planes))

    assert out.shape == (N, planes, H, W), out.shape
    # Kernel uses bf16 MXU inputs (f32 accumulation / GN / relu), so compare at
    # a bf16-appropriate tolerance; structural bugs would be O(1) errors.
    assert jnp.allclose(out, ref, rtol=1e-1, atol=1e-1), (
        float(jnp.max(jnp.abs(out - ref))))
    print("KERNEL_OK")
</pallas_src>

<mosaic_0001>
module attributes {stable_mosaic.version = 11 : i64} {
  func.func @_bottleneck_kernel(%arg0: i32, %arg1: memref<1x256x128xf32, #tpu.memory_space<vmem>>, %arg2: memref<128x128xbf16, #tpu.memory_space<vmem>>, %arg3: memref<1x128xf32, #tpu.memory_space<vmem>>, %arg4: memref<9x128x128xbf16, #tpu.memory_space<vmem>>, %arg5: memref<1x128xf32, #tpu.memory_space<vmem>>, %arg6: memref<128x128xbf16, #tpu.memory_space<vmem>>, %arg7: memref<1x128xf32, #tpu.memory_space<vmem>>, %arg8: memref<1x128xf32, #tpu.memory_space<vmem>>, %arg9: memref<1x128xf32, #tpu.memory_space<vmem>>, %arg10: memref<1x128xf32, #tpu.memory_space<vmem>>, %arg11: memref<1x128xf32, #tpu.memory_space<vmem>>, %arg12: memref<1x128xf32, #tpu.memory_space<vmem>>, %arg13: memref<1x128xf32, #tpu.memory_space<vmem>>, %arg14: memref<128x4xf32, #tpu.memory_space<vmem>>, %arg15: memref<4x128xf32, #tpu.memory_space<vmem>>, %arg16: memref<128x4xf32, #tpu.memory_space<vmem>>, %arg17: memref<4x128xf32, #tpu.memory_space<vmem>>, %arg18: memref<1x256x128xf32, #tpu.memory_space<vmem>>) attributes {dimension_semantics = [#tpu.dimension_semantics<parallel>], iteration_bounds = array<i64: 2>, scalar_prefetch = 0 : i64, scratch_operands = 0 : i64, tpu.core_type = #tpu.core_type<tc>, window_params = [{transform_indices = @transform_0, window_bounds = array<i64: 1, 256, 128>}, {pipeline_mode = #tpu.pipeline_mode<synchronous>, transform_indices = @transform_1, window_bounds = array<i64: 128, 128>}, {pipeline_mode = #tpu.pipeline_mode<synchronous>, transform_indices = @transform_2, window_bounds = array<i64: 1, 128>}, {pipeline_mode = #tpu.pipeline_mode<synchronous>, transform_indices = @transform_3, window_bounds = array<i64: 9, 128, 128>}, {pipeline_mode = #tpu.pipeline_mode<synchronous>, transform_indices = @transform_4, window_bounds = array<i64: 1, 128>}, {pipeline_mode = #tpu.pipeline_mode<synchronous>, transform_indices = @transform_5, window_bounds = array<i64: 128, 128>}, {pipeline_mode = #tpu.pipeline_mode<synchronous>, transform_indices = @transform_6, window_bounds = array<i64: 1, 128>}, {pipeline_mode = #tpu.pipeline_mode<synchronous>, transform_indices = @transform_7, window_bounds = array<i64: 1, 128>}, {pipeline_mode = #tpu.pipeline_mode<synchronous>, transform_indices = @transform_8, window_bounds = array<i64: 1, 128>}, {pipeline_mode = #tpu.pipeline_mode<synchronous>, transform_indices = @transform_9, window_bounds = array<i64: 1, 128>}, {pipeline_mode = #tpu.pipeline_mode<synchronous>, transform_indices = @transform_10, window_bounds = array<i64: 1, 128>}, {pipeline_mode = #tpu.pipeline_mode<synchronous>, transform_indices = @transform_11, window_bounds = array<i64: 1, 128>}, {pipeline_mode = #tpu.pipeline_mode<synchronous>, transform_indices = @transform_12, window_bounds = array<i64: 1, 128>}, {pipeline_mode = #tpu.pipeline_mode<synchronous>, transform_indices = @transform_13, window_bounds = array<i64: 128, 4>}, {pipeline_mode = #tpu.pipeline_mode<synchronous>, transform_indices = @transform_14, window_bounds = array<i64: 4, 128>}, {pipeline_mode = #tpu.pipeline_mode<synchronous>, transform_indices = @transform_15, window_bounds = array<i64: 128, 4>}, {pipeline_mode = #tpu.pipeline_mode<synchronous>, transform_indices = @transform_16, window_bounds = array<i64: 4, 128>}, {transform_indices = @transform_17, window_bounds = array<i64: 1, 256, 128>}]} {
    %c0 = arith.constant 0 : index
    %c0_0 = arith.constant 0 : index
    %c0_1 = arith.constant 0 : index
    %0 = vector.load %arg1[%c0, %c0_0, %c0_1] : memref<1x256x128xf32, #tpu.memory_space<vmem>>, vector<1x256x128xf32>
    %1 = vector.shape_cast %0 : vector<1x256x128xf32> to vector<256x128xf32>
    %2 = arith.truncf %1 : vector<256x128xf32> to vector<256x128xbf16>
    %c0_2 = arith.constant 0 : index
    %c0_3 = arith.constant 0 : index
    %3 = vector.load %arg2[%c0_2, %c0_3] : memref<128x128xbf16, #tpu.memory_space<vmem>>, vector<128x128xbf16>
    %cst = arith.constant dense<0.000000e+00> : vector<256x128xf32>
    %4 = tpu.matmul %2, %3, %cst {dimension_numbers = #tpu.dot_dimension_numbers<[1], [0], [0], [1], [0, 0, 1, 1], [], []>} : vector<256x128xbf16>, vector<128x128xbf16>, vector<256x128xf32> -> vector<256x128xf32>
    %c0_4 = arith.constant 0 : index
    %c0_5 = arith.constant 0 : index
    %5 = vector.load %arg3[%c0_4, %c0_5] : memref<1x128xf32, #tpu.memory_space<vmem>>, vector<1x128xf32>
    %6 = vector.broadcast %5 : vector<1x128xf32> to vector<256x128xf32>
    %7 = arith.addf %4, %6 : vector<256x128xf32>
    %c0_6 = arith.constant 0 : index
    %c0_7 = arith.constant 0 : index
    %8 = vector.load %arg14[%c0_6, %c0_7] : memref<128x4xf32, #tpu.memory_space<vmem>>, vector<128x4xf32>
    %c0_8 = arith.constant 0 : index
    %c0_9 = arith.constant 0 : index
    %9 = vector.load %arg15[%c0_8, %c0_9] : memref<4x128xf32, #tpu.memory_space<vmem>>, vector<4x128xf32>
    %c0_10 = arith.constant 0 : index
    %c0_11 = arith.constant 0 : index
    %10 = vector.load %arg8[%c0_10, %c0_11] : memref<1x128xf32, #tpu.memory_space<vmem>>, vector<1x128xf32>
    %c0_12 = arith.constant 0 : index
    %c0_13 = arith.constant 0 : index
    %11 = vector.load %arg9[%c0_12, %c0_13] : memref<1x128xf32, #tpu.memory_space<vmem>>, vector<1x128xf32>
    %cst_14 = arith.constant dense<0.000000e+00> : vector<128xf32>
    %12 = vector.multi_reduction <add>, %7, %cst_14 [0] : vector<256x128xf32> to vector<128xf32>
    %13 = vector.shape_cast %12 : vector<128xf32> to vector<1x128xf32>
    %cst_15 = arith.constant dense<0.000000e+00> : vector<1x4xf32>
    %14 = tpu.matmul %13, %8, %cst_15 {dimension_numbers = #tpu.dot_dimension_numbers<[1], [0], [0], [1], [0, 0, 1, 1], [], []>} : vector<1x128xf32>, vector<128x4xf32>, vector<1x4xf32> -> vector<1x4xf32>
    %cst_16 = arith.constant 5.120000e+02 : f32
    %15 = vector.broadcast %cst_16 : f32 to vector<1x4xf32>
    %16 = arith.divf %14, %15 : vector<1x4xf32>
    %cst_17 = arith.constant dense<0.000000e+00> : vector<1x128xf32>
    %17 = tpu.matmul %16, %9, %cst_17 {dimension_numbers = #tpu.dot_dimension_numbers<[1], [0], [0], [1], [0, 0, 1, 1], [], []>} : vector<1x4xf32>, vector<4x128xf32>, vector<1x128xf32> -> vector<1x128xf32>
    %18 = vector.broadcast %17 : vector<1x128xf32> to vector<256x128xf32>
    %19 = arith.subf %7, %18 : vector<256x128xf32>
    %20 = arith.mulf %19, %19 : vector<256x128xf32>
    %cst_18 = arith.constant dense<0.000000e+00> : vector<128xf32>
    %21 = vector.multi_reduction <add>, %20, %cst_18 [0] : vector<256x128xf32> to vector<128xf32>
    %22 = vector.shape_cast %21 : vector<128xf32> to vector<1x128xf32>
    %cst_19 = arith.constant dense<0.000000e+00> : vector<1x4xf32>
    %23 = tpu.matmul %22, %8, %cst_19 {dimension_numbers = #tpu.dot_dimension_numbers<[1], [0], [0], [1], [0, 0, 1, 1], [], []>} : vector<1x128xf32>, vector<128x4xf32>, vector<1x4xf32> -> vector<1x4xf32>
    %cst_20 = arith.constant 5.120000e+02 : f32
    %24 = vector.broadcast %cst_20 : f32 to vector<1x4xf32>
    %25 = arith.divf %23, %24 : vector<1x4xf32>
    %cst_21 = arith.constant 9.99999974E-6 : f32
    %26 = vector.broadcast %cst_21 : f32 to vector<1x4xf32>
    %27 = arith.addf %25, %26 : vector<1x4xf32>
    %28 = math.rsqrt %27 : vector<1x4xf32>
    %cst_22 = arith.constant dense<0.000000e+00> : vector<1x128xf32>
    %29 = tpu.matmul %28, %9, %cst_22 {dimension_numbers = #tpu.dot_dimension_numbers<[1], [0], [0], [1], [0, 0, 1, 1], [], []>} : vector<1x4xf32>, vector<4x128xf32>, vector<1x128xf32> -> vector<1x128xf32>
    %30 = arith.mulf %29, %10 : vector<1x128xf32>
    %31 = vector.broadcast %30 : vector<1x128xf32> to vector<256x128xf32>
    %32 = arith.mulf %19, %31 : vector<256x128xf32>
    %33 = vector.broadcast %11 : vector<1x128xf32> to vector<256x128xf32>
    %34 = arith.addf %32, %33 : vector<256x128xf32>
    %cst_23 = arith.constant 0.000000e+00 : f32
    %35 = vector.broadcast %cst_23 : f32 to vector<256x128xf32>
    %36 = arith.maximumf %34, %35 : vector<256x128xf32>
    %37 = vector.shape_cast %36 : vector<256x128xf32> to vector<16x16x128xf32>
    %cst_24 = arith.constant 0.000000e+00 : f32
    %38 = vector.broadcast %cst_24 : f32 to vector<16x1x128xf32>
    %39 = tpu.concatenate %38, %37, %38 in 1 : vector<16x1x128xf32>, vector<16x16x128xf32>, vector<16x1x128xf32> -> vector<16x18x128xf32>
    %cst_25 = arith.constant 0.000000e+00 : f32
    %40 = vector.broadcast %cst_25 : f32 to vector<1x18x128xf32>
    %41 = tpu.concatenate %40, %39, %40 in 0 : vector<1x18x128xf32>, vector<16x18x128xf32>, vector<1x18x128xf32> -> vector<18x18x128xf32>
    %42 = vector.extract_strided_slice %41 {offsets = [0, 0, 0], sizes = [16, 16, 128], strides = [1, 1, 1]} : vector<18x18x128xf32> to vector<16x16x128xf32>
    %43 = vector.shape_cast %42 : vector<16x16x128xf32> to vector<256x128xf32>
    %44 = arith.truncf %43 : vector<256x128xf32> to vector<256x128xbf16>
    %c0_26 = arith.constant 0 : index
    %c0_27 = arith.constant 0 : index
    %c0_28 = arith.constant 0 : index
    %45 = vector.load %arg4[%c0_26, %c0_27, %c0_28] : memref<9x128x128xbf16, #tpu.memory_space<vmem>>, vector<1x128x128xbf16>
    %46 = vector.shape_cast %45 : vector<1x128x128xbf16> to vector<128x128xbf16>
    %cst_29 = arith.constant dense<0.000000e+00> : vector<256x128xf32>
    %47 = tpu.matmul %44, %46, %cst_29 {dimension_numbers = #tpu.dot_dimension_numbers<[1], [0], [0], [1], [0, 0, 1, 1], [], []>} : vector<256x128xbf16>, vector<128x128xbf16>, vector<256x128xf32> -> vector<256x128xf32>
    %48 = vector.extract_strided_slice %41 {offsets = [0, 1, 0], sizes = [16, 16, 128], strides = [1, 1, 1]} : vector<18x18x128xf32> to vector<16x16x128xf32>
    %49 = vector.shape_cast %48 : vector<16x16x128xf32> to vector<256x128xf32>
    %50 = arith.truncf %49 : vector<256x128xf32> to vector<256x128xbf16>
    %c1 = arith.constant 1 : index
    %c0_30 = arith.constant 0 : index
    %c0_31 = arith.constant 0 : index
    %51 = vector.load %arg4[%c1, %c0_30, %c0_31] : memref<9x128x128xbf16, #tpu.memory_space<vmem>>, vector<1x128x128xbf16>
    %52 = vector.shape_cast %51 : vector<1x128x128xbf16> to vector<128x128xbf16>
    %cst_32 = arith.constant dense<0.000000e+00> : vector<256x128xf32>
    %53 = tpu.matmul %50, %52, %cst_32 {dimension_numbers = #tpu.dot_dimension_numbers<[1], [0], [0], [1], [0, 0, 1, 1], [], []>} : vector<256x128xbf16>, vector<128x128xbf16>, vector<256x128xf32> -> vector<256x128xf32>
    %54 = arith.addf %47, %53 : vector<256x128xf32>
    %55 = vector.extract_strided_slice %41 {offsets = [0, 2, 0], sizes = [16, 16, 128], strides = [1, 1, 1]} : vector<18x18x128xf32> to vector<16x16x128xf32>
    %56 = vector.shape_cast %55 : vector<16x16x128xf32> to vector<256x128xf32>
    %57 = arith.truncf %56 : vector<256x128xf32> to vector<256x128xbf16>
    %c2 = arith.constant 2 : index
    %c0_33 = arith.constant 0 : index
    %c0_34 = arith.constant 0 : index
    %58 = vector.load %arg4[%c2, %c0_33, %c0_34] : memref<9x128x128xbf16, #tpu.memory_space<vmem>>, vector<1x128x128xbf16>
    %59 = vector.shape_cast %58 : vector<1x128x128xbf16> to vector<128x128xbf16>
    %cst_35 = arith.constant dense<0.000000e+00> : vector<256x128xf32>
    %60 = tpu.matmul %57, %59, %cst_35 {dimension_numbers = #tpu.dot_dimension_numbers<[1], [0], [0], [1], [0, 0, 1, 1], [], []>} : vector<256x128xbf16>, vector<128x128xbf16>, vector<256x128xf32> -> vector<256x128xf32>
    %61 = arith.addf %54, %60 : vector<256x128xf32>
    %62 = vector.extract_strided_slice %41 {offsets = [1, 0, 0], sizes = [16, 16, 128], strides = [1, 1, 1]} : vector<18x18x128xf32> to vector<16x16x128xf32>
    %63 = vector.shape_cast %62 : vector<16x16x128xf32> to vector<256x128xf32>
    %64 = arith.truncf %63 : vector<256x128xf32> to vector<256x128xbf16>
    %c3 = arith.constant 3 : index
    %c0_36 = arith.constant 0 : index
    %c0_37 = arith.constant 0 : index
    %65 = vector.load %arg4[%c3, %c0_36, %c0_37] : memref<9x128x128xbf16, #tpu.memory_space<vmem>>, vector<1x128x128xbf16>
    %66 = vector.shape_cast %65 : vector<1x128x128xbf16> to vector<128x128xbf16>
    %cst_38 = arith.constant dense<0.000000e+00> : vector<256x128xf32>
    %67 = tpu.matmul %64, %66, %cst_38 {dimension_numbers = #tpu.dot_dimension_numbers<[1], [0], [0], [1], [0, 0, 1, 1], [], []>} : vector<256x128xbf16>, vector<128x128xbf16>, vector<256x128xf32> -> vector<256x128xf32>
    %68 = arith.addf %61, %67 : vector<256x128xf32>
    %69 = vector.extract_strided_slice %41 {offsets = [1, 1, 0], sizes = [16, 16, 128], strides = [1, 1, 1]} : vector<18x18x128xf32> to vector<16x16x128xf32>
    %70 = vector.shape_cast %69 : vector<16x16x128xf32> to vector<256x128xf32>
    %71 = arith.truncf %70 : vector<256x128xf32> to vector<256x128xbf16>
    %c4 = arith.constant 4 : index
    %c0_39 = arith.constant 0 : index
    %c0_40 = arith.constant 0 : index
    %72 = vector.load %arg4[%c4, %c0_39, %c0_40] : memref<9x128x128xbf16, #tpu.memory_space<vmem>>, vector<1x128x128xbf16>
    %73 = vector.shape_cast %72 : vector<1x128x128xbf16> to vector<128x128xbf16>
    %cst_41 = arith.constant dense<0.000000e+00> : vector<256x128xf32>
    %74 = tpu.matmul %71, %73, %cst_41 {dimension_numbers = #tpu.dot_dimension_numbers<[1], [0], [0], [1], [0, 0, 1, 1], [], []>} : vector<256x128xbf16>, vector<128x128xbf16>, vector<256x128xf32> -> vector<256x128xf32>
    %75 = arith.addf %68, %74 : vector<256x128xf32>
    %76 = vector.extract_strided_slice %41 {offsets = [1, 2, 0], sizes = [16, 16, 128], strides = [1, 1, 1]} : vector<18x18x128xf32> to vector<16x16x128xf32>
    %77 = vector.shape_cast %76 : vector<16x16x128xf32> to vector<256x128xf32>
    %78 = arith.truncf %77 : vector<256x128xf32> to vector<256x128xbf16>
    %c5 = arith.constant 5 : index
    %c0_42 = arith.constant 0 : index
    %c0_43 = arith.constant 0 : index
    %79 = vector.load %arg4[%c5, %c0_42, %c0_43] : memref<9x128x128xbf16, #tpu.memory_space<vmem>>, vector<1x128x128xbf16>
    %80 = vector.shape_cast %79 : vector<1x128x128xbf16> to vector<128x128xbf16>
    %cst_44 = arith.constant dense<0.000000e+00> : vector<256x128xf32>
    %81 = tpu.matmul %78, %80, %cst_44 {dimension_numbers = #tpu.dot_dimension_numbers<[1], [0], [0], [1], [0, 0, 1, 1], [], []>} : vector<256x128xbf16>, vector<128x128xbf16>, vector<256x128xf32> -> vector<256x128xf32>
    %82 = arith.addf %75, %81 : vector<256x128xf32>
    %83 = vector.extract_strided_slice %41 {offsets = [2, 0, 0], sizes = [16, 16, 128], strides = [1, 1, 1]} : vector<18x18x128xf32> to vector<16x16x128xf32>
    %84 = vector.shape_cast %83 : vector<16x16x128xf32> to vector<256x128xf32>
    %85 = arith.truncf %84 : vector<256x128xf32> to vector<256x128xbf16>
    %c6 = arith.constant 6 : index
    %c0_45 = arith.constant 0 : index
    %c0_46 = arith.constant 0 : index
    %86 = vector.load %arg4[%c6, %c0_45, %c0_46] : memref<9x128x128xbf16, #tpu.memory_space<vmem>>, vector<1x128x128xbf16>
    %87 = vector.shape_cast %86 : vector<1x128x128xbf16> to vector<128x128xbf16>
    %cst_47 = arith.constant dense<0.000000e+00> : vector<256x128xf32>
    %88 = tpu.matmul %85, %87, %cst_47 {dimension_numbers = #tpu.dot_dimension_numbers<[1], [0], [0], [1], [0, 0, 1, 1], [], []>} : vector<256x128xbf16>, vector<128x128xbf16>, vector<256x128xf32> -> vector<256x128xf32>
    %89 = arith.addf %82, %88 : vector<256x128xf32>
    %90 = vector.extract_strided_slice %41 {offsets = [2, 1, 0], sizes = [16, 16, 128], strides = [1, 1, 1]} : vector<18x18x128xf32> to vector<16x16x128xf32>
    %91 = vector.shape_cast %90 : vector<16x16x128xf32> to vector<256x128xf32>
    %92 = arith.truncf %91 : vector<256x128xf32> to vector<256x128xbf16>
    %c7 = arith.constant 7 : index
    %c0_48 = arith.constant 0 : index
    %c0_49 = arith.constant 0 : index
    %93 = vector.load %arg4[%c7, %c0_48, %c0_49] : memref<9x128x128xbf16, #tpu.memory_space<vmem>>, vector<1x128x128xbf16>
    %94 = vector.shape_cast %93 : vector<1x128x128xbf16> to vector<128x128xbf16>
    %cst_50 = arith.constant dense<0.000000e+00> : vector<256x128xf32>
    %95 = tpu.matmul %92, %94, %cst_50 {dimension_numbers = #tpu.dot_dimension_numbers<[1], [0], [0], [1], [0, 0, 1, 1], [], []>} : vector<256x128xbf16>, vector<128x128xbf16>, vector<256x128xf32> -> vector<256x128xf32>
    %96 = arith.addf %89, %95 : vector<256x128xf32>
    %97 = vector.extract_strided_slice %41 {offsets = [2, 2, 0], sizes = [16, 16, 128], strides = [1, 1, 1]} : vector<18x18x128xf32> to vector<16x16x128xf32>
    %98 = vector.shape_cast %97 : vector<16x16x128xf32> to vector<256x128xf32>
    %99 = arith.truncf %98 : vector<256x128xf32> to vector<256x128xbf16>
    %c8 = arith.constant 8 : index
    %c0_51 = arith.constant 0 : index
    %c0_52 = arith.constant 0 : index
    %100 = vector.load %arg4[%c8, %c0_51, %c0_52] : memref<9x128x128xbf16, #tpu.memory_space<vmem>>, vector<1x128x128xbf16>
    %101 = vector.shape_cast %100 : vector<1x128x128xbf16> to vector<128x128xbf16>
    %cst_53 = arith.constant dense<0.000000e+00> : vector<256x128xf32>
    %102 = tpu.matmul %99, %101, %cst_53 {dimension_numbers = #tpu.dot_dimension_numbers<[1], [0], [0], [1], [0, 0, 1, 1], [], []>} : vector<256x128xbf16>, vector<128x128xbf16>, vector<256x128xf32> -> vector<256x128xf32>
    %103 = arith.addf %96, %102 : vector<256x128xf32>
    %c0_54 = arith.constant 0 : index
    %c0_55 = arith.constant 0 : index
    %104 = vector.load %arg5[%c0_54, %c0_55] : memref<1x128xf32, #tpu.memory_space<vmem>>, vector<1x128xf32>
    %105 = vector.broadcast %104 : vector<1x128xf32> to vector<256x128xf32>
    %106 = arith.addf %103, %105 : vector<256x128xf32>
    %c0_56 = arith.constant 0 : index
    %c0_57 = arith.constant 0 : index
    %107 = vector.load %arg14[%c0_56, %c0_57] : memref<128x4xf32, #tpu.memory_space<vmem>>, vector<128x4xf32>
    %c0_58 = arith.constant 0 : index
    %c0_59 = arith.constant 0 : index
    %108 = vector.load %arg15[%c0_58, %c0_59] : memref<4x128xf32, #tpu.memory_space<vmem>>, vector<4x128xf32>
    %c0_60 = arith.constant 0 : index
    %c0_61 = arith.constant 0 : index
    %109 = vector.load %arg10[%c0_60, %c0_61] : memref<1x128xf32, #tpu.memory_space<vmem>>, vector<1x128xf32>
    %c0_62 = arith.constant 0 : index
    %c0_63 = arith.constant 0 : index
    %110 = vector.load %arg11[%c0_62, %c0_63] : memref<1x128xf32, #tpu.memory_space<vmem>>, vector<1x128xf32>
    %cst_64 = arith.constant dense<0.000000e+00> : vector<128xf32>
    %111 = vector.multi_reduction <add>, %106, %cst_64 [0] : vector<256x128xf32> to vector<128xf32>
    %112 = vector.shape_cast %111 : vector<128xf32> to vector<1x128xf32>
    %cst_65 = arith.constant dense<0.000000e+00> : vector<1x4xf32>
    %113 = tpu.matmul %112, %107, %cst_65 {dimension_numbers = #tpu.dot_dimension_numbers<[1], [0], [0], [1], [0, 0, 1, 1], [], []>} : vector<1x128xf32>, vector<128x4xf32>, vector<1x4xf32> -> vector<1x4xf32>
    %cst_66 = arith.constant 5.120000e+02 : f32
    %114 = vector.broadcast %cst_66 : f32 to vector<1x4xf32>
    %115 = arith.divf %113, %114 : vector<1x4xf32>
    %cst_67 = arith.constant dense<0.000000e+00> : vector<1x128xf32>
    %116 = tpu.matmul %115, %108, %cst_67 {dimension_numbers = #tpu.dot_dimension_numbers<[1], [0], [0], [1], [0, 0, 1, 1], [], []>} : vector<1x4xf32>, vector<4x128xf32>, vector<1x128xf32> -> vector<1x128xf32>
    %117 = vector.broadcast %116 : vector<1x128xf32> to vector<256x128xf32>
    %118 = arith.subf %106, %117 : vector<256x128xf32>
    %119 = arith.mulf %118, %118 : vector<256x128xf32>
    %cst_68 = arith.constant dense<0.000000e+00> : vector<128xf32>
    %120 = vector.multi_reduction <add>, %119, %cst_68 [0] : vector<256x128xf32> to vector<128xf32>
    %121 = vector.shape_cast %120 : vector<128xf32> to vector<1x128xf32>
    %cst_69 = arith.constant dense<0.000000e+00> : vector<1x4xf32>
    %122 = tpu.matmul %121, %107, %cst_69 {dimension_numbers = #tpu.dot_dimension_numbers<[1], [0], [0], [1], [0, 0, 1, 1], [], []>} : vector<1x128xf32>, vector<128x4xf32>, vector<1x4xf32> -> vector<1x4xf32>
    %cst_70 = arith.constant 5.120000e+02 : f32
    %123 = vector.broadcast %cst_70 : f32 to vector<1x4xf32>
    %124 = arith.divf %122, %123 : vector<1x4xf32>
    %cst_71 = arith.constant 9.99999974E-6 : f32
    %125 = vector.broadcast %cst_71 : f32 to vector<1x4xf32>
    %126 = arith.addf %124, %125 : vector<1x4xf32>
    %127 = math.rsqrt %126 : vector<1x4xf32>
    %cst_72 = arith.constant dense<0.000000e+00> : vector<1x128xf32>
    %128 = tpu.matmul %127, %108, %cst_72 {dimension_numbers = #tpu.dot_dimension_numbers<[1], [0], [0], [1], [0, 0, 1, 1], [], []>} : vector<1x4xf32>, vector<4x128xf32>, vector<1x128xf32> -> vector<1x128xf32>
    %129 = arith.mulf %128, %109 : vector<1x128xf32>
    %130 = vector.broadcast %129 : vector<1x128xf32> to vector<256x128xf32>
    %131 = arith.mulf %118, %130 : vector<256x128xf32>
    %132 = vector.broadcast %110 : vector<1x128xf32> to vector<256x128xf32>
    %133 = arith.addf %131, %132 : vector<256x128xf32>
    %cst_73 = arith.constant 0.000000e+00 : f32
    %134 = vector.broadcast %cst_73 : f32 to vector<256x128xf32>
    %135 = arith.maximumf %133, %134 : vector<256x128xf32>
    %136 = arith.truncf %135 : vector<256x128xf32> to vector<256x128xbf16>
    %c0_74 = arith.constant 0 : index
    %c0_75 = arith.constant 0 : index
    %137 = vector.load %arg6[%c0_74, %c0_75] : memref<128x128xbf16, #tpu.memory_space<vmem>>, vector<128x128xbf16>
    %cst_76 = arith.constant dense<0.000000e+00> : vector<256x128xf32>
    %138 = tpu.matmul %136, %137, %cst_76 {dimension_numbers = #tpu.dot_dimension_numbers<[1], [0], [0], [1], [0, 0, 1, 1], [], []>} : vector<256x128xbf16>, vector<128x128xbf16>, vector<256x128xf32> -> vector<256x128xf32>
    %c0_77 = arith.constant 0 : index
    %c0_78 = arith.constant 0 : index
    %139 = vector.load %arg7[%c0_77, %c0_78] : memref<1x128xf32, #tpu.memory_space<vmem>>, vector<1x128xf32>
    %140 = vector.broadcast %139 : vector<1x128xf32> to vector<256x128xf32>
    %141 = arith.addf %138, %140 : vector<256x128xf32>
    %c0_79 = arith.constant 0 : index
    %c0_80 = arith.constant 0 : index
    %142 = vector.load %arg16[%c0_79, %c0_80] : memref<128x4xf32, #tpu.memory_space<vmem>>, vector<128x4xf32>
    %c0_81 = arith.constant 0 : index
    %c0_82 = arith.constant 0 : index
    %143 = vector.load %arg17[%c0_81, %c0_82] : memref<4x128xf32, #tpu.memory_space<vmem>>, vector<4x128xf32>
    %c0_83 = arith.constant 0 : index
    %c0_84 = arith.constant 0 : index
    %144 = vector.load %arg12[%c0_83, %c0_84] : memref<1x128xf32, #tpu.memory_space<vmem>>, vector<1x128xf32>
    %c0_85 = arith.constant 0 : index
    %c0_86 = arith.constant 0 : index
    %145 = vector.load %arg13[%c0_85, %c0_86] : memref<1x128xf32, #tpu.memory_space<vmem>>, vector<1x128xf32>
    %cst_87 = arith.constant dense<0.000000e+00> : vector<128xf32>
    %146 = vector.multi_reduction <add>, %141, %cst_87 [0] : vector<256x128xf32> to vector<128xf32>
    %147 = vector.shape_cast %146 : vector<128xf32> to vector<1x128xf32>
    %cst_88 = arith.constant dense<0.000000e+00> : vector<1x4xf32>
    %148 = tpu.matmul %147, %142, %cst_88 {dimension_numbers = #tpu.dot_dimension_numbers<[1], [0], [0], [1], [0, 0, 1, 1], [], []>} : vector<1x128xf32>, vector<128x4xf32>, vector<1x4xf32> -> vector<1x4xf32>
    %cst_89 = arith.constant 2.048000e+03 : f32
    %149 = vector.broadcast %cst_89 : f32 to vector<1x4xf32>
    %150 = arith.divf %148, %149 : vector<1x4xf32>
    %cst_90 = arith.constant dense<0.000000e+00> : vector<1x128xf32>
    %151 = tpu.matmul %150, %143, %cst_90 {dimension_numbers = #tpu.dot_dimension_numbers<[1], [0], [0], [1], [0, 0, 1, 1], [], []>} : vector<1x4xf32>, vector<4x128xf32>, vector<1x128xf32> -> vector<1x128xf32>
    %152 = vector.broadcast %151 : vector<1x128xf32> to vector<256x128xf32>
    %153 = arith.subf %141, %152 : vector<256x128xf32>
    %154 = arith.mulf %153, %153 : vector<256x128xf32>
    %cst_91 = arith.constant dense<0.000000e+00> : vector<128xf32>
    %155 = vector.multi_reduction <add>, %154, %cst_91 [0] : vector<256x128xf32> to vector<128xf32>
    %156 = vector.shape_cast %155 : vector<128xf32> to vector<1x128xf32>
    %cst_92 = arith.constant dense<0.000000e+00> : vector<1x4xf32>
    %157 = tpu.matmul %156, %142, %cst_92 {dimension_numbers = #tpu.dot_dimension_numbers<[1], [0], [0], [1], [0, 0, 1, 1], [], []>} : vector<1x128xf32>, vector<128x4xf32>, vector<1x4xf32> -> vector<1x4xf32>
    %cst_93 = arith.constant 2.048000e+03 : f32
    %158 = vector.broadcast %cst_93 : f32 to vector<1x4xf32>
    %159 = arith.divf %157, %158 : vector<1x4xf32>
    %cst_94 = arith.constant 9.99999974E-6 : f32
    %160 = vector.broadcast %cst_94 : f32 to vector<1x4xf32>
    %161 = arith.addf %159, %160 : vector<1x4xf32>
    %162 = math.rsqrt %161 : vector<1x4xf32>
    %cst_95 = arith.constant dense<0.000000e+00> : vector<1x128xf32>
    %163 = tpu.matmul %162, %143, %cst_95 {dimension_numbers = #tpu.dot_dimension_numbers<[1], [0], [0], [1], [0, 0, 1, 1], [], []>} : vector<1x4xf32>, vector<4x128xf32>, vector<1x128xf32> -> vector<1x128xf32>
    %164 = arith.mulf %163, %144 : vector<1x128xf32>
    %165 = vector.broadcast %164 : vector<1x128xf32> to vector<256x128xf32>
    %166 = arith.mulf %153, %165 : vector<256x128xf32>
    %167 = vector.broadcast %145 : vector<1x128xf32> to vector<256x128xf32>
    %168 = arith.addf %166, %167 : vector<256x128xf32>
    %cst_96 = arith.constant 0.000000e+00 : f32
    %169 = vector.broadcast %cst_96 : f32 to vector<256x128xf32>
    %170 = arith.maximumf %168, %169 : vector<256x128xf32>
    %171 = arith.addf %1, %170 : vector<256x128xf32>
    %cst_97 = arith.constant 0.000000e+00 : f32
    %172 = vector.broadcast %cst_97 : f32 to vector<256x128xf32>
    %173 = arith.maximumf %171, %172 : vector<256x128xf32>
    %c0_98 = arith.constant 0 : index
    %c0_99 = arith.constant 0 : index
    %c0_100 = arith.constant 0 : index
    %174 = vector.load %arg18[%c0_98, %c0_99, %c0_100] : memref<1x256x128xf32, #tpu.memory_space<vmem>>, vector<1x256x128xf32>
    %175 = vector.shape_cast %174 : vector<1x256x128xf32> to vector<256x128xf32>
    %176 = vector.shape_cast %173 : vector<256x128xf32> to vector<1x256x128xf32>
    tpu.vector_store %arg18[%c0_98, %c0_99, %c0_100], %176 {strides = array<i32>} : memref<1x256x128xf32, #tpu.memory_space<vmem>>, vector<1x256x128xf32>,
    return
  }
  func.func @transform_0(%arg0: i32) -> (i32, i32, i32) {
    %c0_i32 = arith.constant 0 : i32
    %c0_i32_0 = arith.constant 0 : i32
    %c0_i32_1 = arith.constant 0 : i32
    return %arg0, %c0_i32, %c0_i32_0 : i32, i32, i32
  }
  func.func @transform_1(%arg0: i32) -> (i32, i32) {
    %c0_i32 = arith.constant 0 : i32
    %c0_i32_0 = arith.constant 0 : i32
    %c0_i32_1 = arith.constant 0 : i32
    return %c0_i32, %c0_i32_0 : i32, i32
  }
  func.func @transform_2(%arg0: i32) -> (i32, i32) {
    %c0_i32 = arith.constant 0 : i32
    %c0_i32_0 = arith.constant 0 : i32
    %c0_i32_1 = arith.constant 0 : i32
    return %c0_i32, %c0_i32_0 : i32, i32
  }
  func.func @transform_3(%arg0: i32) -> (i32, i32, i32) {
    %c0_i32 = arith.constant 0 : i32
    %c0_i32_0 = arith.constant 0 : i32
    %c0_i32_1 = arith.constant 0 : i32
    %c0_i32_2 = arith.constant 0 : i32
    return %c0_i32, %c0_i32_0, %c0_i32_1 : i32, i32, i32
  }
  func.func @transform_4(%arg0: i32) -> (i32, i32) {
    %c0_i32 = arith.constant 0 : i32
    %c0_i32_0 = arith.constant 0 : i32
    %c0_i32_1 = arith.constant 0 : i32
    return %c0_i32, %c0_i32_0 : i32, i32
  }
  func.func @transform_5(%arg0: i32) -> (i32, i32) {
    %c0_i32 = arith.constant 0 : i32
    %c0_i32_0 = arith.constant 0 : i32
    %c0_i32_1 = arith.constant 0 : i32
    return %c0_i32, %c0_i32_0 : i32, i32
  }
  func.func @transform_6(%arg0: i32) -> (i32, i32) {
    %c0_i32 = arith.constant 0 : i32
    %c0_i32_0 = arith.constant 0 : i32
    %c0_i32_1 = arith.constant 0 : i32
    return %c0_i32, %c0_i32_0 : i32, i32
  }
  func.func @transform_7(%arg0: i32) -> (i32, i32) {
    %c0_i32 = arith.constant 0 : i32
    %c0_i32_0 = arith.constant 0 : i32
    %c0_i32_1 = arith.constant 0 : i32
    return %c0_i32, %c0_i32_0 : i32, i32
  }
  func.func @transform_8(%arg0: i32) -> (i32, i32) {
    %c0_i32 = arith.constant 0 : i32
    %c0_i32_0 = arith.constant 0 : i32
    %c0_i32_1 = arith.constant 0 : i32
    return %c0_i32, %c0_i32_0 : i32, i32
  }
  func.func @transform_9(%arg0: i32) -> (i32, i32) {
    %c0_i32 = arith.constant 0 : i32
    %c0_i32_0 = arith.constant 0 : i32
    %c0_i32_1 = arith.constant 0 : i32
    return %c0_i32, %c0_i32_0 : i32, i32
  }
  func.func @transform_10(%arg0: i32) -> (i32, i32) {
    %c0_i32 = arith.constant 0 : i32
    %c0_i32_0 = arith.constant 0 : i32
    %c0_i32_1 = arith.constant 0 : i32
    return %c0_i32, %c0_i32_0 : i32, i32
  }
  func.func @transform_11(%arg0: i32) -> (i32, i32) {
    %c0_i32 = arith.constant 0 : i32
    %c0_i32_0 = arith.constant 0 : i32
    %c0_i32_1 = arith.constant 0 : i32
    return %c0_i32, %c0_i32_0 : i32, i32
  }
  func.func @transform_12(%arg0: i32) -> (i32, i32) {
    %c0_i32 = arith.constant 0 : i32
    %c0_i32_0 = arith.constant 0 : i32
    %c0_i32_1 = arith.constant 0 : i32
    return %c0_i32, %c0_i32_0 : i32, i32
  }
  func.func @transform_13(%arg0: i32) -> (i32, i32) {
    %c0_i32 = arith.constant 0 : i32
    %c0_i32_0 = arith.constant 0 : i32
    %c0_i32_1 = arith.constant 0 : i32
    return %c0_i32, %c0_i32_0 : i32, i32
  }
  func.func @transform_14(%arg0: i32) -> (i32, i32) {
    %c0_i32 = arith.constant 0 : i32
    %c0_i32_0 = arith.constant 0 : i32
    %c0_i32_1 = arith.constant 0 : i32
    return %c0_i32, %c0_i32_0 : i32, i32
  }
  func.func @transform_15(%arg0: i32) -> (i32, i32) {
    %c0_i32 = arith.constant 0 : i32
    %c0_i32_0 = arith.constant 0 : i32
    %c0_i32_1 = arith.constant 0 : i32
    return %c0_i32, %c0_i32_0 : i32, i32
  }
  func.func @transform_16(%arg0: i32) -> (i32, i32) {
    %c0_i32 = arith.constant 0 : i32
    %c0_i32_0 = arith.constant 0 : i32
    %c0_i32_1 = arith.constant 0 : i32
    return %c0_i32, %c0_i32_0 : i32, i32
  }
  func.func @transform_17(%arg0: i32) -> (i32, i32, i32) {
    %c0_i32 = arith.constant 0 : i32
    %c0_i32_0 = arith.constant 0 : i32
    %c0_i32_1 = arith.constant 0 : i32
    return %arg0, %c0_i32, %c0_i32_0 : i32, i32, i32
  }
}

</mosaic_0001>

<llo_original>
// kernel: tpu_custom_call.1
$region0: #{tpu_custom_call.1}
  #allocation0 [shape = 'u32[]', space=smem, size = 0x4, offset = 0x4, fixed_abs, tag = 'smem constant byte address 0x4 - core index']
  #allocation1 [shape = 'u32[72,128]{1,0:T(1,128)}', space=vmem, size = 0x9000, scoped, tag = 'internal scratch']
  %s0 = inlined_call_operand.hbm [shape: f32[2,256,128], index: 0, kind: input, shape index: {}]
  %s1 = inlined_call_operand.vmem [shape: bf16[128,128], index: 1, kind: input, shape index: {}]
  %s2 = inlined_call_operand.vmem [shape: f32[1,128], index: 2, kind: input, shape index: {}]
  %s3 = inlined_call_operand.hbm [shape: bf16[9,128,128], index: 3, kind: input, shape index: {}]
  %s4 = inlined_call_operand.vmem [shape: f32[1,128], index: 4, kind: input, shape index: {}]
  %s5 = inlined_call_operand.vmem [shape: bf16[128,128], index: 5, kind: input, shape index: {}]
  %s6 = inlined_call_operand.vmem [shape: f32[1,128], index: 6, kind: input, shape index: {}]
  %s7 = inlined_call_operand.vmem [shape: f32[1,128], index: 7, kind: input, shape index: {}]
  %s8 = inlined_call_operand.vmem [shape: f32[1,128], index: 8, kind: input, shape index: {}]
  %s9 = inlined_call_operand.vmem [shape: f32[1,128], index: 9, kind: input, shape index: {}]
  %s10 = inlined_call_operand.vmem [shape: f32[1,128], index: 10, kind: input, shape index: {}]
  %s11 = inlined_call_operand.vmem [shape: f32[1,128], index: 11, kind: input, shape index: {}]
  %s12 = inlined_call_operand.vmem [shape: f32[1,128], index: 12, kind: input, shape index: {}]
  %s13 = inlined_call_operand.vmem [shape: f32[128,4], index: 13, kind: input, shape index: {}]
  %s14 = inlined_call_operand.vmem [shape: f32[4,128], index: 14, kind: input, shape index: {}]
  %s15 = inlined_call_operand.vmem [shape: f32[128,4], index: 15, kind: input, shape index: {}]
  %s16 = inlined_call_operand.vmem [shape: f32[4,128], index: 16, kind: input, shape index: {}]
  %s17 = inlined_call_operand.hbm [shape: f32[2,256,128], index: 17, kind: output, shape index: {}]
  %s18 = sld [smem:[#allocation0]]
  $region109: #{tpu_custom_call.1} parent=0
    _
  %s20 = ssub.s32 1, %s18
  %s21 = scalar_select 0, %s20, %s18
  $region1: #{tpu_custom_call.1} parent=0
    #allocation2 [shape = 'u8[262144]{0}', space=vmem, size = 0x40000, scoped, tag = 'input window, operand 0']
    #allocation3 [shape = 's32[2]{0}', space=sflag, size = 0x8, scoped, tag = 'scoped memory for tpu_custom_call.1']
    #allocation4 [shape = 's32[2]{0}', space=sflag, size = 0x8, scoped, tag = 'scoped memory for tpu_custom_call.1']
    #allocation5 [shape = 'u8[294912]{0}', space=vmem, size = 0x48000, scoped, tag = 'input window, operand 3, single buffered']
    #allocation6 [shape = 's32[1]{0}', space=sflag, size = 0x4, scoped, tag = 'scoped memory for tpu_custom_call.1']
    #allocation7 [shape = 'u8[262144]{0}', space=vmem, size = 0x40000, scoped, tag = 'output window, operand 0']
    %22 = vsyncpa [#allocation3], 0
    %s23 = scalar_lea.sflag [#allocation3], 1
    %24 = vsyncpa %s23, 0
    %25 = vsyncpa [#allocation6], 0
    %26 = vsyncpa [#allocation4], 0
    %s27 = scalar_lea.sflag [#allocation4], 1
    %28 = vsyncpa %s27, 0
    loop: start=0, step=1, limit=4
    $region2: #{tpu_custom_call.1} parent=1 // loop_pre_header
      _
    $region3: #{tpu_custom_call.1} parent=1 // loop_header
      %s30 = sphi 0, %s34
      %p31 = scmp.ge.s32.totalorder %s30, 4
      %s40 = sphi 0, %s42
      %s43 = sphi 0, %s40
      %s44 = sphi 0, %s43
      %s60 = sphi 0, %s44
      %s64 = sphi 0, %s64
      %s66 = sphi 0, %s64
      %s67 = sphi 0, %s66
      %s81 = sphi 0, %s67
      %s85 = sphi 0, %s85
      %s87 = sphi 0, %s85
      %s88 = sphi 0, %s87
      %s102 = sphi 0, %s88
      %s106 = sphi 0, %s106
      %s108 = sphi 0, %s106
      %s109 = sphi 0, %s108
      %s123 = sphi 0, %s109
      %s127 = sphi 0, %s127
      %s129 = sphi 0, %s127
      %s130 = sphi 0, %s129
      %s144 = sphi 0, %s130
      %s148 = sphi 0, %s148
      %s150 = sphi 0, %s148
      %s151 = sphi 0, %s150
      %s165 = sphi 0, %s151
      %s169 = sphi 0, %s169
      %s171 = sphi 0, %s169
      %s172 = sphi 0, %s171
      %s186 = sphi 0, %s172
      %s190 = sphi 0, %s190
      %s192 = sphi 0, %s190
      %s193 = sphi 0, %s192
      %s207 = sphi 0, %s193
      %s211 = sphi 0, %s211
      %s213 = sphi 0, %s211
      %s214 = sphi 0, %s213
      %s228 = sphi 0, %s214
      %s232 = sphi 0, %s232
      %s234 = sphi 0, %s232
      %s235 = sphi 0, %s234
      %s249 = sphi 0, %s235
      %s253 = sphi 0, %s253
      %s255 = sphi 0, %s253
      %s256 = sphi 0, %s255
      %s270 = sphi 0, %s256
      %s274 = sphi 0, %s274
      %s276 = sphi 0, %s274
      %s277 = sphi 0, %s276
      %s291 = sphi 0, %s277
      %s295 = sphi 0, %s295
      %s297 = sphi 0, %s295
      %s298 = sphi 0, %s297
      %s312 = sphi 0, %s298
      %s316 = sphi 0, %s316
      %s318 = sphi 0, %s316
      %s319 = sphi 0, %s318
      %s333 = sphi 0, %s319
      %s337 = sphi 0, %s337
      %s339 = sphi 0, %s337
      %s340 = sphi 0, %s339
      %s354 = sphi 0, %s340
      %s358 = sphi 0, %s358
      %s360 = sphi 0, %s358
      %s361 = sphi 0, %s360
      %s375 = sphi 0, %s361
      %s379 = sphi 0, %s379
      %s381 = sphi 0, %s379
      %s382 = sphi 0, %s381
      %s396 = sphi 0, %s382
      %s402 = sphi 0, %s404
      %s405 = sphi 0, %s402
      %s406 = sphi 0, %s405
      %s422 = sphi 0, %s406
    $region4: #{tpu_custom_call.1} parent=1 // loop_header_branch
      %33 = sbr.rel (%p31) target = $region8
    $region5: #{tpu_custom_call.1} parent=1 // loop_body
      %s35 = ssub.s32 %s30, 1
      %s36 = ssub.s32 %s30, 2
      %s37 = sadd.s32 %s30, 1
      %s38 = ssub.s32 %s30, %s37
      %p39 = scmp.eq.s32.totalorder %s38, 0
      %s41 = sadd.s32 %s40, 1
      %s42 = scalar_select %p39, %s40, %s41
      %p45 = pneg %p39
      %p46 = scmp.eq.s32.totalorder %s30, 1
      %p47 = por %p45, %p46
      %p48 = scmp.ne.s32.totalorder %s40, %s43
      %p49 = scmp.eq.s32.totalorder %s30, 0
      %p50 = por %p48, %p49
      %p51 = scmp.ne.s32.totalorder %s40, %s43
      %p52 = scmp.eq.s32.totalorder %s35, 1
      %p53 = por %p51, %p52
      %p54 = scmp.ne.s32.totalorder %s43, %s44
      %p55 = scmp.eq.s32.totalorder %s35, 0
      %p56 = por %p54, %p55
      %p57 = scmp.ne.s32.totalorder %s43, %s44
      %p58 = scmp.eq.s32.totalorder %s36, 1
      %p59 = por %p57, %p58
      %p61 = scmp.ne.s32.totalorder %s44, %s60
      %p62 = scmp.eq.s32.totalorder %s36, 0
      %p63 = por %p61, %p62
      %s65 = sadd.s32 %s64, 1
      %p68 = scmp.eq.s32.totalorder %s30, 1
      %p69 = scmp.ne.s32.totalorder %s64, %s66
      %p70 = scmp.eq.s32.totalorder %s30, 0
      %p71 = por %p69, %p70
      %p72 = scmp.ne.s32.totalorder %s64, %s66
      %p73 = scmp.eq.s32.totalorder %s35, 1
      %p74 = por %p72, %p73
      %p75 = scmp.ne.s32.totalorder %s66, %s67
      %p76 = scmp.eq.s32.totalorder %s35, 0
      %p77 = por %p75, %p76
      %p78 = scmp.ne.s32.totalorder %s66, %s67
      %p79 = scmp.eq.s32.totalorder %s36, 1
      %p80 = por %p78, %p79
      %p82 = scmp.ne.s32.totalorder %s67, %s81
      %p83 = scmp.eq.s32.totalorder %s36, 0
      %p84 = por %p82, %p83
      %s86 = sadd.s32 %s85, 1
      %p89 = scmp.eq.s32.totalorder %s30, 1
      %p90 = scmp.ne.s32.totalorder %s85, %s87
      %p91 = scmp.eq.s32.totalorder %s30, 0
      %p92 = por %p90, %p91
      %p93 = scmp.ne.s32.totalorder %s85, %s87
      %p94 = scmp.eq.s32.totalorder %s35, 1
      %p95 = por %p93, %p94
      %p96 = scmp.ne.s32.totalorder %s87, %s88
      %p97 = scmp.eq.s32.totalorder %s35, 0
      %p98 = por %p96, %p97
      %p99 = scmp.ne.s32.totalorder %s87, %s88
      %p100 = scmp.eq.s32.totalorder %s36, 1
      %p101 = por %p99, %p100
      %p103 = scmp.ne.s32.totalorder %s88, %s102
      %p104 = scmp.eq.s32.totalorder %s36, 0
      %p105 = por %p103, %p104
      %s107 = sadd.s32 %s106, 1
      %p110 = scmp.eq.s32.totalorder %s30, 1
      %p111 = scmp.ne.s32.totalorder %s106, %s108
      %p112 = scmp.eq.s32.totalorder %s30, 0
      %p113 = por %p111, %p112
      %p114 = scmp.ne.s32.totalorder %s106, %s108
      %p115 = scmp.eq.s32.totalorder %s35, 1
      %p116 = por %p114, %p115
      %p117 = scmp.ne.s32.totalorder %s108, %s109
      %p118 = scmp.eq.s32.totalorder %s35, 0
      %p119 = por %p117, %p118
      %p120 = scmp.ne.s32.totalorder %s108, %s109
      %p121 = scmp.eq.s32.totalorder %s36, 1
      %p122 = por %p120, %p121
      %p124 = scmp.ne.s32.totalorder %s109, %s123
      %p125 = scmp.eq.s32.totalorder %s36, 0
      %p126 = por %p124, %p125
      %s128 = sadd.s32 %s127, 1
      %p131 = scmp.eq.s32.totalorder %s30, 1
      %p132 = scmp.ne.s32.totalorder %s127, %s129
      %p133 = scmp.eq.s32.totalorder %s30, 0
      %p134 = por %p132, %p133
      %p135 = scmp.ne.s32.totalorder %s127, %s129
      %p136 = scmp.eq.s32.totalorder %s35, 1
      %p137 = por %p135, %p136
      %p138 = scmp.ne.s32.totalorder %s129, %s130
      %p139 = scmp.eq.s32.totalorder %s35, 0
      %p140 = por %p138, %p139
      %p141 = scmp.ne.s32.totalorder %s129, %s130
      %p142 = scmp.eq.s32.totalorder %s36, 1
      %p143 = por %p141, %p142
      %p145 = scmp.ne.s32.totalorder %s130, %s144
      %p146 = scmp.eq.s32.totalorder %s36, 0
      %p147 = por %p145, %p146
      %s149 = sadd.s32 %s148, 1
      %p152 = scmp.eq.s32.totalorder %s30, 1
      %p153 = scmp.ne.s32.totalorder %s148, %s150
      %p154 = scmp.eq.s32.totalorder %s30, 0
      %p155 = por %p153, %p154
      %p156 = scmp.ne.s32.totalorder %s148, %s150
      %p157 = scmp.eq.s32.totalorder %s35, 1
      %p158 = por %p156, %p157
      %p159 = scmp.ne.s32.totalorder %s150, %s151
      %p160 = scmp.eq.s32.totalorder %s35, 0
      %p161 = por %p159, %p160
      %p162 = scmp.ne.s32.totalorder %s150, %s151
      %p163 = scmp.eq.s32.totalorder %s36, 1
      %p164 = por %p162, %p163
      %p166 = scmp.ne.s32.totalorder %s151, %s165
      %p167 = scmp.eq.s32.totalorder %s36, 0
      %p168 = por %p166, %p167
      %s170 = sadd.s32 %s169, 1
      %p173 = scmp.eq.s32.totalorder %s30, 1
      %p174 = scmp.ne.s32.totalorder %s169, %s171
      %p175 = scmp.eq.s32.totalorder %s30, 0
      %p176 = por %p174, %p175
      %p177 = scmp.ne.s32.totalorder %s169, %s171
      %p178 = scmp.eq.s32.totalorder %s35, 1
      %p179 = por %p177, %p178
      %p180 = scmp.ne.s32.totalorder %s171, %s172
      %p181 = scmp.eq.s32.totalorder %s35, 0
      %p182 = por %p180, %p181
      %p183 = scmp.ne.s32.totalorder %s171, %s172
      %p184 = scmp.eq.s32.totalorder %s36, 1
      %p185 = por %p183, %p184
      %p187 = scmp.ne.s32.totalorder %s172, %s186
      %p188 = scmp.eq.s32.totalorder %s36, 0
      %p189 = por %p187, %p188
      %s191 = sadd.s32 %s190, 1
      %p194 = scmp.eq.s32.totalorder %s30, 1
      %p195 = scmp.ne.s32.totalorder %s190, %s192
      %p196 = scmp.eq.s32.totalorder %s30, 0
      %p197 = por %p195, %p196
      %p198 = scmp.ne.s32.totalorder %s190, %s192
      %p199 = scmp.eq.s32.totalorder %s35, 1
      %p200 = por %p198, %p199
      %p201 = scmp.ne.s32.totalorder %s192, %s193
      %p202 = scmp.eq.s32.totalorder %s35, 0
      %p203 = por %p201, %p202
      %p204 = scmp.ne.s32.totalorder %s192, %s193
      %p205 = scmp.eq.s32.totalorder %s36, 1
      %p206 = por %p204, %p205
      %p208 = scmp.ne.s32.totalorder %s193, %s207
      %p209 = scmp.eq.s32.totalorder %s36, 0
      %p210 = por %p208, %p209
      %s212 = sadd.s32 %s211, 1
      %p215 = scmp.eq.s32.totalorder %s30, 1
      %p216 = scmp.ne.s32.totalorder %s211, %s213
      %p217 = scmp.eq.s32.totalorder %s30, 0
      %p218 = por %p216, %p217
      %p219 = scmp.ne.s32.totalorder %s211, %s213
      %p220 = scmp.eq.s32.totalorder %s35, 1
      %p221 = por %p219, %p220
      %p222 = scmp.ne.s32.totalorder %s213, %s214
      %p223 = scmp.eq.s32.totalorder %s35, 0
      %p224 = por %p222, %p223
      %p225 = scmp.ne.s32.totalorder %s213, %s214
      %p226 = scmp.eq.s32.totalorder %s36, 1
      %p227 = por %p225, %p226
      %p229 = scmp.ne.s32.totalorder %s214, %s228
      %p230 = scmp.eq.s32.totalorder %s36, 0
      %p231 = por %p229, %p230
      %s233 = sadd.s32 %s232, 1
      %p236 = scmp.eq.s32.totalorder %s30, 1
      %p237 = scmp.ne.s32.totalorder %s232, %s234
      %p238 = scmp.eq.s32.totalorder %s30, 0
      %p239 = por %p237, %p238
      %p240 = scmp.ne.s32.totalorder %s232, %s234
      %p241 = scmp.eq.s32.totalorder %s35, 1
      %p242 = por %p240, %p241
      %p243 = scmp.ne.s32.totalorder %s234, %s235
      %p244 = scmp.eq.s32.totalorder %s35, 0
      %p245 = por %p243, %p244
      %p246 = scmp.ne.s32.totalorder %s234, %s235
      %p247 = scmp.eq.s32.totalorder %s36, 1
      %p248 = por %p246, %p247
      %p250 = scmp.ne.s32.totalorder %s235, %s249
      %p251 = scmp.eq.s32.totalorder %s36, 0
      %p252 = por %p250, %p251
      %s254 = sadd.s32 %s253, 1
      %p257 = scmp.eq.s32.totalorder %s30, 1
      %p258 = scmp.ne.s32.totalorder %s253, %s255
      %p259 = scmp.eq.s32.totalorder %s30, 0
      %p260 = por %p258, %p259
      %p261 = scmp.ne.s32.totalorder %s253, %s255
      %p262 = scmp.eq.s32.totalorder %s35, 1
      %p263 = por %p261, %p262
      %p264 = scmp.ne.s32.totalorder %s255, %s256
      %p265 = scmp.eq.s32.totalorder %s35, 0
      %p266 = por %p264, %p265
      %p267 = scmp.ne.s32.totalorder %s255, %s256
      %p268 = scmp.eq.s32.totalorder %s36, 1
      %p269 = por %p267, %p268
      %p271 = scmp.ne.s32.totalorder %s256, %s270
      %p272 = scmp.eq.s32.totalorder %s36, 0
      %p273 = por %p271, %p272
      %s275 = sadd.s32 %s274, 1
      %p278 = scmp.eq.s32.totalorder %s30, 1
      %p279 = scmp.ne.s32.totalorder %s274, %s276
      %p280 = scmp.eq.s32.totalorder %s30, 0
      %p281 = por %p279, %p280
      %p282 = scmp.ne.s32.totalorder %s274, %s276
      %p283 = scmp.eq.s32.totalorder %s35, 1
      %p284 = por %p282, %p283
      %p285 = scmp.ne.s32.totalorder %s276, %s277
      %p286 = scmp.eq.s32.totalorder %s35, 0
      %p287 = por %p285, %p286
      %p288 = scmp.ne.s32.totalorder %s276, %s277
      %p289 = scmp.eq.s32.totalorder %s36, 1
      %p290 = por %p288, %p289
      %p292 = scmp.ne.s32.totalorder %s277, %s291
      %p293 = scmp.eq.s32.totalorder %s36, 0
      %p294 = por %p292, %p293
      %s296 = sadd.s32 %s295, 1
      %p299 = scmp.eq.s32.totalorder %s30, 1
      %p300 = scmp.ne.s32.totalorder %s295, %s297
      %p301 = scmp.eq.s32.totalorder %s30, 0
      %p302 = por %p300, %p301
      %p303 = scmp.ne.s32.totalorder %s295, %s297
      %p304 = scmp.eq.s32.totalorder %s35, 1
      %p305 = por %p303, %p304
      %p306 = scmp.ne.s32.totalorder %s297, %s298
      %p307 = scmp.eq.s32.totalorder %s35, 0
      %p308 = por %p306, %p307
      %p309 = scmp.ne.s32.totalorder %s297, %s298
      %p310 = scmp.eq.s32.totalorder %s36, 1
      %p311 = por %p309, %p310
      %p313 = scmp.ne.s32.totalorder %s298, %s312
      %p314 = scmp.eq.s32.totalorder %s36, 0
      %p315 = por %p313, %p314
      %s317 = sadd.s32 %s316, 1
      %p320 = scmp.eq.s32.totalorder %s30, 1
      %p321 = scmp.ne.s32.totalorder %s316, %s318
      %p322 = scmp.eq.s32.totalorder %s30, 0
      %p323 = por %p321, %p322
      %p324 = scmp.ne.s32.totalorder %s316, %s318
      %p325 = scmp.eq.s32.totalorder %s35, 1
      %p326 = por %p324, %p325
      %p327 = scmp.ne.s32.totalorder %s318, %s319
      %p328 = scmp.eq.s32.totalorder %s35, 0
      %p329 = por %p327, %p328
      %p330 = scmp.ne.s32.totalorder %s318, %s319
      %p331 = scmp.eq.s32.totalorder %s36, 1
      %p332 = por %p330, %p331
      %p334 = scmp.ne.s32.totalorder %s319, %s333
      %p335 = scmp.eq.s32.totalorder %s36, 0
      %p336 = por %p334, %p335
      %s338 = sadd.s32 %s337, 1
      %p341 = scmp.eq.s32.totalorder %s30, 1
      %p342 = scmp.ne.s32.totalorder %s337, %s339
      %p343 = scmp.eq.s32.totalorder %s30, 0
      %p344 = por %p342, %p343
      %p345 = scmp.ne.s32.totalorder %s337, %s339
      %p346 = scmp.eq.s32.totalorder %s35, 1
      %p347 = por %p345, %p346
      %p348 = scmp.ne.s32.totalorder %s339, %s340
      %p349 = scmp.eq.s32.totalorder %s35, 0
      %p350 = por %p348, %p349
      %p351 = scmp.ne.s32.totalorder %s339, %s340
      %p352 = scmp.eq.s32.totalorder %s36, 1
      %p353 = por %p351, %p352
      %p355 = scmp.ne.s32.totalorder %s340, %s354
      %p356 = scmp.eq.s32.totalorder %s36, 0
      %p357 = por %p355, %p356
      %s359 = sadd.s32 %s358, 1
      %p362 = scmp.eq.s32.totalorder %s30, 1
      %p363 = scmp.ne.s32.totalorder %s358, %s360
      %p364 = scmp.eq.s32.totalorder %s30, 0
      %p365 = por %p363, %p364
      %p366 = scmp.ne.s32.totalorder %s358, %s360
      %p367 = scmp.eq.s32.totalorder %s35, 1
      %p368 = por %p366, %p367
      %p369 = scmp.ne.s32.totalorder %s360, %s361
      %p370 = scmp.eq.s32.totalorder %s35, 0
      %p371 = por %p369, %p370
      %p372 = scmp.ne.s32.totalorder %s360, %s361
      %p373 = scmp.eq.s32.totalorder %s36, 1
      %p374 = por %p372, %p373
      %p376 = scmp.ne.s32.totalorder %s361, %s375
      %p377 = scmp.eq.s32.totalorder %s36, 0
      %p378 = por %p376, %p377
      %s380 = sadd.s32 %s379, 1
      %p383 = scmp.eq.s32.totalorder %s30, 1
      %p384 = scmp.ne.s32.totalorder %s379, %s381
      %p385 = scmp.eq.s32.totalorder %s30, 0
      %p386 = por %p384, %p385
      %p387 = scmp.ne.s32.totalorder %s379, %s381
      %p388 = scmp.eq.s32.totalorder %s35, 1
      %p389 = por %p387, %p388
      %p390 = scmp.ne.s32.totalorder %s381, %s382
      %p391 = scmp.eq.s32.totalorder %s35, 0
      %p392 = por %p390, %p391
      %p393 = scmp.ne.s32.totalorder %s381, %s382
      %p394 = scmp.eq.s32.totalorder %s36, 1
      %p395 = por %p393, %p394
      %p397 = scmp.ne.s32.totalorder %s382, %s396
      %p398 = scmp.eq.s32.totalorder %s36, 0
      %p399 = por %p397, %p398
      %s400 = ssub.s32 %s30, %s37
      %p401 = scmp.eq.s32.totalorder %s400, 0
      %s403 = sadd.s32 %s402, 1
      %s404 = scalar_select %p401, %s402, %s403
      %p407 = pneg %p401
      %p408 = scmp.eq.s32.totalorder %s30, 1
      %p409 = por %p407, %p408
      %p410 = scmp.ne.s32.totalorder %s402, %s405
      %p411 = scmp.eq.s32.totalorder %s30, 0
      %p412 = por %p410, %p411
      %p413 = scmp.ne.s32.totalorder %s402, %s405
      %p414 = scmp.eq.s32.totalorder %s35, 1
      %p415 = por %p413, %p414
      %p416 = scmp.ne.s32.totalorder %s405, %s406
      %p417 = scmp.eq.s32.totalorder %s35, 0
      %p418 = por %p416, %p417
      %p419 = scmp.ne.s32.totalorder %s405, %s406
      %p420 = scmp.eq.s32.totalorder %s36, 1
      %p421 = por %p419, %p420
      %p423 = scmp.ne.s32.totalorder %s406, %s422
      %p424 = scmp.eq.s32.totalorder %s36, 0
      %p425 = por %p423, %p424
      %p426 = scmp.le.s32.totalorder 1, %s30
      %p427 = scmp.lt.s32.totalorder %s30, 3
      %p428 = pnand %p426, %p427
      %p429 = pneg %p428
      // Predicated region
      $region9: #{tpu_custom_call.1} parent=5 // pred_check
        _
      $region10: #{tpu_custom_call.1} parent=5 // pred_check_branch
        %431 = sbr.rel (%p428) target = $region12
      $region11: #{tpu_custom_call.1} parent=5 // pred_region
        %s432 = ssub.s32 %s30, 1
        // Predicated region
        $region13: #{tpu_custom_call.1} parent=11 // pred_check
          %p433 = pneg %p77
        $region14: #{tpu_custom_call.1} parent=11 // pred_check_branch
          %435 = sbr.rel (%p433) target = $region16
        $region15: #{tpu_custom_call.1} parent=11 // pred_region
          _
        $region16: #{tpu_custom_call.1} parent=11 // pred_fallthru
          _
        // Predicated region
        $region17: #{tpu_custom_call.1} parent=11 // pred_check
          %p436 = pneg %p98
        $region18: #{tpu_custom_call.1} parent=11 // pred_check_branch
          %438 = sbr.rel (%p436) target = $region20
        $region19: #{tpu_custom_call.1} parent=11 // pred_region
          _
        $region20: #{tpu_custom_call.1} parent=11 // pred_fallthru
          _
        // Predicated region
        $region21: #{tpu_custom_call.1} parent=11 // pred_check
          %p439 = pneg %p119
        $region22: #{tpu_custom_call.1} parent=11 // pred_check_branch
          %441 = sbr.rel (%p439) target = $region24
        $region23: #{tpu_custom_call.1} parent=11 // pred_region
          %443 = vsyncadd [#allocation6], 0
          %s444 = sshll.u32 %s3, 4
          %s445 = int_to_ptr.hbm [resolvable:$true] %s444
          %s446 = sshll.u32 [#allocation5], 4
          %s447 = int_to_ptr.vmem [resolvable:$true] %s446
          %452 = dma.hbm_to_vmem [thread:$0]  %s445, 9216, %s447, [#allocation6], 64, 64, 4
        $region24: #{tpu_custom_call.1} parent=11 // pred_fallthru
          _
        // Predicated region
        $region25: #{tpu_custom_call.1} parent=11 // pred_check
          %p453 = pneg %p140
        $region26: #{tpu_custom_call.1} parent=11 // pred_check_branch
          %455 = sbr.rel (%p453) target = $region28
        $region27: #{tpu_custom_call.1} parent=11 // pred_region
          _
        $region28: #{tpu_custom_call.1} parent=11 // pred_fallthru
          _
        // Predicated region
        $region29: #{tpu_custom_call.1} parent=11 // pred_check
          %p456 = pneg %p161
        $region30: #{tpu_custom_call.1} parent=11 // pred_check_branch
          %458 = sbr.rel (%p456) target = $region32
        $region31: #{tpu_custom_call.1} parent=11 // pred_region
          _
        $region32: #{tpu_custom_call.1} parent=11 // pred_fallthru
          _
        // Predicated region
        $region33: #{tpu_custom_call.1} parent=11 // pred_check
          %p459 = pneg %p182
        $region34: #{tpu_custom_call.1} parent=11 // pred_check_branch
          %461 = sbr.rel (%p459) target = $region36
        $region35: #{tpu_custom_call.1} parent=11 // pred_region
          _
        $region36: #{tpu_custom_call.1} parent=11 // pred_fallthru
          _
        // Predicated region
        $region37: #{tpu_custom_call.1} parent=11 // pred_check
          %p462 = pneg %p203
        $region38: #{tpu_custom_call.1} parent=11 // pred_check_branch
          %464 = sbr.rel (%p462) target = $region40
        $region39: #{tpu_custom_call.1} parent=11 // pred_region
          _
        $region40: #{tpu_custom_call.1} parent=11 // pred_fallthru
          _
        // Predicated region
        $region41: #{tpu_custom_call.1} parent=11 // pred_check
          %p465 = pneg %p224
        $region42: #{tpu_custom_call.1} parent=11 // pred_check_branch
          %467 = sbr.rel (%p465) target = $region44
        $region43: #{tpu_custom_call.1} parent=11 // pred_region
          _
        $region44: #{tpu_custom_call.1} parent=11 // pred_fallthru
          _
        // Predicated region
        $region45: #{tpu_custom_call.1} parent=11 // pred_check
          %p468 = pneg %p245
        $region46: #{tpu_custom_call.1} parent=11 // pred_check_branch
          %470 = sbr.rel (%p468) target = $region48
        $region47: #{tpu_custom_call.1} parent=11 // pred_region
          _
        $region48: #{tpu_custom_call.1} parent=11 // pred_fallthru
          _
        // Predicated region
        $region49: #{tpu_custom_call.1} parent=11 // pred_check
          %p471 = pneg %p266
        $region50: #{tpu_custom_call.1} parent=11 // pred_check_branch
          %473 = sbr.rel (%p471) target = $region52
        $region51: #{tpu_custom_call.1} parent=11 // pred_region
          _
        $region52: #{tpu_custom_call.1} parent=11 // pred_fallthru
          _
        // Predicated region
        $region53: #{tpu_custom_call.1} parent=11 // pred_check
          %p474 = pneg %p287
        $region54: #{tpu_custom_call.1} parent=11 // pred_check_branch
          %476 = sbr.rel (%p474) target = $region56
        $region55: #{tpu_custom_call.1} parent=11 // pred_region
          _
        $region56: #{tpu_custom_call.1} parent=11 // pred_fallthru
          _
        // Predicated region
        $region57: #{tpu_custom_call.1} parent=11 // pred_check
          %p477 = pneg %p308
        $region58: #{tpu_custom_call.1} parent=11 // pred_check_branch
          %479 = sbr.rel (%p477) target = $region60
        $region59: #{tpu_custom_call.1} parent=11 // pred_region
          _
        $region60: #{tpu_custom_call.1} parent=11 // pred_fallthru
          _
        // Predicated region
        $region61: #{tpu_custom_call.1} parent=11 // pred_check
          %p480 = pneg %p329
        $region62: #{tpu_custom_call.1} parent=11 // pred_check_branch
          %482 = sbr.rel (%p480) target = $region64
        $region63: #{tpu_custom_call.1} parent=11 // pred_region
          _
        $region64: #{tpu_custom_call.1} parent=11 // pred_fallthru
          _
        // Predicated region
        $region65: #{tpu_custom_call.1} parent=11 // pred_check
          %p483 = pneg %p350
        $region66: #{tpu_custom_call.1} parent=11 // pred_check_branch
          %485 = sbr.rel (%p483) target = $region68
        $region67: #{tpu_custom_call.1} parent=11 // pred_region
          _
        $region68: #{tpu_custom_call.1} parent=11 // pred_fallthru
          _
        // Predicated region
        $region69: #{tpu_custom_call.1} parent=11 // pred_check
          %p486 = pneg %p371
        $region70: #{tpu_custom_call.1} parent=11 // pred_check_branch
          %488 = sbr.rel (%p486) target = $region72
        $region71: #{tpu_custom_call.1} parent=11 // pred_region
          _
        $region72: #{tpu_custom_call.1} parent=11 // pred_fallthru
          _
        // Predicated region
        $region73: #{tpu_custom_call.1} parent=11 // pred_check
          %p489 = pneg %p392
        $region74: #{tpu_custom_call.1} parent=11 // pred_check_branch
          %491 = sbr.rel (%p489) target = $region76
        $region75: #{tpu_custom_call.1} parent=11 // pred_region
          _
        $region76: #{tpu_custom_call.1} parent=11 // pred_fallthru
          _
      $region12: #{tpu_custom_call.1} parent=5 // pred_fallthru
        _
      %p492 = scmp.lt.s32.totalorder %s30, 2
      // Predicated region
      $region77: #{tpu_custom_call.1} parent=5 // pred_check
        %p493 = pneg %p492
      $region78: #{tpu_custom_call.1} parent=5 // pred_check_branch
        %495 = sbr.rel (%p493) target = $region80
      $region79: #{tpu_custom_call.1} parent=5 // pred_region
        // Predicated region
        $region81: #{tpu_custom_call.1} parent=79 // pred_check
          %p496 = pneg %p50
        $region82: #{tpu_custom_call.1} parent=79 // pred_check_branch
          %498 = sbr.rel (%p496) target = $region84
        $region83: #{tpu_custom_call.1} parent=79 // pred_region
          %s499 = sand.u32 %s40, 1
          %s500 = scalar_lea.sflag [#allocation3], %s499
          %s501 = sand.u32 %s40, 1
          %s502 = smul.addr %s501, 256
          %s503 = scalar_lea.vmem [#allocation2], %s502
          %505 = vsyncadd %s500, 0
          %s506 = smul.addr %s30, 32
          %s507 = smul.addr %s506, 8
          %s508 = scalar_lea.hbm %s0, %s507
          %s509 = sshll.u32 %s508, 4
          %s510 = int_to_ptr.hbm [resolvable:$true] %s509
          %s511 = sshll.u32 %s503, 4
          %s512 = int_to_ptr.vmem [resolvable:$true] %s511
          %517 = dma.hbm_to_vmem [thread:$0]  %s510, 4096, %s512, %s500, 128, 128, 8
        $region84: #{tpu_custom_call.1} parent=79 // pred_fallthru
          _
      $region80: #{tpu_custom_call.1} parent=5 // pred_fallthru
        _
      %p518 = scmp.le.s32.totalorder 1, %s30
      %p519 = scmp.lt.s32.totalorder %s30, 3
      %p520 = pnand %p518, %p519
      %p521 = pneg %p520
      // Predicated region
      $region85: #{tpu_custom_call.1} parent=5 // pred_check
        _
      $region86: #{tpu_custom_call.1} parent=5 // pred_check_branch
        %523 = sbr.rel (%p520) target = $region88
      $region87: #{tpu_custom_call.1} parent=5 // pred_region
        %s524 = ssub.s32 %s30, 1
        %s525 = sand.u32 %s43, 1
        %s526 = scalar_lea.sflag [#allocation3], %s525
        %s527 = sand.u32 %s43, 1
        %s528 = smul.addr %s527, 256
        %s529 = scalar_lea.vmem [#allocation2], %s528
        // Predicated region
        $region89: #{tpu_custom_call.1} parent=87 // pred_check
          %p530 = pneg %p56
        $region90: #{tpu_custom_call.1} parent=87 // pred_check_branch
          %532 = sbr.rel (%p530) target = $region92
        $region91: #{tpu_custom_call.1} parent=87 // pred_region
          %534 = dma.done %s526, 4096
        $region92: #{tpu_custom_call.1} parent=87 // pred_fallthru
          _
        // Predicated region
        $region93: #{tpu_custom_call.1} parent=87 // pred_check
          %p535 = pneg %p119
        $region94: #{tpu_custom_call.1} parent=87 // pred_check_branch
          %537 = sbr.rel (%p535) target = $region96
        $region95: #{tpu_custom_call.1} parent=87 // pred_region
          %539 = dma.done [#allocation6], 9216
        $region96: #{tpu_custom_call.1} parent=87 // pred_fallthru
          _
        %s540 = sand.u32 %s43, 1
        %s541 = scalar_lea.sflag [#allocation3], %s540
        %s542 = sand.u32 %s43, 1
        %s543 = smul.addr %s542, 256
        %s544 = scalar_lea.vmem [#allocation2], %s543
        %p545 = pneg %p56
        %p546 = pneg %p53
        %p547 = pneg %p77
        %p548 = pneg %p74
        %p549 = pneg %p98
        %p550 = pneg %p95
        %p551 = pneg %p119
        %p552 = pneg %p116
        %p553 = pneg %p140
        %p554 = pneg %p137
        %p555 = pneg %p161
        %p556 = pneg %p158
        %p557 = pneg %p182
        %p558 = pneg %p179
        %p559 = pneg %p203
        %p560 = pneg %p200
        %p561 = pneg %p224
        %p562 = pneg %p221
        %p563 = pneg %p245
        %p564 = pneg %p242
        %p565 = pneg %p266
        %p566 = pneg %p263
        %p567 = pneg %p287
        %p568 = pneg %p284
        %p569 = pneg %p308
        %p570 = pneg %p305
        %p571 = pneg %p329
        %p572 = pneg %p326
        %p573 = pneg %p350
        %p574 = pneg %p347
        %p575 = pneg %p371
        %p576 = pneg %p368
        %p577 = pneg %p392
        %p578 = pneg %p389
        %p579 = pneg %p418
        %p580 = pneg %p415
        %s581 = sand.u32 %s405, 1
        %s582 = scalar_lea.sflag [#allocation4], %s581
        %s583 = sand.u32 %s405, 1
        %s584 = smul.addr %s583, 256
        %s585 = scalar_lea.vmem [#allocation7], %s584
        %v586 = vld [vmem:[%s529] sm:$0xff]
        %v587 = vld [vmem:[%s529 + $0x8] sm:$0xff]
        %v588 = vld [vmem:[%s529 + $0x10] sm:$0xff]
        %v589 = vld [vmem:[%s529 + $0x18] sm:$0xff]
        %v590 = vld [vmem:[%s529 + $0x20] sm:$0xff]
        %v591 = vld [vmem:[%s529 + $0x28] sm:$0xff]
        %v592 = vld [vmem:[%s529 + $0x30] sm:$0xff]
        %v593 = vld [vmem:[%s529 + $0x38] sm:$0xff]
        %v594 = vld [vmem:[%s529 + $0x40] sm:$0xff]
        %v595 = vld [vmem:[%s529 + $0x48] sm:$0xff]
        %v596 = vld [vmem:[%s529 + $0x50] sm:$0xff]
        %v597 = vld [vmem:[%s529 + $0x58] sm:$0xff]
        %v598 = vld [vmem:[%s529 + $0x60] sm:$0xff]
        %v599 = vld [vmem:[%s529 + $0x68] sm:$0xff]
        %v600 = vld [vmem:[%s529 + $0x70] sm:$0xff]
        %v601 = vld [vmem:[%s529 + $0x78] sm:$0xff]
        %v602 = vld [vmem:[%s529 + $0x80] sm:$0xff]
        %v603 = vld [vmem:[%s529 + $0x88] sm:$0xff]
        %v604 = vld [vmem:[%s529 + $0x90] sm:$0xff]
        %v605 = vld [vmem:[%s529 + $0x98] sm:$0xff]
        %v606 = vld [vmem:[%s529 + $0xa0] sm:$0xff]
        %v607 = vld [vmem:[%s529 + $0xa8] sm:$0xff]
        %v608 = vld [vmem:[%s529 + $0xb0] sm:$0xff]
        %v609 = vld [vmem:[%s529 + $0xb8] sm:$0xff]
        %v610 = vld [vmem:[%s529 + $0xc0] sm:$0xff]
        %v611 = vld [vmem:[%s529 + $0xc8] sm:$0xff]
        %v612 = vld [vmem:[%s529 + $0xd0] sm:$0xff]
        %v613 = vld [vmem:[%s529 + $0xd8] sm:$0xff]
        %v614 = vld [vmem:[%s529 + $0xe0] sm:$0xff]
        %v615 = vld [vmem:[%s529 + $0xe8] sm:$0xff]
        %v616 = vld [vmem:[%s529 + $0xf0] sm:$0xff]
        %v617 = vld [vmem:[%s529 + $0xf8] sm:$0xff]
        %v618 = vpack.c.bf16 %v587, %v586
        %v619 = vpack.c.bf16 %v589, %v588
        %v620 = vpack.c.bf16 %v591, %v590
        %v621 = vpack.c.bf16 %v593, %v592
        %v622 = vpack.c.bf16 %v595, %v594
        %v623 = vpack.c.bf16 %v597, %v596
        %v624 = vpack.c.bf16 %v599, %v598
        %v625 = vpack.c.bf16 %v601, %v600
        %v626 = vpack.c.bf16 %v603, %v602
        %v627 = vpack.c.bf16 %v605, %v604
        %v628 = vpack.c.bf16 %v607, %v606
        %v629 = vpack.c.bf16 %v609, %v608
        %v630 = vpack.c.bf16 %v611, %v610
        %v631 = vpack.c.bf16 %v613, %v612
        %v632 = vpack.c.bf16 %v615, %v614
        %v633 = vpack.c.bf16 %v617, %v616
        %v634 = vld [vmem:[%s1] sm:$0xf]
        %v635 = vld [vmem:[%s1 + $0x4] sm:$0xf]
        %v636 = vld [vmem:[%s1 + $0x8] sm:$0xf]
        %v637 = vld [vmem:[%s1 + $0xc] sm:$0xf]
        %v638 = vld [vmem:[%s1 + $0x10] sm:$0xf]
        %v639 = vld [vmem:[%s1 + $0x14] sm:$0xf]
        %v640 = vld [vmem:[%s1 + $0x18] sm:$0xf]
        %v641 = vld [vmem:[%s1 + $0x1c] sm:$0xf]
        %v642 = vld [vmem:[%s1 + $0x20] sm:$0xf]
        %v643 = vld [vmem:[%s1 + $0x24] sm:$0xf]
        %v644 = vld [vmem:[%s1 + $0x28] sm:$0xf]
        %v645 = vld [vmem:[%s1 + $0x2c] sm:$0xf]
        %v646 = vld [vmem:[%s1 + $0x30] sm:$0xf]
        %v647 = vld [vmem:[%s1 + $0x34] sm:$0xf]
        %v648 = vld [vmem:[%s1 + $0x38] sm:$0xf]
        %v649 = vld [vmem:[%s1 + $0x3c] sm:$0xf]
        %v650 = vld [vmem:[%s2] sm:$0x1]
        %v652 = vperm.slane %v650, 0
        %v670 = vunpack.c.l.b16 %v634
        %v671 = vunpack.c.l.b16 %v635
        %v672 = vunpack.c.l.b16 %v636
        %v673 = vunpack.c.l.b16 %v637
        %v674 = vunpack.c.l.b16 %v638
        %v675 = vunpack.c.l.b16 %v639
        %v676 = vunpack.c.l.b16 %v640
        %v677 = vunpack.c.l.b16 %v641
        %v678 = vunpack.c.l.b16 %v642
        %v679 = vunpack.c.l.b16 %v643
        %v680 = vunpack.c.l.b16 %v644
        %v681 = vunpack.c.l.b16 %v645
        %v682 = vunpack.c.l.b16 %v646
        %v683 = vunpack.c.l.b16 %v647
        %v684 = vunpack.c.l.b16 %v648
        %v685 = vunpack.c.l.b16 %v649
        %v686 = vpack.c.b16 %v671, %v670
        %v687 = vpack.c.b16 %v673, %v672
        %v688 = vpack.c.b16 %v675, %v674
        %v689 = vpack.c.b16 %v677, %v676
        %v690 = vpack.c.b16 %v679, %v678
        %v691 = vpack.c.b16 %v681, %v680
        %v692 = vpack.c.b16 %v683, %v682
        %v693 = vpack.c.b16 %v685, %v684
        %702 = vmatpush.bf16.msra.mxu0 %v693
        %703 = vmatpush.bf16.msra.mxu0 %v692
        %704 = vmatpush.bf16.msra.mxu0 %v691
        %705 = vmatpush.bf16.msra.mxu0 %v690
        %706 = vmatpush.bf16.msra.mxu0 %v689
        %707 = vmatpush.bf16.msra.mxu0 %v688
        %708 = vmatpush.bf16.msra.mxu0 %v687
        %709 = vmatpush.bf16.msra.mxu0 %v686
        %710 = vmatmul.bf16.gmra.mxu0 %v618
        %v711 = vpop.f32.mrf.mxu0
        %v712 = vadd.f32 %v652, %v711
        %v713 = vpop.f32.mrf.mxu0
        %v714 = vadd.f32 %v652, %v713
        %715 = vmatmul.bf16.gmra.mxu0 %v619
        %v716 = vpop.f32.mrf.mxu0
        %v717 = vadd.f32 %v652, %v716
        %v718 = vpop.f32.mrf.mxu0
        %v719 = vadd.f32 %v652, %v718
        %720 = vmatmul.bf16.gmra.mxu0 %v620
        %v721 = vpop.f32.mrf.mxu0
        %v722 = vadd.f32 %v652, %v721
        %v723 = vpop.f32.mrf.mxu0
        %v724 = vadd.f32 %v652, %v723
        %725 = vmatmul.bf16.gmra.mxu0 %v621
        %v726 = vpop.f32.mrf.mxu0
        %v727 = vadd.f32 %v652, %v726
        %v728 = vpop.f32.mrf.mxu0
        %v729 = vadd.f32 %v652, %v728
        %730 = vmatmul.bf16.gmra.mxu0 %v622
        %v731 = vpop.f32.mrf.mxu0
        %v732 = vadd.f32 %v652, %v731
        %v733 = vpop.f32.mrf.mxu0
        %v734 = vadd.f32 %v652, %v733
        %735 = vmatmul.bf16.gmra.mxu0 %v623
        %v736 = vpop.f32.mrf.mxu0
        %v737 = vadd.f32 %v652, %v736
        %v738 = vpop.f32.mrf.mxu0
        %v739 = vadd.f32 %v652, %v738
        %740 = vmatmul.bf16.gmra.mxu0 %v624
        %v741 = vpop.f32.mrf.mxu0
        %v742 = vadd.f32 %v652, %v741
        %v743 = vpop.f32.mrf.mxu0
        %v744 = vadd.f32 %v652, %v743
        %745 = vmatmul.bf16.gmra.mxu0 %v625
        %v746 = vpop.f32.mrf.mxu0
        %v747 = vadd.f32 %v652, %v746
        %v748 = vpop.f32.mrf.mxu0
        %v749 = vadd.f32 %v652, %v748
        %750 = vmatmul.bf16.gmra.mxu0 %v626
        %v751 = vpop.f32.mrf.mxu0
        %v752 = vadd.f32 %v652, %v751
        %v753 = vpop.f32.mrf.mxu0
        %v754 = vadd.f32 %v652, %v753
        %755 = vmatmul.bf16.gmra.mxu0 %v627
        %v756 = vpop.f32.mrf.mxu0
        %v757 = vadd.f32 %v652, %v756
        %v758 = vpop.f32.mrf.mxu0
        %v759 = vadd.f32 %v652, %v758
        %760 = vmatmul.bf16.gmra.mxu0 %v628
        %v761 = vpop.f32.mrf.mxu0
        %v762 = vadd.f32 %v652, %v761
        %v763 = vpop.f32.mrf.mxu0
        %v764 = vadd.f32 %v652, %v763
        %765 = vmatmul.bf16.gmra.mxu0 %v629
        %v766 = vpop.f32.mrf.mxu0
        %v767 = vadd.f32 %v652, %v766
        %v768 = vpop.f32.mrf.mxu0
        %v769 = vadd.f32 %v652, %v768
        %770 = vmatmul.bf16.gmra.mxu0 %v630
        %v771 = vpop.f32.mrf.mxu0
        %v772 = vadd.f32 %v652, %v771
        %v773 = vpop.f32.mrf.mxu0
        %v774 = vadd.f32 %v652, %v773
        %775 = vmatmul.bf16.gmra.mxu0 %v631
        %v776 = vpop.f32.mrf.mxu0
        %v777 = vadd.f32 %v652, %v776
        %v778 = vpop.f32.mrf.mxu0
        %v779 = vadd.f32 %v652, %v778
        %780 = vmatmul.bf16.gmra.mxu0 %v632
        %v781 = vpop.f32.mrf.mxu0
        %v782 = vadd.f32 %v652, %v781
        %v783 = vpop.f32.mrf.mxu0
        %v784 = vadd.f32 %v652, %v783
        %785 = vmatmul.bf16.gmra.mxu0 %v633
        %v786 = vpop.f32.mrf.mxu0
        %v787 = vadd.f32 %v652, %v786
        %v788 = vpop.f32.mrf.mxu0
        %v789 = vadd.f32 %v652, %v788
        %790 = vdwg.mxu0
        %v791 = vld [vmem:[%s13] sm:$0xff]
        %v792 = vld [vmem:[%s13 + $0x8] sm:$0xff]
        %v793 = vld [vmem:[%s13 + $0x10] sm:$0xff]
        %v794 = vld [vmem:[%s13 + $0x18] sm:$0xff]
        %v795 = vld [vmem:[%s13 + $0x20] sm:$0xff]
        %v796 = vld [vmem:[%s13 + $0x28] sm:$0xff]
        %v797 = vld [vmem:[%s13 + $0x30] sm:$0xff]
        %v798 = vld [vmem:[%s13 + $0x38] sm:$0xff]
        %v799 = vld [vmem:[%s13 + $0x40] sm:$0xff]
        %v800 = vld [vmem:[%s13 + $0x48] sm:$0xff]
        %v801 = vld [vmem:[%s13 + $0x50] sm:$0xff]
        %v802 = vld [vmem:[%s13 + $0x58] sm:$0xff]
        %v803 = vld [vmem:[%s13 + $0x60] sm:$0xff]
        %v804 = vld [vmem:[%s13 + $0x68] sm:$0xff]
        %v805 = vld [vmem:[%s13 + $0x70] sm:$0xff]
        %v806 = vld [vmem:[%s13 + $0x78] sm:$0xff]
        %v807 = vld [vmem:[%s14] sm:$0xf]
        %v808 = vld [vmem:[%s7] sm:$0x1]
        %v809 = vld [vmem:[%s8] sm:$0x1]
        %v810 = vadd.f32 %v712, %v714
        %v811 = vadd.f32 %v810, %v717
        %v812 = vadd.f32 %v811, %v719
        %v813 = vadd.f32 %v812, %v722
        %v814 = vadd.f32 %v813, %v724
        %v815 = vadd.f32 %v814, %v727
        %v816 = vadd.f32 %v815, %v729
        %v817 = vadd.f32 %v816, %v732
        %v818 = vadd.f32 %v817, %v734
        %v819 = vadd.f32 %v818, %v737
        %v820 = vadd.f32 %v819, %v739
        %v821 = vadd.f32 %v820, %v742
        %v822 = vadd.f32 %v821, %v744
        %v823 = vadd.f32 %v822, %v747
        %v824 = vadd.f32 %v823, %v749
        %v825 = vadd.f32 %v824, %v752
        %v826 = vadd.f32 %v825, %v754
        %v827 = vadd.f32 %v826, %v757
        %v828 = vadd.f32 %v827, %v759
        %v829 = vadd.f32 %v828, %v762
        %v830 = vadd.f32 %v829, %v764
        %v831 = vadd.f32 %v830, %v767
        %v832 = vadd.f32 %v831, %v769
        %v833 = vadd.f32 %v832, %v772
        %v834 = vadd.f32 %v833, %v774
        %v835 = vadd.f32 %v834, %v777
        %v836 = vadd.f32 %v835, %v779
        %v837 = vadd.f32 %v836, %v782
        %v838 = vadd.f32 %v837, %v784
        %v839 = vadd.f32 %v838, %v787
        %v840 = vadd.f32 %v839, %v789
        %v841 = vrot.slane %v840, 4
        %v842 = vadd.f32 %v840, %v841
        %v843 = vrot.slane %v842, 2
        %v844 = vadd.f32 %v842, %v843
        %v845 = vrot.slane %v844, 1
        %v846 = vadd.f32 %v844, %v845
        %847 = vmatpush.msra.mxu0 %v806
        %848 = vmatpush.msra.mxu0 %v805
        %849 = vmatpush.msra.mxu0 %v804
        %850 = vmatpush.msra.mxu0 %v803
        %851 = vmatpush.msra.mxu0 %v802
        %852 = vmatpush.msra.mxu0 %v801
        %853 = vmatpush.msra.mxu0 %v800
        %854 = vmatpush.msra.mxu0 %v799
        %855 = vmatpush.msra.mxu0 %v798
        %856 = vmatpush.msra.mxu0 %v797
        %857 = vmatpush.msra.mxu0 %v796
        %858 = vmatpush.msra.mxu0 %v795
        %859 = vmatpush.msra.mxu0 %v794
        %860 = vmatpush.msra.mxu0 %v793
        %861 = vmatpush.msra.mxu0 %v792
        %862 = vmatpush.msra.mxu0 %v791
        %863 = vmatmul.f32.gmra.mxu0 %v846
        %v864 = vpop.f32.mrf.mxu0
        %v865 = vadd.f32 0.0, %v864
        %866 = vdwg.mxu0
        %v867 = vrcp.pop 512.0
        %v868 = vmul.f32 512.0, %v867
        %v869 = vsub.f32 1.0, %v868
        %v870 = vmul.f32 %v867, %v869
        %v871 = vadd.f32 %v867, %v870
        %vm872 = vweird.f32 %v867
        %v873 = vsel %vm872, %v867, %v871
        %v874 = vmul.f32 %v865, %v873
        %vm875 = vcmask 31744
        %v877 = vsel %vm875, %v874, 0
        %vm879 = vcmask 1043456
        %v881 = vsel %vm879, %v807, 0
        %883 = vmatpush.msra.mxu0 0.0
        %884 = vmatpush.msra.mxu0 0.0
        %885 = vmatpush.msra.mxu0 0.0
        %886 = vmatpush.msra.mxu0 0.0
        %887 = vmatpush.msra.mxu0 0.0
        %888 = vmatpush.msra.mxu0 0.0
        %889 = vmatpush.msra.mxu0 0.0
        %890 = vmatpush.msra.mxu0 0.0
        %891 = vmatpush.msra.mxu0 0.0
        %892 = vmatpush.msra.mxu0 0.0
        %893 = vmatpush.msra.mxu0 0.0
        %894 = vmatpush.msra.mxu0 0.0
        %895 = vmatpush.msra.mxu0 0.0
        %896 = vmatpush.msra.mxu0 0.0
        %897 = vmatpush.msra.mxu0 0.0
        %898 = vmatpush.msra.mxu0 %v881
        %899 = vmatmul.f32.gmra.mxu0 %v877
        %v900 = vpop.f32.mrf.mxu0
        %v901 = vadd.f32 0.0, %v900
        %902 = vdwg.mxu0
        %v903 = vperm.slane %v901, 0
        %v904 = vsub.f32 %v712, %v903
        %v905 = vsub.f32 %v714, %v903
        %v906 = vsub.f32 %v717, %v903
        %v907 = vsub.f32 %v719, %v903
        %v908 = vsub.f32 %v722, %v903
        %v909 = vsub.f32 %v724, %v903
        %v910 = vsub.f32 %v727, %v903
        %v911 = vsub.f32 %v729, %v903
        %v912 = vsub.f32 %v732, %v903
        %v913 = vsub.f32 %v734, %v903
        %v914 = vsub.f32 %v737, %v903
        %v915 = vsub.f32 %v739, %v903
        %v916 = vsub.f32 %v742, %v903
        %v917 = vsub.f32 %v744, %v903
        %v918 = vsub.f32 %v747, %v903
        %v919 = vsub.f32 %v749, %v903
        %v920 = vsub.f32 %v752, %v903
        %v921 = vsub.f32 %v754, %v903
        %v922 = vsub.f32 %v757, %v903
        %v923 = vsub.f32 %v759, %v903
        %v924 = vsub.f32 %v762, %v903
        %v925 = vsub.f32 %v764, %v903
        %v926 = vsub.f32 %v767, %v903
        %v927 = vsub.f32 %v769, %v903
        %v928 = vsub.f32 %v772, %v903
        %v929 = vsub.f32 %v774, %v903
        %v930 = vsub.f32 %v777, %v903
        %v931 = vsub.f32 %v779, %v903
        %v932 = vsub.f32 %v782, %v903
        %v933 = vsub.f32 %v784, %v903
        %v934 = vsub.f32 %v787, %v903
        %v935 = vsub.f32 %v789, %v903
        %v936 = vmul.f32 %v904, %v904
        %v937 = vmul.f32 %v905, %v905
        %v938 = vmul.f32 %v906, %v906
        %v939 = vmul.f32 %v907, %v907
        %v940 = vmul.f32 %v908, %v908
        %v941 = vmul.f32 %v909, %v909
        %v942 = vmul.f32 %v910, %v910
        %v943 = vmul.f32 %v911, %v911
        %v944 = vmul.f32 %v912, %v912
        %v945 = vmul.f32 %v913, %v913
        %v946 = vmul.f32 %v914, %v914
        %v947 = vmul.f32 %v915, %v915
        %v948 = vmul.f32 %v916, %v916
        %v949 = vmul.f32 %v917, %v917
        %v950 = vmul.f32 %v918, %v918
        %v951 = vmul.f32 %v919, %v919
        %v952 = vmul.f32 %v920, %v920
        %v953 = vmul.f32 %v921, %v921
        %v954 = vmul.f32 %v922, %v922
        %v955 = vmul.f32 %v923, %v923
        %v956 = vmul.f32 %v924, %v924
        %v957 = vmul.f32 %v925, %v925
        %v958 = vmul.f32 %v926, %v926
        %v959 = vmul.f32 %v927, %v927
        %v960 = vmul.f32 %v928, %v928
        %v961 = vmul.f32 %v929, %v929
        %v962 = vmul.f32 %v930, %v930
        %v963 = vmul.f32 %v931, %v931
        %v964 = vmul.f32 %v932, %v932
        %v965 = vmul.f32 %v933, %v933
        %v966 = vmul.f32 %v934, %v934
        %v967 = vmul.f32 %v935, %v935
        %v968 = vadd.f32 %v936, %v937
        %v969 = vadd.f32 %v968, %v938
        %v970 = vadd.f32 %v969, %v939
        %v971 = vadd.f32 %v970, %v940
        %v972 = vadd.f32 %v971, %v941
        %v973 = vadd.f32 %v972, %v942
        %v974 = vadd.f32 %v973, %v943
        %v975 = vadd.f32 %v974, %v944
        %v976 = vadd.f32 %v975, %v945
        %v977 = vadd.f32 %v976, %v946
        %v978 = vadd.f32 %v977, %v947
        %v979 = vadd.f32 %v978, %v948
        %v980 = vadd.f32 %v979, %v949
        %v981 = vadd.f32 %v980, %v950
        %v982 = vadd.f32 %v981, %v951
        %v983 = vadd.f32 %v982, %v952
        %v984 = vadd.f32 %v983, %v953
        %v985 = vadd.f32 %v984, %v954
        %v986 = vadd.f32 %v985, %v955
        %v987 = vadd.f32 %v986, %v956
        %v988 = vadd.f32 %v987, %v957
        %v989 = vadd.f32 %v988, %v958
        %v990 = vadd.f32 %v989, %v959
        %v991 = vadd.f32 %v990, %v960
        %v992 = vadd.f32 %v991, %v961
        %v993 = vadd.f32 %v992, %v962
        %v994 = vadd.f32 %v993, %v963
        %v995 = vadd.f32 %v994, %v964
        %v996 = vadd.f32 %v995, %v965
        %v997 = vadd.f32 %v996, %v966
        %v998 = vadd.f32 %v997, %v967
        %v999 = vrot.slane %v998, 4
        %v1000 = vadd.f32 %v998, %v999
        %v1001 = vrot.slane %v1000, 2
        %v1002 = vadd.f32 %v1000, %v1001
        %v1003 = vrot.slane %v1002, 1
        %v1004 = vadd.f32 %v1002, %v1003
        %1005 = vmatpush.msra.mxu0 %v806
        %1006 = vmatpush.msra.mxu0 %v805
        %1007 = vmatpush.msra.mxu0 %v804
        %1008 = vmatpush.msra.mxu0 %v803
        %1009 = vmatpush.msra.mxu0 %v802
        %1010 = vmatpush.msra.mxu0 %v801
        %1011 = vmatpush.msra.mxu0 %v800
        %1012 = vmatpush.msra.mxu0 %v799
        %1013 = vmatpush.msra.mxu0 %v798
        %1014 = vmatpush.msra.mxu0 %v797
        %1015 = vmatpush.msra.mxu0 %v796
        %1016 = vmatpush.msra.mxu0 %v795
        %1017 = vmatpush.msra.mxu0 %v794
        %1018 = vmatpush.msra.mxu0 %v793
        %1019 = vmatpush.msra.mxu0 %v792
        %1020 = vmatpush.msra.mxu0 %v791
        %1021 = vmatmul.f32.gmra.mxu0 %v1004
        %v1022 = vpop.f32.mrf.mxu0
        %v1023 = vadd.f32 0.0, %v1022
        %1024 = vdwg.mxu0
        %v1025 = vmul.f32 %v1023, %v873
        %v1026 = vadd.f32 %v1025, 1e-05
        %v1027 = vrsqrt.pop %v1026
        %v1028 = vmul.f32 %v1027, %v1026
        %v1029 = vmul.f32 %v1028, %v1027
        %v1030 = vmul.f32 0.5, %v1029
        %v1031 = vsub.f32 1.5, %v1030
        %v1032 = vmul.f32 %v1027, %v1031
        %vm1033 = vweird.f32 %v1026
        %vm1034 = vweird.f32 %v1027
        %vm1035 = vmor %vm1033, %vm1034
        %v1036 = vsel %vm1035, %v1027, %v1032
        %v1038 = vsel %vm875, %v1036, 0
        %1040 = vmatpush.msra.mxu0 0.0
        %1041 = vmatpush.msra.mxu0 0.0
        %1042 = vmatpush.msra.mxu0 0.0
        %1043 = vmatpush.msra.mxu0 0.0
        %1044 = vmatpush.msra.mxu0 0.0
        %1045 = vmatpush.msra.mxu0 0.0
        %1046 = vmatpush.msra.mxu0 0.0
        %1047 = vmatpush.msra.mxu0 0.0
        %1048 = vmatpush.msra.mxu0 0.0
        %1049 = vmatpush.msra.mxu0 0.0
        %1050 = vmatpush.msra.mxu0 0.0
        %1051 = vmatpush.msra.mxu0 0.0
        %1052 = vmatpush.msra.mxu0 0.0
        %1053 = vmatpush.msra.mxu0 0.0
        %1054 = vmatpush.msra.mxu0 0.0
        %1055 = vmatpush.msra.mxu0 %v881
        %1056 = vmatmul.f32.gmra.mxu0 %v1038
        %v1057 = vpop.f32.mrf.mxu0
        %v1058 = vadd.f32 0.0, %v1057
        %1059 = vdwg.mxu0
        %v1060 = vmul.f32 %v1058, %v808
        %v1061 = vperm.slane %v1060, 0
        %v1062 = vmul.f32 %v904, %v1061
        %v1063 = vmul.f32 %v905, %v1061
        %v1064 = vmul.f32 %v906, %v1061
        %v1065 = vmul.f32 %v907, %v1061
        %v1066 = vmul.f32 %v908, %v1061
        %v1067 = vmul.f32 %v909, %v1061
        %v1068 = vmul.f32 %v910, %v1061
        %v1069 = vmul.f32 %v911, %v1061
        %v1070 = vmul.f32 %v912, %v1061
        %v1071 = vmul.f32 %v913, %v1061
        %v1072 = vmul.f32 %v914, %v1061
        %v1073 = vmul.f32 %v915, %v1061
        %v1074 = vmul.f32 %v916, %v1061
        %v1075 = vmul.f32 %v917, %v1061
        %v1076 = vmul.f32 %v918, %v1061
        %v1077 = vmul.f32 %v919, %v1061
        %v1078 = vmul.f32 %v920, %v1061
        %v1079 = vmul.f32 %v921, %v1061
        %v1080 = vmul.f32 %v922, %v1061
        %v1081 = vmul.f32 %v923, %v1061
        %v1082 = vmul.f32 %v924, %v1061
        %v1083 = vmul.f32 %v925, %v1061
        %v1084 = vmul.f32 %v926, %v1061
        %v1085 = vmul.f32 %v927, %v1061
        %v1086 = vmul.f32 %v928, %v1061
        %v1087 = vmul.f32 %v929, %v1061
        %v1088 = vmul.f32 %v930, %v1061
        %v1089 = vmul.f32 %v931, %v1061
        %v1090 = vmul.f32 %v932, %v1061
        %v1091 = vmul.f32 %v933, %v1061
        %v1092 = vmul.f32 %v934, %v1061
        %v1093 = vmul.f32 %v935, %v1061
        %v1095 = vperm.slane %v809, 0
        %v1097 = vadd.f32 %v1062, %v1095
        %v1098 = vadd.f32 %v1063, %v1095
        %v1099 = vadd.f32 %v1064, %v1095
        %v1100 = vadd.f32 %v1065, %v1095
        %v1101 = vadd.f32 %v1066, %v1095
        %v1102 = vadd.f32 %v1067, %v1095
        %v1103 = vadd.f32 %v1068, %v1095
        %v1104 = vadd.f32 %v1069, %v1095
        %v1105 = vadd.f32 %v1070, %v1095
        %v1106 = vadd.f32 %v1071, %v1095
        %v1107 = vadd.f32 %v1072, %v1095
        %v1108 = vadd.f32 %v1073, %v1095
        %v1109 = vadd.f32 %v1074, %v1095
        %v1110 = vadd.f32 %v1075, %v1095
        %v1111 = vadd.f32 %v1076, %v1095
        %v1112 = vadd.f32 %v1077, %v1095
        %v1113 = vadd.f32 %v1078, %v1095
        %v1114 = vadd.f32 %v1079, %v1095
        %v1115 = vadd.f32 %v1080, %v1095
        %v1116 = vadd.f32 %v1081, %v1095
        %v1117 = vadd.f32 %v1082, %v1095
        %v1118 = vadd.f32 %v1083, %v1095
        %v1119 = vadd.f32 %v1084, %v1095
        %v1120 = vadd.f32 %v1085, %v1095
        %v1121 = vadd.f32 %v1086, %v1095
        %v1122 = vadd.f32 %v1087, %v1095
        %v1123 = vadd.f32 %v1088, %v1095
        %v1124 = vadd.f32 %v1089, %v1095
        %v1125 = vadd.f32 %v1090, %v1095
        %v1126 = vadd.f32 %v1091, %v1095
        %v1127 = vadd.f32 %v1092, %v1095
        %v1128 = vadd.f32 %v1093, %v1095
        %v1129 = vmax.f32 %v1097, 0.0
        %v1130 = vmax.f32 %v1098, 0.0
        %v1131 = vmax.f32 %v1099, 0.0
        %v1132 = vmax.f32 %v1100, 0.0
        %v1133 = vmax.f32 %v1101, 0.0
        %v1134 = vmax.f32 %v1102, 0.0
        %v1135 = vmax.f32 %v1103, 0.0
        %v1136 = vmax.f32 %v1104, 0.0
        %v1137 = vmax.f32 %v1105, 0.0
        %v1138 = vmax.f32 %v1106, 0.0
        %v1139 = vmax.f32 %v1107, 0.0
        %v1140 = vmax.f32 %v1108, 0.0
        %v1141 = vmax.f32 %v1109, 0.0
        %v1142 = vmax.f32 %v1110, 0.0
        %v1143 = vmax.f32 %v1111, 0.0
        %v1144 = vmax.f32 %v1112, 0.0
        %v1145 = vmax.f32 %v1113, 0.0
        %v1146 = vmax.f32 %v1114, 0.0
        %v1147 = vmax.f32 %v1115, 0.0
        %v1148 = vmax.f32 %v1116, 0.0
        %v1149 = vmax.f32 %v1117, 0.0
        %v1150 = vmax.f32 %v1118, 0.0
        %v1151 = vmax.f32 %v1119, 0.0
        %v1152 = vmax.f32 %v1120, 0.0
        %v1153 = vmax.f32 %v1121, 0.0
        %v1154 = vmax.f32 %v1122, 0.0
        %v1155 = vmax.f32 %v1123, 0.0
        %v1156 = vmax.f32 %v1124, 0.0
        %v1157 = vmax.f32 %v1125, 0.0
        %v1158 = vmax.f32 %v1126, 0.0
        %v1159 = vmax.f32 %v1127, 0.0
        %v1160 = vmax.f32 %v1128, 0.0
        %vm1193 = vcmask 1040384
        %v1194 = vrot.slane %v1129, 7
        %v1195 = vrot.slane %v1130, 7
        %v1196 = vsel %vm1193, %v1194, %v1195
        %v1197 = vrot.slane %v1131, 7
        %v1198 = vrot.slane %v1132, 7
        %v1199 = vsel %vm1193, %v1197, %v1198
        %v1200 = vrot.slane %v1133, 7
        %v1201 = vrot.slane %v1134, 7
        %v1202 = vsel %vm1193, %v1200, %v1201
        %v1203 = vrot.slane %v1135, 7
        %v1204 = vrot.slane %v1136, 7
        %v1205 = vsel %vm1193, %v1203, %v1204
        %v1206 = vrot.slane %v1137, 7
        %v1207 = vrot.slane %v1138, 7
        %v1208 = vsel %vm1193, %v1206, %v1207
        %v1209 = vrot.slane %v1139, 7
        %v1210 = vrot.slane %v1140, 7
        %v1211 = vsel %vm1193, %v1209, %v1210
        %v1212 = vrot.slane %v1141, 7
        %v1213 = vrot.slane %v1142, 7
        %v1214 = vsel %vm1193, %v1212, %v1213
        %v1215 = vrot.slane %v1143, 7
        %v1216 = vrot.slane %v1144, 7
        %v1217 = vsel %vm1193, %v1215, %v1216
        %v1218 = vrot.slane %v1145, 7
        %v1219 = vrot.slane %v1146, 7
        %v1220 = vsel %vm1193, %v1218, %v1219
        %v1221 = vrot.slane %v1147, 7
        %v1222 = vrot.slane %v1148, 7
        %v1223 = vsel %vm1193, %v1221, %v1222
        %v1224 = vrot.slane %v1149, 7
        %v1225 = vrot.slane %v1150, 7
        %v1226 = vsel %vm1193, %v1224, %v1225
        %v1227 = vrot.slane %v1151, 7
        %v1228 = vrot.slane %v1152, 7
        %v1229 = vsel %vm1193, %v1227, %v1228
        %v1230 = vrot.slane %v1153, 7
        %v1231 = vrot.slane %v1154, 7
        %v1232 = vsel %vm1193, %v1230, %v1231
        %v1233 = vrot.slane %v1155, 7
        %v1234 = vrot.slane %v1156, 7
        %v1235 = vsel %vm1193, %v1233, %v1234
        %v1236 = vrot.slane %v1157, 7
        %v1237 = vrot.slane %v1158, 7
        %v1238 = vsel %vm1193, %v1236, %v1237
        %v1239 = vrot.slane %v1159, 7
        %v1240 = vrot.slane %v1160, 7
        %v1241 = vsel %vm1193, %v1239, %v1240
        %v1290 = vsel %vm1193, 0.0, %v1194
        %v1291 = vsel %vm1193, 0.0, %v1197
        %v1292 = vsel %vm1193, 0.0, %v1200
        %v1293 = vsel %vm1193, 0.0, %v1203
        %v1294 = vsel %vm1193, 0.0, %v1206
        %v1295 = vsel %vm1193, 0.0, %v1209
        %v1296 = vsel %vm1193, 0.0, %v1212
        %v1297 = vsel %vm1193, 0.0, %v1215
        %v1298 = vsel %vm1193, 0.0, %v1218
        %v1299 = vsel %vm1193, 0.0, %v1221
        %v1300 = vsel %vm1193, 0.0, %v1224
        %v1301 = vsel %vm1193, 0.0, %v1227
        %v1302 = vsel %vm1193, 0.0, %v1230
        %v1303 = vsel %vm1193, 0.0, %v1233
        %v1304 = vsel %vm1193, 0.0, %v1236
        %v1305 = vsel %vm1193, 0.0, %v1239
        %v1306 = vsel %vm1193, %v1195, 0.0
        %v1307 = vsel %vm1193, %v1198, 0.0
        %v1308 = vsel %vm1193, %v1201, 0.0
        %v1309 = vsel %vm1193, %v1204, 0.0
        %v1310 = vsel %vm1193, %v1207, 0.0
        %v1311 = vsel %vm1193, %v1210, 0.0
        %v1312 = vsel %vm1193, %v1213, 0.0
        %v1313 = vsel %vm1193, %v1216, 0.0
        %v1314 = vsel %vm1193, %v1219, 0.0
        %v1315 = vsel %vm1193, %v1222, 0.0
        %v1316 = vsel %vm1193, %v1225, 0.0
        %v1317 = vsel %vm1193, %v1228, 0.0
        %v1318 = vsel %vm1193, %v1231, 0.0
        %v1319 = vsel %vm1193, %v1234, 0.0
        %v1320 = vsel %vm1193, %v1237, 0.0
        %v1321 = vsel %vm1193, %v1240, 0.0
        %v1322 = vpack.c.bf16 0.0, 0.0
        %v1323 = vpack.c.bf16 %v1196, %v1290
        %v1324 = vpack.c.bf16 %v1199, %v1291
        %v1325 = vpack.c.bf16 %v1202, %v1292
        %v1326 = vpack.c.bf16 %v1205, %v1293
        %v1327 = vpack.c.bf16 %v1208, %v1294
        %v1328 = vpack.c.bf16 %v1211, %v1295
        %v1329 = vpack.c.bf16 %v1214, %v1296
        %v1330 = vpack.c.bf16 %v1217, %v1297
        %v1331 = vpack.c.bf16 %v1220, %v1298
        %v1332 = vpack.c.bf16 %v1223, %v1299
        %v1333 = vpack.c.bf16 %v1226, %v1300
        %v1334 = vpack.c.bf16 %v1229, %v1301
        %v1335 = vpack.c.bf16 %v1232, %v1302
        %v1336 = vpack.c.bf16 %v1235, %v1303
        %v1337 = vpack.c.bf16 %v1238, %v1304
        %v1338 = vld [vmem:[#allocation5] sm:$0xf]
        %v1339 = vld [vmem:[#allocation5 + $0x4] sm:$0xf]
        %v1340 = vld [vmem:[#allocation5 + $0x8] sm:$0xf]
        %v1341 = vld [vmem:[#allocation5 + $0xc] sm:$0xf]
        %v1342 = vld [vmem:[#allocation5 + $0x10] sm:$0xf]
        %v1343 = vld [vmem:[#allocation5 + $0x14] sm:$0xf]
        %v1344 = vld [vmem:[#allocation5 + $0x18] sm:$0xf]
        %v1345 = vld [vmem:[#allocation5 + $0x1c] sm:$0xf]
        %v1346 = vld [vmem:[#allocation5 + $0x20] sm:$0xf]
        %v1347 = vld [vmem:[#allocation5 + $0x24] sm:$0xf]
        %v1348 = vld [vmem:[#allocation5 + $0x28] sm:$0xf]
        %v1349 = vld [vmem:[#allocation5 + $0x2c] sm:$0xf]
        %v1350 = vld [vmem:[#allocation5 + $0x30] sm:$0xf]
        %v1351 = vld [vmem:[#allocation5 + $0x34] sm:$0xf]
        %v1352 = vld [vmem:[#allocation5 + $0x38] sm:$0xf]
        %v1353 = vld [vmem:[#allocation5 + $0x3c] sm:$0xf]
        %vm1385 = vcmask 1046528
        %v1386 = vrot.slane 0.0, 1
        %v1387 = vsel %vm1385, %v1386, %v1386
        %v1388 = vrot.slane %v1290, 1
        %v1389 = vrot.slane %v1196, 1
        %v1390 = vsel %vm1385, %v1388, %v1389
        %v1391 = vrot.slane %v1306, 1
        %v1392 = vsel %vm1385, %v1389, %v1391
        %v1393 = vrot.slane %v1291, 1
        %v1394 = vrot.slane %v1199, 1
        %v1395 = vsel %vm1385, %v1393, %v1394
        %v1396 = vrot.slane %v1307, 1
        %v1397 = vsel %vm1385, %v1394, %v1396
        %v1398 = vrot.slane %v1292, 1
        %v1399 = vrot.slane %v1202, 1
        %v1400 = vsel %vm1385, %v1398, %v1399
        %v1401 = vrot.slane %v1308, 1
        %v1402 = vsel %vm1385, %v1399, %v1401
        %v1403 = vrot.slane %v1293, 1
        %v1404 = vrot.slane %v1205, 1
        %v1405 = vsel %vm1385, %v1403, %v1404
        %v1406 = vrot.slane %v1309, 1
        %v1407 = vsel %vm1385, %v1404, %v1406
        %v1408 = vrot.slane %v1294, 1
        %v1409 = vrot.slane %v1208, 1
        %v1410 = vsel %vm1385, %v1408, %v1409
        %v1411 = vrot.slane %v1310, 1
        %v1412 = vsel %vm1385, %v1409, %v1411
        %v1413 = vrot.slane %v1295, 1
        %v1414 = vrot.slane %v1211, 1
        %v1415 = vsel %vm1385, %v1413, %v1414
        %v1416 = vrot.slane %v1311, 1
        %v1417 = vsel %vm1385, %v1414, %v1416
        %v1418 = vrot.slane %v1296, 1
        %v1419 = vrot.slane %v1214, 1
        %v1420 = vsel %vm1385, %v1418, %v1419
        %v1421 = vrot.slane %v1312, 1
        %v1422 = vsel %vm1385, %v1419, %v1421
        %v1423 = vrot.slane %v1297, 1
        %v1424 = vrot.slane %v1217, 1
        %v1425 = vsel %vm1385, %v1423, %v1424
        %v1426 = vrot.slane %v1313, 1
        %v1427 = vsel %vm1385, %v1424, %v1426
        %v1428 = vrot.slane %v1298, 1
        %v1429 = vrot.slane %v1220, 1
        %v1430 = vsel %vm1385, %v1428, %v1429
        %v1431 = vrot.slane %v1314, 1
        %v1432 = vsel %vm1385, %v1429, %v1431
        %v1433 = vrot.slane %v1299, 1
        %v1434 = vrot.slane %v1223, 1
        %v1435 = vsel %vm1385, %v1433, %v1434
        %v1436 = vrot.slane %v1315, 1
        %v1437 = vsel %vm1385, %v1434, %v1436
        %v1438 = vrot.slane %v1300, 1
        %v1439 = vrot.slane %v1226, 1
        %v1440 = vsel %vm1385, %v1438, %v1439
        %v1441 = vrot.slane %v1316, 1
        %v1442 = vsel %vm1385, %v1439, %v1441
        %v1443 = vrot.slane %v1301, 1
        %v1444 = vrot.slane %v1229, 1
        %v1445 = vsel %vm1385, %v1443, %v1444
        %v1446 = vrot.slane %v1317, 1
        %v1447 = vsel %vm1385, %v1444, %v1446
        %v1448 = vrot.slane %v1302, 1
        %v1449 = vrot.slane %v1232, 1
        %v1450 = vsel %vm1385, %v1448, %v1449
        %v1451 = vrot.slane %v1318, 1
        %v1452 = vsel %vm1385, %v1449, %v1451
        %v1453 = vrot.slane %v1303, 1
        %v1454 = vrot.slane %v1235, 1
        %v1455 = vsel %vm1385, %v1453, %v1454
        %v1456 = vrot.slane %v1319, 1
        %v1457 = vsel %vm1385, %v1454, %v1456
        %v1458 = vrot.slane %v1304, 1
        %v1459 = vrot.slane %v1238, 1
        %v1460 = vsel %vm1385, %v1458, %v1459
        %v1461 = vrot.slane %v1320, 1
        %v1462 = vsel %vm1385, %v1459, %v1461
        %v1494 = vpack.c.bf16 %v1387, %v1387
        %v1495 = vpack.c.bf16 %v1392, %v1390
        %v1496 = vpack.c.bf16 %v1397, %v1395
        %v1497 = vpack.c.bf16 %v1402, %v1400
        %v1498 = vpack.c.bf16 %v1407, %v1405
        %v1499 = vpack.c.bf16 %v1412, %v1410
        %v1500 = vpack.c.bf16 %v1417, %v1415
        %v1501 = vpack.c.bf16 %v1422, %v1420
        %v1502 = vpack.c.bf16 %v1427, %v1425
        %v1503 = vpack.c.bf16 %v1432, %v1430
        %v1504 = vpack.c.bf16 %v1437, %v1435
        %v1505 = vpack.c.bf16 %v1442, %v1440
        %v1506 = vpack.c.bf16 %v1447, %v1445
        %v1507 = vpack.c.bf16 %v1452, %v1450
        %v1508 = vpack.c.bf16 %v1457, %v1455
        %v1509 = vpack.c.bf16 %v1462, %v1460
        %s1510 = scalar_lea.vmem [#allocation5], 64
        %v1511 = vld [vmem:[%s1510] sm:$0xf]
        %v1512 = vld [vmem:[%s1510 + $0x4] sm:$0xf]
        %v1513 = vld [vmem:[%s1510 + $0x8] sm:$0xf]
        %v1514 = vld [vmem:[%s1510 + $0xc] sm:$0xf]
        %v1515 = vld [vmem:[%s1510 + $0x10] sm:$0xf]
        %v1516 = vld [vmem:[%s1510 + $0x14] sm:$0xf]
        %v1517 = vld [vmem:[%s1510 + $0x18] sm:$0xf]
        %v1518 = vld [vmem:[%s1510 + $0x1c] sm:$0xf]
        %v1519 = vld [vmem:[%s1510 + $0x20] sm:$0xf]
        %v1520 = vld [vmem:[%s1510 + $0x24] sm:$0xf]
        %v1521 = vld [vmem:[%s1510 + $0x28] sm:$0xf]
        %v1522 = vld [vmem:[%s1510 + $0x2c] sm:$0xf]
        %v1523 = vld [vmem:[%s1510 + $0x30] sm:$0xf]
        %v1524 = vld [vmem:[%s1510 + $0x34] sm:$0xf]
        %v1525 = vld [vmem:[%s1510 + $0x38] sm:$0xf]
        %v1526 = vld [vmem:[%s1510 + $0x3c] sm:$0xf]
        %v1543 = vunpack.c.l.b16 %v1511
        %v1544 = vunpack.c.l.b16 %v1512
        %v1545 = vunpack.c.l.b16 %v1513
        %v1546 = vunpack.c.l.b16 %v1514
        %v1547 = vunpack.c.l.b16 %v1515
        %v1548 = vunpack.c.l.b16 %v1516
        %v1549 = vunpack.c.l.b16 %v1517
        %v1550 = vunpack.c.l.b16 %v1518
        %v1551 = vunpack.c.l.b16 %v1519
        %v1552 = vunpack.c.l.b16 %v1520
        %v1553 = vunpack.c.l.b16 %v1521
        %v1554 = vunpack.c.l.b16 %v1522
        %v1555 = vunpack.c.l.b16 %v1523
        %v1556 = vunpack.c.l.b16 %v1524
        %v1557 = vunpack.c.l.b16 %v1525
        %v1558 = vunpack.c.l.b16 %v1526
        %v1559 = vpack.c.b16 %v1544, %v1543
        %v1560 = vpack.c.b16 %v1546, %v1545
        %v1561 = vpack.c.b16 %v1548, %v1547
        %v1562 = vpack.c.b16 %v1550, %v1549
        %v1563 = vpack.c.b16 %v1552, %v1551
        %v1564 = vpack.c.b16 %v1554, %v1553
        %v1565 = vpack.c.b16 %v1556, %v1555
        %v1566 = vpack.c.b16 %v1558, %v1557
        %1575 = vmatpush.bf16.msra.mxu0 %v1566
        %1576 = vmatpush.bf16.msra.mxu0 %v1565
        %1577 = vmatpush.bf16.msra.mxu0 %v1564
        %1578 = vmatpush.bf16.msra.mxu0 %v1563
        %1579 = vmatpush.bf16.msra.mxu0 %v1562
        %1580 = vmatpush.bf16.msra.mxu0 %v1561
        %1581 = vmatpush.bf16.msra.mxu0 %v1560
        %1582 = vmatpush.bf16.msra.mxu0 %v1559
        %1583 = vmatmul.bf16.gmra.mxu0 %v1494
        %v1584 = vpop.f32.mrf.mxu0
        %v1585 = vadd.f32 0.0, %v1584
        %v1586 = vpop.f32.mrf.mxu0
        %v1587 = vadd.f32 0.0, %v1586
        %1588 = vmatmul.bf16.gmra.mxu0 %v1495
        %v1589 = vpop.f32.mrf.mxu0
        %v1590 = vadd.f32 0.0, %v1589
        %v1591 = vpop.f32.mrf.mxu0
        %v1592 = vadd.f32 0.0, %v1591
        %1593 = vmatmul.bf16.gmra.mxu0 %v1496
        %v1594 = vpop.f32.mrf.mxu0
        %v1595 = vadd.f32 0.0, %v1594
        %v1596 = vpop.f32.mrf.mxu0
        %v1597 = vadd.f32 0.0, %v1596
        %1598 = vmatmul.bf16.gmra.mxu0 %v1497
        %v1599 = vpop.f32.mrf.mxu0
        %v1600 = vadd.f32 0.0, %v1599
        %v1601 = vpop.f32.mrf.mxu0
        %v1602 = vadd.f32 0.0, %v1601
        %1603 = vmatmul.bf16.gmra.mxu0 %v1498
        %v1604 = vpop.f32.mrf.mxu0
        %v1605 = vadd.f32 0.0, %v1604
        %v1606 = vpop.f32.mrf.mxu0
        %v1607 = vadd.f32 0.0, %v1606
        %1608 = vmatmul.bf16.gmra.mxu0 %v1499
        %v1609 = vpop.f32.mrf.mxu0
        %v1610 = vadd.f32 0.0, %v1609
        %v1611 = vpop.f32.mrf.mxu0
        %v1612 = vadd.f32 0.0, %v1611
        %1613 = vmatmul.bf16.gmra.mxu0 %v1500
        %v1614 = vpop.f32.mrf.mxu0
        %v1615 = vadd.f32 0.0, %v1614
        %v1616 = vpop.f32.mrf.mxu0
        %v1617 = vadd.f32 0.0, %v1616
        %1618 = vmatmul.bf16.gmra.mxu0 %v1501
        %v1619 = vpop.f32.mrf.mxu0
        %v1620 = vadd.f32 0.0, %v1619
        %v1621 = vpop.f32.mrf.mxu0
        %v1622 = vadd.f32 0.0, %v1621
        %1623 = vmatmul.bf16.gmra.mxu0 %v1502
        %v1624 = vpop.f32.mrf.mxu0
        %v1625 = vadd.f32 0.0, %v1624
        %v1626 = vpop.f32.mrf.mxu0
        %v1627 = vadd.f32 0.0, %v1626
        %1628 = vmatmul.bf16.gmra.mxu0 %v1503
        %v1629 = vpop.f32.mrf.mxu0
        %v1630 = vadd.f32 0.0, %v1629
        %v1631 = vpop.f32.mrf.mxu0
        %v1632 = vadd.f32 0.0, %v1631
        %1633 = vmatmul.bf16.gmra.mxu0 %v1504
        %v1634 = vpop.f32.mrf.mxu0
        %v1635 = vadd.f32 0.0, %v1634
        %v1636 = vpop.f32.mrf.mxu0
        %v1637 = vadd.f32 0.0, %v1636
        %1638 = vmatmul.bf16.gmra.mxu0 %v1505
        %v1639 = vpop.f32.mrf.mxu0
        %v1640 = vadd.f32 0.0, %v1639
        %v1641 = vpop.f32.mrf.mxu0
        %v1642 = vadd.f32 0.0, %v1641
        %1643 = vmatmul.bf16.gmra.mxu0 %v1506
        %v1644 = vpop.f32.mrf.mxu0
        %v1645 = vadd.f32 0.0, %v1644
        %v1646 = vpop.f32.mrf.mxu0
        %v1647 = vadd.f32 0.0, %v1646
        %1648 = vmatmul.bf16.gmra.mxu0 %v1507
        %v1649 = vpop.f32.mrf.mxu0
        %v1650 = vadd.f32 0.0, %v1649
        %v1651 = vpop.f32.mrf.mxu0
        %v1652 = vadd.f32 0.0, %v1651
        %1653 = vmatmul.bf16.gmra.mxu0 %v1508
        %v1654 = vpop.f32.mrf.mxu0
        %v1655 = vadd.f32 0.0, %v1654
        %v1656 = vpop.f32.mrf.mxu0
        %v1657 = vadd.f32 0.0, %v1656
        %1658 = vmatmul.bf16.gmra.mxu0 %v1509
        %v1659 = vpop.f32.mrf.mxu0
        %v1660 = vadd.f32 0.0, %v1659
        %v1661 = vpop.f32.mrf.mxu0
        %v1662 = vadd.f32 0.0, %v1661
        %1663 = vdwg.mxu0
        %v1680 = vunpack.c.l.b16 %v1338
        %v1681 = vunpack.c.l.b16 %v1339
        %v1682 = vunpack.c.l.b16 %v1340
        %v1683 = vunpack.c.l.b16 %v1341
        %v1684 = vunpack.c.l.b16 %v1342
        %v1685 = vunpack.c.l.b16 %v1343
        %v1686 = vunpack.c.l.b16 %v1344
        %v1687 = vunpack.c.l.b16 %v1345
        %v1688 = vunpack.c.l.b16 %v1346
        %v1689 = vunpack.c.l.b16 %v1347
        %v1690 = vunpack.c.l.b16 %v1348
        %v1691 = vunpack.c.l.b16 %v1349
        %v1692 = vunpack.c.l.b16 %v1350
        %v1693 = vunpack.c.l.b16 %v1351
        %v1694 = vunpack.c.l.b16 %v1352
        %v1695 = vunpack.c.l.b16 %v1353
        %v1696 = vpack.c.b16 %v1681, %v1680
        %v1697 = vpack.c.b16 %v1683, %v1682
        %v1698 = vpack.c.b16 %v1685, %v1684
        %v1699 = vpack.c.b16 %v1687, %v1686
        %v1700 = vpack.c.b16 %v1689, %v1688
        %v1701 = vpack.c.b16 %v1691, %v1690
        %v1702 = vpack.c.b16 %v1693, %v1692
        %v1703 = vpack.c.b16 %v1695, %v1694
        %1712 = vmatpush.bf16.msra.mxu0 %v1703
        %1713 = vmatpush.bf16.msra.mxu0 %v1702
        %1714 = vmatpush.bf16.msra.mxu0 %v1701
        %1715 = vmatpush.bf16.msra.mxu0 %v1700
        %1716 = vmatpush.bf16.msra.mxu0 %v1699
        %1717 = vmatpush.bf16.msra.mxu0 %v1698
        %1718 = vmatpush.bf16.msra.mxu0 %v1697
        %1719 = vmatpush.bf16.msra.mxu0 %v1696
        %1720 = vmatmul.bf16.gmra.mxu0 %v1322
        %v1721 = vpop.f32.mrf.mxu0
        %v1722 = vadd.f32 %v1585, %v1721
        %v1723 = vpop.f32.mrf.mxu0
        %v1724 = vadd.f32 %v1587, %v1723
        %1725 = vmatmul.bf16.gmra.mxu0 %v1323
        %v1726 = vpop.f32.mrf.mxu0
        %v1727 = vadd.f32 %v1590, %v1726
        %v1728 = vpop.f32.mrf.mxu0
        %v1729 = vadd.f32 %v1592, %v1728
        %1730 = vmatmul.bf16.gmra.mxu0 %v1324
        %v1731 = vpop.f32.mrf.mxu0
        %v1732 = vadd.f32 %v1595, %v1731
        %v1733 = vpop.f32.mrf.mxu0
        %v1734 = vadd.f32 %v1597, %v1733
        %1735 = vmatmul.bf16.gmra.mxu0 %v1325
        %v1736 = vpop.f32.mrf.mxu0
        %v1737 = vadd.f32 %v1600, %v1736
        %v1738 = vpop.f32.mrf.mxu0
        %v1739 = vadd.f32 %v1602, %v1738
        %1740 = vmatmul.bf16.gmra.mxu0 %v1326
        %v1741 = vpop.f32.mrf.mxu0
        %v1742 = vadd.f32 %v1605, %v1741
        %v1743 = vpop.f32.mrf.mxu0
        %v1744 = vadd.f32 %v1607, %v1743
        %1745 = vmatmul.bf16.gmra.mxu0 %v1327
        %v1746 = vpop.f32.mrf.mxu0
        %v1747 = vadd.f32 %v1610, %v1746
        %v1748 = vpop.f32.mrf.mxu0
        %v1749 = vadd.f32 %v1612, %v1748
        %1750 = vmatmul.bf16.gmra.mxu0 %v1328
        %v1751 = vpop.f32.mrf.mxu0
        %v1752 = vadd.f32 %v1615, %v1751
        %v1753 = vpop.f32.mrf.mxu0
        %v1754 = vadd.f32 %v1617, %v1753
        %1755 = vmatmul.bf16.gmra.mxu0 %v1329
        %v1756 = vpop.f32.mrf.mxu0
        %v1757 = vadd.f32 %v1620, %v1756
        %v1758 = vpop.f32.mrf.mxu0
        %v1759 = vadd.f32 %v1622, %v1758
        %1760 = vmatmul.bf16.gmra.mxu0 %v1330
        %v1761 = vpop.f32.mrf.mxu0
        %v1762 = vadd.f32 %v1625, %v1761
        %v1763 = vpop.f32.mrf.mxu0
        %v1764 = vadd.f32 %v1627, %v1763
        %1765 = vmatmul.bf16.gmra.mxu0 %v1331
        %v1766 = vpop.f32.mrf.mxu0
        %v1767 = vadd.f32 %v1630, %v1766
        %v1768 = vpop.f32.mrf.mxu0
        %v1769 = vadd.f32 %v1632, %v1768
        %1770 = vmatmul.bf16.gmra.mxu0 %v1332
        %v1771 = vpop.f32.mrf.mxu0
        %v1772 = vadd.f32 %v1635, %v1771
        %v1773 = vpop.f32.mrf.mxu0
        %v1774 = vadd.f32 %v1637, %v1773
        %1775 = vmatmul.bf16.gmra.mxu0 %v1333
        %v1776 = vpop.f32.mrf.mxu0
        %v1777 = vadd.f32 %v1640, %v1776
        %v1778 = vpop.f32.mrf.mxu0
        %v1779 = vadd.f32 %v1642, %v1778
        %1780 = vmatmul.bf16.gmra.mxu0 %v1334
        %v1781 = vpop.f32.mrf.mxu0
        %v1782 = vadd.f32 %v1645, %v1781
        %v1783 = vpop.f32.mrf.mxu0
        %v1784 = vadd.f32 %v1647, %v1783
        %1785 = vmatmul.bf16.gmra.mxu0 %v1335
        %v1786 = vpop.f32.mrf.mxu0
        %v1787 = vadd.f32 %v1650, %v1786
        %v1788 = vpop.f32.mrf.mxu0
        %v1789 = vadd.f32 %v1652, %v1788
        %1790 = vmatmul.bf16.gmra.mxu0 %v1336
        %v1791 = vpop.f32.mrf.mxu0
        %v1792 = vadd.f32 %v1655, %v1791
        %v1793 = vpop.f32.mrf.mxu0
        %v1794 = vadd.f32 %v1657, %v1793
        %1795 = vmatmul.bf16.gmra.mxu0 %v1337
        %v1796 = vpop.f32.mrf.mxu0
        %v1797 = vadd.f32 %v1660, %v1796
        %v1798 = vpop.f32.mrf.mxu0
        %v1799 = vadd.f32 %v1662, %v1798
        %1800 = vdwg.mxu0
        %vm1801 = vcmask 1045504
        %v1802 = vrot.slane 0.0, 2
        %v1803 = vsel %vm1801, %v1802, %v1802
        %v1804 = vrot.slane %v1290, 2
        %v1805 = vrot.slane %v1196, 2
        %v1806 = vsel %vm1801, %v1804, %v1805
        %v1807 = vrot.slane %v1306, 2
        %v1808 = vsel %vm1801, %v1805, %v1807
        %v1809 = vrot.slane %v1291, 2
        %v1810 = vrot.slane %v1199, 2
        %v1811 = vsel %vm1801, %v1809, %v1810
        %v1812 = vrot.slane %v1307, 2
        %v1813 = vsel %vm1801, %v1810, %v1812
        %v1814 = vrot.slane %v1292, 2
        %v1815 = vrot.slane %v1202, 2
        %v1816 = vsel %vm1801, %v1814, %v1815
        %v1817 = vrot.slane %v1308, 2
        %v1818 = vsel %vm1801, %v1815, %v1817
        %v1819 = vrot.slane %v1293, 2
        %v1820 = vrot.slane %v1205, 2
        %v1821 = vsel %vm1801, %v1819, %v1820
        %v1822 = vrot.slane %v1309, 2
        %v1823 = vsel %vm1801, %v1820, %v1822
        %v1824 = vrot.slane %v1294, 2
        %v1825 = vrot.slane %v1208, 2
        %v1826 = vsel %vm1801, %v1824, %v1825
        %v1827 = vrot.slane %v1310, 2
        %v1828 = vsel %vm1801, %v1825, %v1827
        %v1829 = vrot.slane %v1295, 2
        %v1830 = vrot.slane %v1211, 2
        %v1831 = vsel %vm1801, %v1829, %v1830
        %v1832 = vrot.slane %v1311, 2
        %v1833 = vsel %vm1801, %v1830, %v1832
        %v1834 = vrot.slane %v1296, 2
        %v1835 = vrot.slane %v1214, 2
        %v1836 = vsel %vm1801, %v1834, %v1835
        %v1837 = vrot.slane %v1312, 2
        %v1838 = vsel %vm1801, %v1835, %v1837
        %v1839 = vrot.slane %v1297, 2
        %v1840 = vrot.slane %v1217, 2
        %v1841 = vsel %vm1801, %v1839, %v1840
        %v1842 = vrot.slane %v1313, 2
        %v1843 = vsel %vm1801, %v1840, %v1842
        %v1844 = vrot.slane %v1298, 2
        %v1845 = vrot.slane %v1220, 2
        %v1846 = vsel %vm1801, %v1844, %v1845
        %v1847 = vrot.slane %v1314, 2
        %v1848 = vsel %vm1801, %v1845, %v1847
        %v1849 = vrot.slane %v1299, 2
        %v1850 = vrot.slane %v1223, 2
        %v1851 = vsel %vm1801, %v1849, %v1850
        %v1852 = vrot.slane %v1315, 2
        %v1853 = vsel %vm1801, %v1850, %v1852
        %v1854 = vrot.slane %v1300, 2
        %v1855 = vrot.slane %v1226, 2
        %v1856 = vsel %vm1801, %v1854, %v1855
        %v1857 = vrot.slane %v1316, 2
        %v1858 = vsel %vm1801, %v1855, %v1857
        %v1859 = vrot.slane %v1301, 2
        %v1860 = vrot.slane %v1229, 2
        %v1861 = vsel %vm1801, %v1859, %v1860
        %v1862 = vrot.slane %v1317, 2
        %v1863 = vsel %vm1801, %v1860, %v1862
        %v1864 = vrot.slane %v1302, 2
        %v1865 = vrot.slane %v1232, 2
        %v1866 = vsel %vm1801, %v1864, %v1865
        %v1867 = vrot.slane %v1318, 2
        %v1868 = vsel %vm1801, %v1865, %v1867
        %v1869 = vrot.slane %v1303, 2
        %v1870 = vrot.slane %v1235, 2
        %v1871 = vsel %vm1801, %v1869, %v1870
        %v1872 = vrot.slane %v1319, 2
        %v1873 = vsel %vm1801, %v1870, %v1872
        %v1874 = vrot.slane %v1304, 2
        %v1875 = vrot.slane %v1238, 2
        %v1876 = vsel %vm1801, %v1874, %v1875
        %v1877 = vrot.slane %v1320, 2
        %v1878 = vsel %vm1801, %v1875, %v1877
        %v1910 = vpack.c.bf16 %v1803, %v1803
        %v1911 = vpack.c.bf16 %v1808, %v1806
        %v1912 = vpack.c.bf16 %v1813, %v1811
        %v1913 = vpack.c.bf16 %v1818, %v1816
        %v1914 = vpack.c.bf16 %v1823, %v1821
        %v1915 = vpack.c.bf16 %v1828, %v1826
        %v1916 = vpack.c.bf16 %v1833, %v1831
        %v1917 = vpack.c.bf16 %v1838, %v1836
        %v1918 = vpack.c.bf16 %v1843, %v1841
        %v1919 = vpack.c.bf16 %v1848, %v1846
        %v1920 = vpack.c.bf16 %v1853, %v1851
        %v1921 = vpack.c.bf16 %v1858, %v1856
        %v1922 = vpack.c.bf16 %v1863, %v1861
        %v1923 = vpack.c.bf16 %v1868, %v1866
        %v1924 = vpack.c.bf16 %v1873, %v1871
        %v1925 = vpack.c.bf16 %v1878, %v1876
        %s1926 = scalar_lea.vmem [#allocation5], 128
        %v1927 = vld [vmem:[%s1926] sm:$0xf]
        %v1928 = vld [vmem:[%s1926 + $0x4] sm:$0xf]
        %v1929 = vld [vmem:[%s1926 + $0x8] sm:$0xf]
        %v1930 = vld [vmem:[%s1926 + $0xc] sm:$0xf]
        %v1931 = vld [vmem:[%s1926 + $0x10] sm:$0xf]
        %v1932 = vld [vmem:[%s1926 + $0x14] sm:$0xf]
        %v1933 = vld [vmem:[%s1926 + $0x18] sm:$0xf]
        %v1934 = vld [vmem:[%s1926 + $0x1c] sm:$0xf]
        %v1935 = vld [vmem:[%s1926 + $0x20] sm:$0xf]
        %v1936 = vld [vmem:[%s1926 + $0x24] sm:$0xf]
        %v1937 = vld [vmem:[%s1926 + $0x28] sm:$0xf]
        %v1938 = vld [vmem:[%s1926 + $0x2c] sm:$0xf]
        %v1939 = vld [vmem:[%s1926 + $0x30] sm:$0xf]
        %v1940 = vld [vmem:[%s1926 + $0x34] sm:$0xf]
        %v1941 = vld [vmem:[%s1926 + $0x38] sm:$0xf]
        %v1942 = vld [vmem:[%s1926 + $0x3c] sm:$0xf]
        %v1959 = vunpack.c.l.b16 %v1927
        %v1960 = vunpack.c.l.b16 %v1928
        %v1961 = vunpack.c.l.b16 %v1929
        %v1962 = vunpack.c.l.b16 %v1930
        %v1963 = vunpack.c.l.b16 %v1931
        %v1964 = vunpack.c.l.b16 %v1932
        %v1965 = vunpack.c.l.b16 %v1933
        %v1966 = vunpack.c.l.b16 %v1934
        %v1967 = vunpack.c.l.b16 %v1935
        %v1968 = vunpack.c.l.b16 %v1936
        %v1969 = vunpack.c.l.b16 %v1937
        %v1970 = vunpack.c.l.b16 %v1938
        %v1971 = vunpack.c.l.b16 %v1939
        %v1972 = vunpack.c.l.b16 %v1940
        %v1973 = vunpack.c.l.b16 %v1941
        %v1974 = vunpack.c.l.b16 %v1942
        %v1975 = vpack.c.b16 %v1960, %v1959
        %v1976 = vpack.c.b16 %v1962, %v1961
        %v1977 = vpack.c.b16 %v1964, %v1963
        %v1978 = vpack.c.b16 %v1966, %v1965
        %v1979 = vpack.c.b16 %v1968, %v1967
        %v1980 = vpack.c.b16 %v1970, %v1969
        %v1981 = vpack.c.b16 %v1972, %v1971
        %v1982 = vpack.c.b16 %v1974, %v1973
        %1991 = vmatpush.bf16.msra.mxu0 %v1982
        %1992 = vmatpush.bf16.msra.mxu0 %v1981
        %1993 = vmatpush.bf16.msra.mxu0 %v1980
        %1994 = vmatpush.bf16.msra.mxu0 %v1979
        %1995 = vmatpush.bf16.msra.mxu0 %v1978
        %1996 = vmatpush.bf16.msra.mxu0 %v1977
        %1997 = vmatpush.bf16.msra.mxu0 %v1976
        %1998 = vmatpush.bf16.msra.mxu0 %v1975
        %1999 = vmatmul.bf16.gmra.mxu0 %v1910
        %v2000 = vpop.f32.mrf.mxu0
        %v2001 = vadd.f32 0.0, %v2000
        %v2002 = vpop.f32.mrf.mxu0
        %v2003 = vadd.f32 0.0, %v2002
        %2004 = vmatmul.bf16.gmra.mxu0 %v1911
        %v2005 = vpop.f32.mrf.mxu0
        %v2006 = vadd.f32 0.0, %v2005
        %v2007 = vpop.f32.mrf.mxu0
        %v2008 = vadd.f32 0.0, %v2007
        %2009 = vmatmul.bf16.gmra.mxu0 %v1912
        %v2010 = vpop.f32.mrf.mxu0
        %v2011 = vadd.f32 0.0, %v2010
        %v2012 = vpop.f32.mrf.mxu0
        %v2013 = vadd.f32 0.0, %v2012
        %2014 = vmatmul.bf16.gmra.mxu0 %v1913
        %v2015 = vpop.f32.mrf.mxu0
        %v2016 = vadd.f32 0.0, %v2015
        %v2017 = vpop.f32.mrf.mxu0
        %v2018 = vadd.f32 0.0, %v2017
        %2019 = vmatmul.bf16.gmra.mxu0 %v1914
        %v2020 = vpop.f32.mrf.mxu0
        %v2021 = vadd.f32 0.0, %v2020
        %v2022 = vpop.f32.mrf.mxu0
        %v2023 = vadd.f32 0.0, %v2022
        %2024 = vmatmul.bf16.gmra.mxu0 %v1915
        %v2025 = vpop.f32.mrf.mxu0
        %v2026 = vadd.f32 0.0, %v2025
        %v2027 = vpop.f32.mrf.mxu0
        %v2028 = vadd.f32 0.0, %v2027
        %2029 = vmatmul.bf16.gmra.mxu0 %v1916
        %v2030 = vpop.f32.mrf.mxu0
        %v2031 = vadd.f32 0.0, %v2030
        %v2032 = vpop.f32.mrf.mxu0
        %v2033 = vadd.f32 0.0, %v2032
        %2034 = vmatmul.bf16.gmra.mxu0 %v1917
        %v2035 = vpop.f32.mrf.mxu0
        %v2036 = vadd.f32 0.0, %v2035
        %v2037 = vpop.f32.mrf.mxu0
        %v2038 = vadd.f32 0.0, %v2037
        %2039 = vmatmul.bf16.gmra.mxu0 %v1918
        %v2040 = vpop.f32.mrf.mxu0
        %v2041 = vadd.f32 0.0, %v2040
        %v2042 = vpop.f32.mrf.mxu0
        %v2043 = vadd.f32 0.0, %v2042
        %2044 = vmatmul.bf16.gmra.mxu0 %v1919
        %v2045 = vpop.f32.mrf.mxu0
        %v2046 = vadd.f32 0.0, %v2045
        %v2047 = vpop.f32.mrf.mxu0
        %v2048 = vadd.f32 0.0, %v2047
        %2049 = vmatmul.bf16.gmra.mxu0 %v1920
        %v2050 = vpop.f32.mrf.mxu0
        %v2051 = vadd.f32 0.0, %v2050
        %v2052 = vpop.f32.mrf.mxu0
        %v2053 = vadd.f32 0.0, %v2052
        %2054 = vmatmul.bf16.gmra.mxu0 %v1921
        %v2055 = vpop.f32.mrf.mxu0
        %v2056 = vadd.f32 0.0, %v2055
        %v2057 = vpop.f32.mrf.mxu0
        %v2058 = vadd.f32 0.0, %v2057
        %2059 = vmatmul.bf16.gmra.mxu0 %v1922
        %v2060 = vpop.f32.mrf.mxu0
        %v2061 = vadd.f32 0.0, %v2060
        %v2062 = vpop.f32.mrf.mxu0
        %v2063 = vadd.f32 0.0, %v2062
        %2064 = vmatmul.bf16.gmra.mxu0 %v1923
        %v2065 = vpop.f32.mrf.mxu0
        %v2066 = vadd.f32 0.0, %v2065
        %v2067 = vpop.f32.mrf.mxu0
        %v2068 = vadd.f32 0.0, %v2067
        %2069 = vmatmul.bf16.gmra.mxu0 %v1924
        %v2070 = vpop.f32.mrf.mxu0
        %v2071 = vadd.f32 0.0, %v2070
        %v2072 = vpop.f32.mrf.mxu0
        %v2073 = vadd.f32 0.0, %v2072
        %2074 = vmatmul.bf16.gmra.mxu0 %v1925
        %v2075 = vpop.f32.mrf.mxu0
        %v2076 = vadd.f32 0.0, %v2075
        %v2077 = vpop.f32.mrf.mxu0
        %v2078 = vadd.f32 0.0, %v2077
        %2079 = vdwg.mxu0
        %v2080 = vadd.f32 %v1722, %v2001
        %v2081 = vadd.f32 %v1724, %v2003
        %v2082 = vadd.f32 %v1727, %v2006
        %v2083 = vadd.f32 %v1729, %v2008
        %v2084 = vadd.f32 %v1732, %v2011
        %v2085 = vadd.f32 %v1734, %v2013
        %v2086 = vadd.f32 %v1737, %v2016
        %v2087 = vadd.f32 %v1739, %v2018
        %v2088 = vadd.f32 %v1742, %v2021
        %v2089 = vadd.f32 %v1744, %v2023
        %v2090 = vadd.f32 %v1747, %v2026
        %v2091 = vadd.f32 %v1749, %v2028
        %v2092 = vadd.f32 %v1752, %v2031
        %v2093 = vadd.f32 %v1754, %v2033
        %v2094 = vadd.f32 %v1757, %v2036
        %v2095 = vadd.f32 %v1759, %v2038
        %v2096 = vadd.f32 %v1762, %v2041
        %v2097 = vadd.f32 %v1764, %v2043
        %v2098 = vadd.f32 %v1767, %v2046
        %v2099 = vadd.f32 %v1769, %v2048
        %v2100 = vadd.f32 %v1772, %v2051
        %v2101 = vadd.f32 %v1774, %v2053
        %v2102 = vadd.f32 %v1777, %v2056
        %v2103 = vadd.f32 %v1779, %v2058
        %v2104 = vadd.f32 %v1782, %v2061
        %v2105 = vadd.f32 %v1784, %v2063
        %v2106 = vadd.f32 %v1787, %v2066
        %v2107 = vadd.f32 %v1789, %v2068
        %v2108 = vadd.f32 %v1792, %v2071
        %v2109 = vadd.f32 %v1794, %v2073
        %v2110 = vadd.f32 %v1797, %v2076
        %v2111 = vadd.f32 %v1799, %v2078
        %v2112 = vpack.c.bf16 %v1241, %v1305
        %s2113 = scalar_lea.vmem [#allocation5], 192
        %v2114 = vld [vmem:[%s2113] sm:$0xf]
        %v2115 = vld [vmem:[%s2113 + $0x4] sm:$0xf]
        %v2116 = vld [vmem:[%s2113 + $0x8] sm:$0xf]
        %v2117 = vld [vmem:[%s2113 + $0xc] sm:$0xf]
        %v2118 = vld [vmem:[%s2113 + $0x10] sm:$0xf]
        %v2119 = vld [vmem:[%s2113 + $0x14] sm:$0xf]
        %v2120 = vld [vmem:[%s2113 + $0x18] sm:$0xf]
        %v2121 = vld [vmem:[%s2113 + $0x1c] sm:$0xf]
        %v2122 = vld [vmem:[%s2113 + $0x20] sm:$0xf]
        %v2123 = vld [vmem:[%s2113 + $0x24] sm:$0xf]
        %v2124 = vld [vmem:[%s2113 + $0x28] sm:$0xf]
        %v2125 = vld [vmem:[%s2113 + $0x2c] sm:$0xf]
        %v2126 = vld [vmem:[%s2113 + $0x30] sm:$0xf]
        %v2127 = vld [vmem:[%s2113 + $0x34] sm:$0xf]
        %v2128 = vld [vmem:[%s2113 + $0x38] sm:$0xf]
        %v2129 = vld [vmem:[%s2113 + $0x3c] sm:$0xf]
        %v2146 = vunpack.c.l.b16 %v2114
        %v2147 = vunpack.c.l.b16 %v2115
        %v2148 = vunpack.c.l.b16 %v2116
        %v2149 = vunpack.c.l.b16 %v2117
        %v2150 = vunpack.c.l.b16 %v2118
        %v2151 = vunpack.c.l.b16 %v2119
        %v2152 = vunpack.c.l.b16 %v2120
        %v2153 = vunpack.c.l.b16 %v2121
        %v2154 = vunpack.c.l.b16 %v2122
        %v2155 = vunpack.c.l.b16 %v2123
        %v2156 = vunpack.c.l.b16 %v2124
        %v2157 = vunpack.c.l.b16 %v2125
        %v2158 = vunpack.c.l.b16 %v2126
        %v2159 = vunpack.c.l.b16 %v2127
        %v2160 = vunpack.c.l.b16 %v2128
        %v2161 = vunpack.c.l.b16 %v2129
        %v2162 = vpack.c.b16 %v2147, %v2146
        %v2163 = vpack.c.b16 %v2149, %v2148
        %v2164 = vpack.c.b16 %v2151, %v2150
        %v2165 = vpack.c.b16 %v2153, %v2152
        %v2166 = vpack.c.b16 %v2155, %v2154
        %v2167 = vpack.c.b16 %v2157, %v2156
        %v2168 = vpack.c.b16 %v2159, %v2158
        %v2169 = vpack.c.b16 %v2161, %v2160
        %2178 = vmatpush.bf16.msra.mxu0 %v2169
        %2179 = vmatpush.bf16.msra.mxu0 %v2168
        %2180 = vmatpush.bf16.msra.mxu0 %v2167
        %2181 = vmatpush.bf16.msra.mxu0 %v2166
        %2182 = vmatpush.bf16.msra.mxu0 %v2165
        %2183 = vmatpush.bf16.msra.mxu0 %v2164
        %2184 = vmatpush.bf16.msra.mxu0 %v2163
        %2185 = vmatpush.bf16.msra.mxu0 %v2162
        %2186 = vmatmul.bf16.gmra.mxu0 %v1323
        %v2187 = vpop.f32.mrf.mxu0
        %v2188 = vadd.f32 0.0, %v2187
        %v2189 = vpop.f32.mrf.mxu0
        %v2190 = vadd.f32 0.0, %v2189
        %2191 = vmatmul.bf16.gmra.mxu0 %v1324
        %v2192 = vpop.f32.mrf.mxu0
        %v2193 = vadd.f32 0.0, %v2192
        %v2194 = vpop.f32.mrf.mxu0
        %v2195 = vadd.f32 0.0, %v2194
        %2196 = vmatmul.bf16.gmra.mxu0 %v1325
        %v2197 = vpop.f32.mrf.mxu0
        %v2198 = vadd.f32 0.0, %v2197
        %v2199 = vpop.f32.mrf.mxu0
        %v2200 = vadd.f32 0.0, %v2199
        %2201 = vmatmul.bf16.gmra.mxu0 %v1326
        %v2202 = vpop.f32.mrf.mxu0
        %v2203 = vadd.f32 0.0, %v2202
        %v2204 = vpop.f32.mrf.mxu0
        %v2205 = vadd.f32 0.0, %v2204
        %2206 = vmatmul.bf16.gmra.mxu0 %v1327
        %v2207 = vpop.f32.mrf.mxu0
        %v2208 = vadd.f32 0.0, %v2207
        %v2209 = vpop.f32.mrf.mxu0
        %v2210 = vadd.f32 0.0, %v2209
        %2211 = vmatmul.bf16.gmra.mxu0 %v1328
        %v2212 = vpop.f32.mrf.mxu0
        %v2213 = vadd.f32 0.0, %v2212
        %v2214 = vpop.f32.mrf.mxu0
        %v2215 = vadd.f32 0.0, %v2214
        %2216 = vmatmul.bf16.gmra.mxu0 %v1329
        %v2217 = vpop.f32.mrf.mxu0
        %v2218 = vadd.f32 0.0, %v2217
        %v2219 = vpop.f32.mrf.mxu0
        %v2220 = vadd.f32 0.0, %v2219
        %2221 = vmatmul.bf16.gmra.mxu0 %v1330
        %v2222 = vpop.f32.mrf.mxu0
        %v2223 = vadd.f32 0.0, %v2222
        %v2224 = vpop.f32.mrf.mxu0
        %v2225 = vadd.f32 0.0, %v2224
        %2226 = vmatmul.bf16.gmra.mxu0 %v1331
        %v2227 = vpop.f32.mrf.mxu0
        %v2228 = vadd.f32 0.0, %v2227
        %v2229 = vpop.f32.mrf.mxu0
        %v2230 = vadd.f32 0.0, %v2229
        %2231 = vmatmul.bf16.gmra.mxu0 %v1332
        %v2232 = vpop.f32.mrf.mxu0
        %v2233 = vadd.f32 0.0, %v2232
        %v2234 = vpop.f32.mrf.mxu0
        %v2235 = vadd.f32 0.0, %v2234
        %2236 = vmatmul.bf16.gmra.mxu0 %v1333
        %v2237 = vpop.f32.mrf.mxu0
        %v2238 = vadd.f32 0.0, %v2237
        %v2239 = vpop.f32.mrf.mxu0
        %v2240 = vadd.f32 0.0, %v2239
        %2241 = vmatmul.bf16.gmra.mxu0 %v1334
        %v2242 = vpop.f32.mrf.mxu0
        %v2243 = vadd.f32 0.0, %v2242
        %v2244 = vpop.f32.mrf.mxu0
        %v2245 = vadd.f32 0.0, %v2244
        %2246 = vmatmul.bf16.gmra.mxu0 %v1335
        %v2247 = vpop.f32.mrf.mxu0
        %v2248 = vadd.f32 0.0, %v2247
        %v2249 = vpop.f32.mrf.mxu0
        %v2250 = vadd.f32 0.0, %v2249
        %2251 = vmatmul.bf16.gmra.mxu0 %v1336
        %v2252 = vpop.f32.mrf.mxu0
        %v2253 = vadd.f32 0.0, %v2252
        %v2254 = vpop.f32.mrf.mxu0
        %v2255 = vadd.f32 0.0, %v2254
        %2256 = vmatmul.bf16.gmra.mxu0 %v1337
        %v2257 = vpop.f32.mrf.mxu0
        %v2258 = vadd.f32 0.0, %v2257
        %v2259 = vpop.f32.mrf.mxu0
        %v2260 = vadd.f32 0.0, %v2259
        %2261 = vmatmul.bf16.gmra.mxu0 %v2112
        %v2262 = vpop.f32.mrf.mxu0
        %v2263 = vadd.f32 0.0, %v2262
        %v2264 = vpop.f32.mrf.mxu0
        %v2265 = vadd.f32 0.0, %v2264
        %2266 = vdwg.mxu0
        %v2267 = vadd.f32 %v2080, %v2188
        %v2268 = vadd.f32 %v2081, %v2190
        %v2269 = vadd.f32 %v2082, %v2193
        %v2270 = vadd.f32 %v2083, %v2195
        %v2271 = vadd.f32 %v2084, %v2198
        %v2272 = vadd.f32 %v2085, %v2200
        %v2273 = vadd.f32 %v2086, %v2203
        %v2274 = vadd.f32 %v2087, %v2205
        %v2275 = vadd.f32 %v2088, %v2208
        %v2276 = vadd.f32 %v2089, %v2210
        %v2277 = vadd.f32 %v2090, %v2213
        %v2278 = vadd.f32 %v2091, %v2215
        %v2279 = vadd.f32 %v2092, %v2218
        %v2280 = vadd.f32 %v2093, %v2220
        %v2281 = vadd.f32 %v2094, %v2223
        %v2282 = vadd.f32 %v2095, %v2225
        %v2283 = vadd.f32 %v2096, %v2228
        %v2284 = vadd.f32 %v2097, %v2230
        %v2285 = vadd.f32 %v2098, %v2233
        %v2286 = vadd.f32 %v2099, %v2235
        %v2287 = vadd.f32 %v2100, %v2238
        %v2288 = vadd.f32 %v2101, %v2240
        %v2289 = vadd.f32 %v2102, %v2243
        %v2290 = vadd.f32 %v2103, %v2245
        %v2291 = vadd.f32 %v2104, %v2248
        %v2292 = vadd.f32 %v2105, %v2250
        %v2293 = vadd.f32 %v2106, %v2253
        %v2294 = vadd.f32 %v2107, %v2255
        %v2295 = vadd.f32 %v2108, %v2258
        %v2296 = vadd.f32 %v2109, %v2260
        %v2297 = vadd.f32 %v2110, %v2263
        %v2298 = vadd.f32 %v2111, %v2265
        %v2301 = vrot.slane %v1305, 1
        %v2302 = vrot.slane %v1241, 1
        %v2303 = vsel %vm1385, %v2301, %v2302
        %v2304 = vrot.slane %v1321, 1
        %v2305 = vsel %vm1385, %v2302, %v2304
        %v2308 = vpack.c.bf16 %v2305, %v2303
        %s2309 = scalar_lea.vmem [#allocation5], 256
        %v2310 = vld [vmem:[%s2309] sm:$0xf]
        %v2311 = vld [vmem:[%s2309 + $0x4] sm:$0xf]
        %v2312 = vld [vmem:[%s2309 + $0x8] sm:$0xf]
        %v2313 = vld [vmem:[%s2309 + $0xc] sm:$0xf]
        %v2314 = vld [vmem:[%s2309 + $0x10] sm:$0xf]
        %v2315 = vld [vmem:[%s2309 + $0x14] sm:$0xf]
        %v2316 = vld [vmem:[%s2309 + $0x18] sm:$0xf]
        %v2317 = vld [vmem:[%s2309 + $0x1c] sm:$0xf]
        %v2318 = vld [vmem:[%s2309 + $0x20] sm:$0xf]
        %v2319 = vld [vmem:[%s2309 + $0x24] sm:$0xf]
        %v2320 = vld [vmem:[%s2309 + $0x28] sm:$0xf]
        %v2321 = vld [vmem:[%s2309 + $0x2c] sm:$0xf]
        %v2322 = vld [vmem:[%s2309 + $0x30] sm:$0xf]
        %v2323 = vld [vmem:[%s2309 + $0x34] sm:$0xf]
        %v2324 = vld [vmem:[%s2309 + $0x38] sm:$0xf]
        %v2325 = vld [vmem:[%s2309 + $0x3c] sm:$0xf]
        %v2342 = vunpack.c.l.b16 %v2310
        %v2343 = vunpack.c.l.b16 %v2311
        %v2344 = vunpack.c.l.b16 %v2312
        %v2345 = vunpack.c.l.b16 %v2313
        %v2346 = vunpack.c.l.b16 %v2314
        %v2347 = vunpack.c.l.b16 %v2315
        %v2348 = vunpack.c.l.b16 %v2316
        %v2349 = vunpack.c.l.b16 %v2317
        %v2350 = vunpack.c.l.b16 %v2318
        %v2351 = vunpack.c.l.b16 %v2319
        %v2352 = vunpack.c.l.b16 %v2320
        %v2353 = vunpack.c.l.b16 %v2321
        %v2354 = vunpack.c.l.b16 %v2322
        %v2355 = vunpack.c.l.b16 %v2323
        %v2356 = vunpack.c.l.b16 %v2324
        %v2357 = vunpack.c.l.b16 %v2325
        %v2358 = vpack.c.b16 %v2343, %v2342
        %v2359 = vpack.c.b16 %v2345, %v2344
        %v2360 = vpack.c.b16 %v2347, %v2346
        %v2361 = vpack.c.b16 %v2349, %v2348
        %v2362 = vpack.c.b16 %v2351, %v2350
        %v2363 = vpack.c.b16 %v2353, %v2352
        %v2364 = vpack.c.b16 %v2355, %v2354
        %v2365 = vpack.c.b16 %v2357, %v2356
        %2374 = vmatpush.bf16.msra.mxu0 %v2365
        %2375 = vmatpush.bf16.msra.mxu0 %v2364
        %2376 = vmatpush.bf16.msra.mxu0 %v2363
        %2377 = vmatpush.bf16.msra.mxu0 %v2362
        %2378 = vmatpush.bf16.msra.mxu0 %v2361
        %2379 = vmatpush.bf16.msra.mxu0 %v2360
        %2380 = vmatpush.bf16.msra.mxu0 %v2359
        %2381 = vmatpush.bf16.msra.mxu0 %v2358
        %2382 = vmatmul.bf16.gmra.mxu0 %v1495
        %v2383 = vpop.f32.mrf.mxu0
        %v2384 = vadd.f32 0.0, %v2383
        %v2385 = vpop.f32.mrf.mxu0
        %v2386 = vadd.f32 0.0, %v2385
        %2387 = vmatmul.bf16.gmra.mxu0 %v1496
        %v2388 = vpop.f32.mrf.mxu0
        %v2389 = vadd.f32 0.0, %v2388
        %v2390 = vpop.f32.mrf.mxu0
        %v2391 = vadd.f32 0.0, %v2390
        %2392 = vmatmul.bf16.gmra.mxu0 %v1497
        %v2393 = vpop.f32.mrf.mxu0
        %v2394 = vadd.f32 0.0, %v2393
        %v2395 = vpop.f32.mrf.mxu0
        %v2396 = vadd.f32 0.0, %v2395
        %2397 = vmatmul.bf16.gmra.mxu0 %v1498
        %v2398 = vpop.f32.mrf.mxu0
        %v2399 = vadd.f32 0.0, %v2398
        %v2400 = vpop.f32.mrf.mxu0
        %v2401 = vadd.f32 0.0, %v2400
        %2402 = vmatmul.bf16.gmra.mxu0 %v1499
        %v2403 = vpop.f32.mrf.mxu0
        %v2404 = vadd.f32 0.0, %v2403
        %v2405 = vpop.f32.mrf.mxu0
        %v2406 = vadd.f32 0.0, %v2405
        %2407 = vmatmul.bf16.gmra.mxu0 %v1500
        %v2408 = vpop.f32.mrf.mxu0
        %v2409 = vadd.f32 0.0, %v2408
        %v2410 = vpop.f32.mrf.mxu0
        %v2411 = vadd.f32 0.0, %v2410
        %2412 = vmatmul.bf16.gmra.mxu0 %v1501
        %v2413 = vpop.f32.mrf.mxu0
        %v2414 = vadd.f32 0.0, %v2413
        %v2415 = vpop.f32.mrf.mxu0
        %v2416 = vadd.f32 0.0, %v2415
        %2417 = vmatmul.bf16.gmra.mxu0 %v1502
        %v2418 = vpop.f32.mrf.mxu0
        %v2419 = vadd.f32 0.0, %v2418
        %v2420 = vpop.f32.mrf.mxu0
        %v2421 = vadd.f32 0.0, %v2420
        %2422 = vmatmul.bf16.gmra.mxu0 %v1503
        %v2423 = vpop.f32.mrf.mxu0
        %v2424 = vadd.f32 0.0, %v2423
        %v2425 = vpop.f32.mrf.mxu0
        %v2426 = vadd.f32 0.0, %v2425
        %2427 = vmatmul.bf16.gmra.mxu0 %v1504
        %v2428 = vpop.f32.mrf.mxu0
        %v2429 = vadd.f32 0.0, %v2428
        %v2430 = vpop.f32.mrf.mxu0
        %v2431 = vadd.f32 0.0, %v2430
        %2432 = vmatmul.bf16.gmra.mxu0 %v1505
        %v2433 = vpop.f32.mrf.mxu0
        %v2434 = vadd.f32 0.0, %v2433
        %v2435 = vpop.f32.mrf.mxu0
        %v2436 = vadd.f32 0.0, %v2435
        %2437 = vmatmul.bf16.gmra.mxu0 %v1506
        %v2438 = vpop.f32.mrf.mxu0
        %v2439 = vadd.f32 0.0, %v2438
        %v2440 = vpop.f32.mrf.mxu0
        %v2441 = vadd.f32 0.0, %v2440
        %2442 = vmatmul.bf16.gmra.mxu0 %v1507
        %v2443 = vpop.f32.mrf.mxu0
        %v2444 = vadd.f32 0.0, %v2443
        %v2445 = vpop.f32.mrf.mxu0
        %v2446 = vadd.f32 0.0, %v2445
        %2447 = vmatmul.bf16.gmra.mxu0 %v1508
        %v2448 = vpop.f32.mrf.mxu0
        %v2449 = vadd.f32 0.0, %v2448
        %v2450 = vpop.f32.mrf.mxu0
        %v2451 = vadd.f32 0.0, %v2450
        %2452 = vmatmul.bf16.gmra.mxu0 %v1509
        %v2453 = vpop.f32.mrf.mxu0
        %v2454 = vadd.f32 0.0, %v2453
        %v2455 = vpop.f32.mrf.mxu0
        %v2456 = vadd.f32 0.0, %v2455
        %2457 = vmatmul.bf16.gmra.mxu0 %v2308
        %v2458 = vpop.f32.mrf.mxu0
        %v2459 = vadd.f32 0.0, %v2458
        %v2460 = vpop.f32.mrf.mxu0
        %v2461 = vadd.f32 0.0, %v2460
        %2462 = vdwg.mxu0
        %v2463 = vadd.f32 %v2267, %v2384
        %v2464 = vadd.f32 %v2268, %v2386
        %v2465 = vadd.f32 %v2269, %v2389
        %v2466 = vadd.f32 %v2270, %v2391
        %v2467 = vadd.f32 %v2271, %v2394
        %v2468 = vadd.f32 %v2272, %v2396
        %v2469 = vadd.f32 %v2273, %v2399
        %v2470 = vadd.f32 %v2274, %v2401
        %v2471 = vadd.f32 %v2275, %v2404
        %v2472 = vadd.f32 %v2276, %v2406
        %v2473 = vadd.f32 %v2277, %v2409
        %v2474 = vadd.f32 %v2278, %v2411
        %v2475 = vadd.f32 %v2279, %v2414
        %v2476 = vadd.f32 %v2280, %v2416
        %v2477 = vadd.f32 %v2281, %v2419
        %v2478 = vadd.f32 %v2282, %v2421
        %v2479 = vadd.f32 %v2283, %v2424
        %v2480 = vadd.f32 %v2284, %v2426
        %v2481 = vadd.f32 %v2285, %v2429
        %v2482 = vadd.f32 %v2286, %v2431
        %v2483 = vadd.f32 %v2287, %v2434
        %v2484 = vadd.f32 %v2288, %v2436
        %v2485 = vadd.f32 %v2289, %v2439
        %v2486 = vadd.f32 %v2290, %v2441
        %v2487 = vadd.f32 %v2291, %v2444
        %v2488 = vadd.f32 %v2292, %v2446
        %v2489 = vadd.f32 %v2293, %v2449
        %v2490 = vadd.f32 %v2294, %v2451
        %v2491 = vadd.f32 %v2295, %v2454
        %v2492 = vadd.f32 %v2296, %v2456
        %v2493 = vadd.f32 %v2297, %v2459
        %v2494 = vadd.f32 %v2298, %v2461
        %v2495 = vrot.slane %v1305, 2
        %v2496 = vrot.slane %v1241, 2
        %v2497 = vsel %vm1801, %v2495, %v2496
        %v2498 = vrot.slane %v1321, 2
        %v2499 = vsel %vm1801, %v2496, %v2498
        %v2502 = vpack.c.bf16 %v2499, %v2497
        %s2503 = scalar_lea.vmem [#allocation5], 320
        %v2504 = vld [vmem:[%s2503] sm:$0xf]
        %v2505 = vld [vmem:[%s2503 + $0x4] sm:$0xf]
        %v2506 = vld [vmem:[%s2503 + $0x8] sm:$0xf]
        %v2507 = vld [vmem:[%s2503 + $0xc] sm:$0xf]
        %v2508 = vld [vmem:[%s2503 + $0x10] sm:$0xf]
        %v2509 = vld [vmem:[%s2503 + $0x14] sm:$0xf]
        %v2510 = vld [vmem:[%s2503 + $0x18] sm:$0xf]
        %v2511 = vld [vmem:[%s2503 + $0x1c] sm:$0xf]
        %v2512 = vld [vmem:[%s2503 + $0x20] sm:$0xf]
        %v2513 = vld [vmem:[%s2503 + $0x24] sm:$0xf]
        %v2514 = vld [vmem:[%s2503 + $0x28] sm:$0xf]
        %v2515 = vld [vmem:[%s2503 + $0x2c] sm:$0xf]
        %v2516 = vld [vmem:[%s2503 + $0x30] sm:$0xf]
        %v2517 = vld [vmem:[%s2503 + $0x34] sm:$0xf]
        %v2518 = vld [vmem:[%s2503 + $0x38] sm:$0xf]
        %v2519 = vld [vmem:[%s2503 + $0x3c] sm:$0xf]
        %v2536 = vunpack.c.l.b16 %v2504
        %v2537 = vunpack.c.l.b16 %v2505
        %v2538 = vunpack.c.l.b16 %v2506
        %v2539 = vunpack.c.l.b16 %v2507
        %v2540 = vunpack.c.l.b16 %v2508
        %v2541 = vunpack.c.l.b16 %v2509
        %v2542 = vunpack.c.l.b16 %v2510
        %v2543 = vunpack.c.l.b16 %v2511
        %v2544 = vunpack.c.l.b16 %v2512
        %v2545 = vunpack.c.l.b16 %v2513
        %v2546 = vunpack.c.l.b16 %v2514
        %v2547 = vunpack.c.l.b16 %v2515
        %v2548 = vunpack.c.l.b16 %v2516
        %v2549 = vunpack.c.l.b16 %v2517
        %v2550 = vunpack.c.l.b16 %v2518
        %v2551 = vunpack.c.l.b16 %v2519
        %v2552 = vpack.c.b16 %v2537, %v2536
        %v2553 = vpack.c.b16 %v2539, %v2538
        %v2554 = vpack.c.b16 %v2541, %v2540
        %v2555 = vpack.c.b16 %v2543, %v2542
        %v2556 = vpack.c.b16 %v2545, %v2544
        %v2557 = vpack.c.b16 %v2547, %v2546
        %v2558 = vpack.c.b16 %v2549, %v2548
        %v2559 = vpack.c.b16 %v2551, %v2550
        %2568 = vmatpush.bf16.msra.mxu0 %v2559
        %2569 = vmatpush.bf16.msra.mxu0 %v2558
        %2570 = vmatpush.bf16.msra.mxu0 %v2557
        %2571 = vmatpush.bf16.msra.mxu0 %v2556
        %2572 = vmatpush.bf16.msra.mxu0 %v2555
        %2573 = vmatpush.bf16.msra.mxu0 %v2554
        %2574 = vmatpush.bf16.msra.mxu0 %v2553
        %2575 = vmatpush.bf16.msra.mxu0 %v2552
        %2576 = vmatmul.bf16.gmra.mxu0 %v1911
        %v2577 = vpop.f32.mrf.mxu0
        %v2578 = vadd.f32 0.0, %v2577
        %v2579 = vpop.f32.mrf.mxu0
        %v2580 = vadd.f32 0.0, %v2579
        %2581 = vmatmul.bf16.gmra.mxu0 %v1912
        %v2582 = vpop.f32.mrf.mxu0
        %v2583 = vadd.f32 0.0, %v2582
        %v2584 = vpop.f32.mrf.mxu0
        %v2585 = vadd.f32 0.0, %v2584
        %2586 = vmatmul.bf16.gmra.mxu0 %v1913
        %v2587 = vpop.f32.mrf.mxu0
        %v2588 = vadd.f32 0.0, %v2587
        %v2589 = vpop.f32.mrf.mxu0
        %v2590 = vadd.f32 0.0, %v2589
        %2591 = vmatmul.bf16.gmra.mxu0 %v1914
        %v2592 = vpop.f32.mrf.mxu0
        %v2593 = vadd.f32 0.0, %v2592
        %v2594 = vpop.f32.mrf.mxu0
        %v2595 = vadd.f32 0.0, %v2594
        %2596 = vmatmul.bf16.gmra.mxu0 %v1915
        %v2597 = vpop.f32.mrf.mxu0
        %v2598 = vadd.f32 0.0, %v2597
        %v2599 = vpop.f32.mrf.mxu0
        %v2600 = vadd.f32 0.0, %v2599
        %2601 = vmatmul.bf16.gmra.mxu0 %v1916
        %v2602 = vpop.f32.mrf.mxu0
        %v2603 = vadd.f32 0.0, %v2602
        %v2604 = vpop.f32.mrf.mxu0
        %v2605 = vadd.f32 0.0, %v2604
        %2606 = vmatmul.bf16.gmra.mxu0 %v1917
        %v2607 = vpop.f32.mrf.mxu0
        %v2608 = vadd.f32 0.0, %v2607
        %v2609 = vpop.f32.mrf.mxu0
        %v2610 = vadd.f32 0.0, %v2609
        %2611 = vmatmul.bf16.gmra.mxu0 %v1918
        %v2612 = vpop.f32.mrf.mxu0
        %v2613 = vadd.f32 0.0, %v2612
        %v2614 = vpop.f32.mrf.mxu0
        %v2615 = vadd.f32 0.0, %v2614
        %2616 = vmatmul.bf16.gmra.mxu0 %v1919
        %v2617 = vpop.f32.mrf.mxu0
        %v2618 = vadd.f32 0.0, %v2617
        %v2619 = vpop.f32.mrf.mxu0
        %v2620 = vadd.f32 0.0, %v2619
        %2621 = vmatmul.bf16.gmra.mxu0 %v1920
        %v2622 = vpop.f32.mrf.mxu0
        %v2623 = vadd.f32 0.0, %v2622
        %v2624 = vpop.f32.mrf.mxu0
        %v2625 = vadd.f32 0.0, %v2624
        %2626 = vmatmul.bf16.gmra.mxu0 %v1921
        %v2627 = vpop.f32.mrf.mxu0
        %v2628 = vadd.f32 0.0, %v2627
        %v2629 = vpop.f32.mrf.mxu0
        %v2630 = vadd.f32 0.0, %v2629
        %2631 = vmatmul.bf16.gmra.mxu0 %v1922
        %v2632 = vpop.f32.mrf.mxu0
        %v2633 = vadd.f32 0.0, %v2632
        %v2634 = vpop.f32.mrf.mxu0
        %v2635 = vadd.f32 0.0, %v2634
        %2636 = vmatmul.bf16.gmra.mxu0 %v1923
        %v2637 = vpop.f32.mrf.mxu0
        %v2638 = vadd.f32 0.0, %v2637
        %v2639 = vpop.f32.mrf.mxu0
        %v2640 = vadd.f32 0.0, %v2639
        %2641 = vmatmul.bf16.gmra.mxu0 %v1924
        %v2642 = vpop.f32.mrf.mxu0
        %v2643 = vadd.f32 0.0, %v2642
        %v2644 = vpop.f32.mrf.mxu0
        %v2645 = vadd.f32 0.0, %v2644
        %2646 = vmatmul.bf16.gmra.mxu0 %v1925
        %v2647 = vpop.f32.mrf.mxu0
        %v2648 = vadd.f32 0.0, %v2647
        %v2649 = vpop.f32.mrf.mxu0
        %v2650 = vadd.f32 0.0, %v2649
        %2651 = vmatmul.bf16.gmra.mxu0 %v2502
        %v2652 = vpop.f32.mrf.mxu0
        %v2653 = vadd.f32 0.0, %v2652
        %v2654 = vpop.f32.mrf.mxu0
        %v2655 = vadd.f32 0.0, %v2654
        %2656 = vdwg.mxu0
        %v2657 = vadd.f32 %v2463, %v2578
        %v2658 = vadd.f32 %v2464, %v2580
        %v2659 = vadd.f32 %v2465, %v2583
        %v2660 = vadd.f32 %v2466, %v2585
        %v2661 = vadd.f32 %v2467, %v2588
        %v2662 = vadd.f32 %v2468, %v2590
        %v2663 = vadd.f32 %v2469, %v2593
        %v2664 = vadd.f32 %v2470, %v2595
        %v2665 = vadd.f32 %v2471, %v2598
        %v2666 = vadd.f32 %v2472, %v2600
        %v2667 = vadd.f32 %v2473, %v2603
        %v2668 = vadd.f32 %v2474, %v2605
        %v2669 = vadd.f32 %v2475, %v2608
        %v2670 = vadd.f32 %v2476, %v2610
        %v2671 = vadd.f32 %v2477, %v2613
        %v2672 = vadd.f32 %v2478, %v2615
        %v2673 = vadd.f32 %v2479, %v2618
        %v2674 = vadd.f32 %v2480, %v2620
        %v2675 = vadd.f32 %v2481, %v2623
        %v2676 = vadd.f32 %v2482, %v2625
        %v2677 = vadd.f32 %v2483, %v2628
        %v2678 = vadd.f32 %v2484, %v2630
        %v2679 = vadd.f32 %v2485, %v2633
        %v2680 = vadd.f32 %v2486, %v2635
        %v2681 = vadd.f32 %v2487, %v2638
        %v2682 = vadd.f32 %v2488, %v2640
        %v2683 = vadd.f32 %v2489, %v2643
        %v2684 = vadd.f32 %v2490, %v2645
        %v2685 = vadd.f32 %v2491, %v2648
        %v2686 = vadd.f32 %v2492, %v2650
        %v2687 = vadd.f32 %v2493, %v2653
        %v2688 = vadd.f32 %v2494, %v2655
        %s2689 = scalar_lea.vmem [#allocation5], 384
        %v2690 = vld [vmem:[%s2689] sm:$0xf]
        %v2691 = vld [vmem:[%s2689 + $0x4] sm:$0xf]
        %v2692 = vld [vmem:[%s2689 + $0x8] sm:$0xf]
        %v2693 = vld [vmem:[%s2689 + $0xc] sm:$0xf]
        %v2694 = vld [vmem:[%s2689 + $0x10] sm:$0xf]
        %v2695 = vld [vmem:[%s2689 + $0x14] sm:$0xf]
        %v2696 = vld [vmem:[%s2689 + $0x18] sm:$0xf]
        %v2697 = vld [vmem:[%s2689 + $0x1c] sm:$0xf]
        %v2698 = vld [vmem:[%s2689 + $0x20] sm:$0xf]
        %v2699 = vld [vmem:[%s2689 + $0x24] sm:$0xf]
        %v2700 = vld [vmem:[%s2689 + $0x28] sm:$0xf]
        %v2701 = vld [vmem:[%s2689 + $0x2c] sm:$0xf]
        %v2702 = vld [vmem:[%s2689 + $0x30] sm:$0xf]
        %v2703 = vld [vmem:[%s2689 + $0x34] sm:$0xf]
        %v2704 = vld [vmem:[%s2689 + $0x38] sm:$0xf]
        %v2705 = vld [vmem:[%s2689 + $0x3c] sm:$0xf]
        %v2722 = vunpack.c.l.b16 %v2690
        %v2723 = vunpack.c.l.b16 %v2691
        %v2724 = vunpack.c.l.b16 %v2692
        %v2725 = vunpack.c.l.b16 %v2693
        %v2726 = vunpack.c.l.b16 %v2694
        %v2727 = vunpack.c.l.b16 %v2695
        %v2728 = vunpack.c.l.b16 %v2696
        %v2729 = vunpack.c.l.b16 %v2697
        %v2730 = vunpack.c.l.b16 %v2698
        %v2731 = vunpack.c.l.b16 %v2699
        %v2732 = vunpack.c.l.b16 %v2700
        %v2733 = vunpack.c.l.b16 %v2701
        %v2734 = vunpack.c.l.b16 %v2702
        %v2735 = vunpack.c.l.b16 %v2703
        %v2736 = vunpack.c.l.b16 %v2704
        %v2737 = vunpack.c.l.b16 %v2705
        %v2738 = vpack.c.b16 %v2723, %v2722
        %v2739 = vpack.c.b16 %v2725, %v2724
        %v2740 = vpack.c.b16 %v2727, %v2726
        %v2741 = vpack.c.b16 %v2729, %v2728
        %v2742 = vpack.c.b16 %v2731, %v2730
        %v2743 = vpack.c.b16 %v2733, %v2732
        %v2744 = vpack.c.b16 %v2735, %v2734
        %v2745 = vpack.c.b16 %v2737, %v2736
        %2754 = vmatpush.bf16.msra.mxu0 %v2745
        %2755 = vmatpush.bf16.msra.mxu0 %v2744
        %2756 = vmatpush.bf16.msra.mxu0 %v2743
        %2757 = vmatpush.bf16.msra.mxu0 %v2742
        %2758 = vmatpush.bf16.msra.mxu0 %v2741
        %2759 = vmatpush.bf16.msra.mxu0 %v2740
        %2760 = vmatpush.bf16.msra.mxu0 %v2739
        %2761 = vmatpush.bf16.msra.mxu0 %v2738
        %2762 = vmatmul.bf16.gmra.mxu0 %v1324
        %v2763 = vpop.f32.mrf.mxu0
        %v2764 = vadd.f32 0.0, %v2763
        %v2765 = vpop.f32.mrf.mxu0
        %v2766 = vadd.f32 0.0, %v2765
        %2767 = vmatmul.bf16.gmra.mxu0 %v1325
        %v2768 = vpop.f32.mrf.mxu0
        %v2769 = vadd.f32 0.0, %v2768
        %v2770 = vpop.f32.mrf.mxu0
        %v2771 = vadd.f32 0.0, %v2770
        %2772 = vmatmul.bf16.gmra.mxu0 %v1326
        %v2773 = vpop.f32.mrf.mxu0
        %v2774 = vadd.f32 0.0, %v2773
        %v2775 = vpop.f32.mrf.mxu0
        %v2776 = vadd.f32 0.0, %v2775
        %2777 = vmatmul.bf16.gmra.mxu0 %v1327
        %v2778 = vpop.f32.mrf.mxu0
        %v2779 = vadd.f32 0.0, %v2778
        %v2780 = vpop.f32.mrf.mxu0
        %v2781 = vadd.f32 0.0, %v2780
        %2782 = vmatmul.bf16.gmra.mxu0 %v1328
        %v2783 = vpop.f32.mrf.mxu0
        %v2784 = vadd.f32 0.0, %v2783
        %v2785 = vpop.f32.mrf.mxu0
        %v2786 = vadd.f32 0.0, %v2785
        %2787 = vmatmul.bf16.gmra.mxu0 %v1329
        %v2788 = vpop.f32.mrf.mxu0
        %v2789 = vadd.f32 0.0, %v2788
        %v2790 = vpop.f32.mrf.mxu0
        %v2791 = vadd.f32 0.0, %v2790
        %2792 = vmatmul.bf16.gmra.mxu0 %v1330
        %v2793 = vpop.f32.mrf.mxu0
        %v2794 = vadd.f32 0.0, %v2793
        %v2795 = vpop.f32.mrf.mxu0
        %v2796 = vadd.f32 0.0, %v2795
        %2797 = vmatmul.bf16.gmra.mxu0 %v1331
        %v2798 = vpop.f32.mrf.mxu0
        %v2799 = vadd.f32 0.0, %v2798
        %v2800 = vpop.f32.mrf.mxu0
        %v2801 = vadd.f32 0.0, %v2800
        %2802 = vmatmul.bf16.gmra.mxu0 %v1332
        %v2803 = vpop.f32.mrf.mxu0
        %v2804 = vadd.f32 0.0, %v2803
        %v2805 = vpop.f32.mrf.mxu0
        %v2806 = vadd.f32 0.0, %v2805
        %2807 = vmatmul.bf16.gmra.mxu0 %v1333
        %v2808 = vpop.f32.mrf.mxu0
        %v2809 = vadd.f32 0.0, %v2808
        %v2810 = vpop.f32.mrf.mxu0
        %v2811 = vadd.f32 0.0, %v2810
        %2812 = vmatmul.bf16.gmra.mxu0 %v1334
        %v2813 = vpop.f32.mrf.mxu0
        %v2814 = vadd.f32 0.0, %v2813
        %v2815 = vpop.f32.mrf.mxu0
        %v2816 = vadd.f32 0.0, %v2815
        %2817 = vmatmul.bf16.gmra.mxu0 %v1335
        %v2818 = vpop.f32.mrf.mxu0
        %v2819 = vadd.f32 0.0, %v2818
        %v2820 = vpop.f32.mrf.mxu0
        %v2821 = vadd.f32 0.0, %v2820
        %2822 = vmatmul.bf16.gmra.mxu0 %v1336
        %v2823 = vpop.f32.mrf.mxu0
        %v2824 = vadd.f32 0.0, %v2823
        %v2825 = vpop.f32.mrf.mxu0
        %v2826 = vadd.f32 0.0, %v2825
        %2827 = vmatmul.bf16.gmra.mxu0 %v1337
        %v2828 = vpop.f32.mrf.mxu0
        %v2829 = vadd.f32 0.0, %v2828
        %v2830 = vpop.f32.mrf.mxu0
        %v2831 = vadd.f32 0.0, %v2830
        %2832 = vmatmul.bf16.gmra.mxu0 %v2112
        %v2833 = vpop.f32.mrf.mxu0
        %v2834 = vadd.f32 0.0, %v2833
        %v2835 = vpop.f32.mrf.mxu0
        %v2836 = vadd.f32 0.0, %v2835
        %2837 = vmatmul.bf16.gmra.mxu0 %v1322
        %v2838 = vpop.f32.mrf.mxu0
        %v2839 = vadd.f32 0.0, %v2838
        %v2840 = vpop.f32.mrf.mxu0
        %v2841 = vadd.f32 0.0, %v2840
        %2842 = vdwg.mxu0
        %v2843 = vadd.f32 %v2657, %v2764
        %v2844 = vadd.f32 %v2658, %v2766
        %v2845 = vadd.f32 %v2659, %v2769
        %v2846 = vadd.f32 %v2660, %v2771
        %v2847 = vadd.f32 %v2661, %v2774
        %v2848 = vadd.f32 %v2662, %v2776
        %v2849 = vadd.f32 %v2663, %v2779
        %v2850 = vadd.f32 %v2664, %v2781
        %v2851 = vadd.f32 %v2665, %v2784
        %v2852 = vadd.f32 %v2666, %v2786
        %v2853 = vadd.f32 %v2667, %v2789
        %v2854 = vadd.f32 %v2668, %v2791
        %v2855 = vadd.f32 %v2669, %v2794
        %v2856 = vadd.f32 %v2670, %v2796
        %v2857 = vadd.f32 %v2671, %v2799
        %v2858 = vadd.f32 %v2672, %v2801
        %v2859 = vadd.f32 %v2673, %v2804
        %v2860 = vadd.f32 %v2674, %v2806
        %v2861 = vadd.f32 %v2675, %v2809
        %v2862 = vadd.f32 %v2676, %v2811
        %v2863 = vadd.f32 %v2677, %v2814
        %v2864 = vadd.f32 %v2678, %v2816
        %v2865 = vadd.f32 %v2679, %v2819
        %v2866 = vadd.f32 %v2680, %v2821
        %v2867 = vadd.f32 %v2681, %v2824
        %v2868 = vadd.f32 %v2682, %v2826
        %v2869 = vadd.f32 %v2683, %v2829
        %v2870 = vadd.f32 %v2684, %v2831
        %v2871 = vadd.f32 %v2685, %v2834
        %v2872 = vadd.f32 %v2686, %v2836
        %v2873 = vadd.f32 %v2687, %v2839
        %v2874 = vadd.f32 %v2688, %v2841
        %s2875 = scalar_lea.vmem [#allocation5], 448
        %v2876 = vld [vmem:[%s2875] sm:$0xf]
        %v2877 = vld [vmem:[%s2875 + $0x4] sm:$0xf]
        %v2878 = vld [vmem:[%s2875 + $0x8] sm:$0xf]
        %v2879 = vld [vmem:[%s2875 + $0xc] sm:$0xf]
        %v2880 = vld [vmem:[%s2875 + $0x10] sm:$0xf]
        %v2881 = vld [vmem:[%s2875 + $0x14] sm:$0xf]
        %v2882 = vld [vmem:[%s2875 + $0x18] sm:$0xf]
        %v2883 = vld [vmem:[%s2875 + $0x1c] sm:$0xf]
        %v2884 = vld [vmem:[%s2875 + $0x20] sm:$0xf]
        %v2885 = vld [vmem:[%s2875 + $0x24] sm:$0xf]
        %v2886 = vld [vmem:[%s2875 + $0x28] sm:$0xf]
        %v2887 = vld [vmem:[%s2875 + $0x2c] sm:$0xf]
        %v2888 = vld [vmem:[%s2875 + $0x30] sm:$0xf]
        %v2889 = vld [vmem:[%s2875 + $0x34] sm:$0xf]
        %v2890 = vld [vmem:[%s2875 + $0x38] sm:$0xf]
        %v2891 = vld [vmem:[%s2875 + $0x3c] sm:$0xf]
        %v2908 = vunpack.c.l.b16 %v2876
        %v2909 = vunpack.c.l.b16 %v2877
        %v2910 = vunpack.c.l.b16 %v2878
        %v2911 = vunpack.c.l.b16 %v2879
        %v2912 = vunpack.c.l.b16 %v2880
        %v2913 = vunpack.c.l.b16 %v2881
        %v2914 = vunpack.c.l.b16 %v2882
        %v2915 = vunpack.c.l.b16 %v2883
        %v2916 = vunpack.c.l.b16 %v2884
        %v2917 = vunpack.c.l.b16 %v2885
        %v2918 = vunpack.c.l.b16 %v2886
        %v2919 = vunpack.c.l.b16 %v2887
        %v2920 = vunpack.c.l.b16 %v2888
        %v2921 = vunpack.c.l.b16 %v2889
        %v2922 = vunpack.c.l.b16 %v2890
        %v2923 = vunpack.c.l.b16 %v2891
        %v2924 = vpack.c.b16 %v2909, %v2908
        %v2925 = vpack.c.b16 %v2911, %v2910
        %v2926 = vpack.c.b16 %v2913, %v2912
        %v2927 = vpack.c.b16 %v2915, %v2914
        %v2928 = vpack.c.b16 %v2917, %v2916
        %v2929 = vpack.c.b16 %v2919, %v2918
        %v2930 = vpack.c.b16 %v2921, %v2920
        %v2931 = vpack.c.b16 %v2923, %v2922
        %2940 = vmatpush.bf16.msra.mxu0 %v2931
        %2941 = vmatpush.bf16.msra.mxu0 %v2930
        %2942 = vmatpush.bf16.msra.mxu0 %v2929
        %2943 = vmatpush.bf16.msra.mxu0 %v2928
        %2944 = vmatpush.bf16.msra.mxu0 %v2927
        %2945 = vmatpush.bf16.msra.mxu0 %v2926
        %2946 = vmatpush.bf16.msra.mxu0 %v2925
        %2947 = vmatpush.bf16.msra.mxu0 %v2924
        %2948 = vmatmul.bf16.gmra.mxu0 %v1496
        %v2949 = vpop.f32.mrf.mxu0
        %v2950 = vadd.f32 0.0, %v2949
        %v2951 = vpop.f32.mrf.mxu0
        %v2952 = vadd.f32 0.0, %v2951
        %2953 = vmatmul.bf16.gmra.mxu0 %v1497
        %v2954 = vpop.f32.mrf.mxu0
        %v2955 = vadd.f32 0.0, %v2954
        %v2956 = vpop.f32.mrf.mxu0
        %v2957 = vadd.f32 0.0, %v2956
        %2958 = vmatmul.bf16.gmra.mxu0 %v1498
        %v2959 = vpop.f32.mrf.mxu0
        %v2960 = vadd.f32 0.0, %v2959
        %v2961 = vpop.f32.mrf.mxu0
        %v2962 = vadd.f32 0.0, %v2961
        %2963 = vmatmul.bf16.gmra.mxu0 %v1499
        %v2964 = vpop.f32.mrf.mxu0
        %v2965 = vadd.f32 0.0, %v2964
        %v2966 = vpop.f32.mrf.mxu0
        %v2967 = vadd.f32 0.0, %v2966
        %2968 = vmatmul.bf16.gmra.mxu0 %v1500
        %v2969 = vpop.f32.mrf.mxu0
        %v2970 = vadd.f32 0.0, %v2969
        %v2971 = vpop.f32.mrf.mxu0
        %v2972 = vadd.f32 0.0, %v2971
        %2973 = vmatmul.bf16.gmra.mxu0 %v1501
        %v2974 = vpop.f32.mrf.mxu0
        %v2975 = vadd.f32 0.0, %v2974
        %v2976 = vpop.f32.mrf.mxu0
        %v2977 = vadd.f32 0.0, %v2976
        %2978 = vmatmul.bf16.gmra.mxu0 %v1502
        %v2979 = vpop.f32.mrf.mxu0
        %v2980 = vadd.f32 0.0, %v2979
        %v2981 = vpop.f32.mrf.mxu0
        %v2982 = vadd.f32 0.0, %v2981
        %2983 = vmatmul.bf16.gmra.mxu0 %v1503
        %v2984 = vpop.f32.mrf.mxu0
        %v2985 = vadd.f32 0.0, %v2984
        %v2986 = vpop.f32.mrf.mxu0
        %v2987 = vadd.f32 0.0, %v2986
        %2988 = vmatmul.bf16.gmra.mxu0 %v1504
        %v2989 = vpop.f32.mrf.mxu0
        %v2990 = vadd.f32 0.0, %v2989
        %v2991 = vpop.f32.mrf.mxu0
        %v2992 = vadd.f32 0.0, %v2991
        %2993 = vmatmul.bf16.gmra.mxu0 %v1505
        %v2994 = vpop.f32.mrf.mxu0
        %v2995 = vadd.f32 0.0, %v2994
        %v2996 = vpop.f32.mrf.mxu0
        %v2997 = vadd.f32 0.0, %v2996
        %2998 = vmatmul.bf16.gmra.mxu0 %v1506
        %v2999 = vpop.f32.mrf.mxu0
        %v3000 = vadd.f32 0.0, %v2999
        %v3001 = vpop.f32.mrf.mxu0
        %v3002 = vadd.f32 0.0, %v3001
        %3003 = vmatmul.bf16.gmra.mxu0 %v1507
        %v3004 = vpop.f32.mrf.mxu0
        %v3005 = vadd.f32 0.0, %v3004
        %v3006 = vpop.f32.mrf.mxu0
        %v3007 = vadd.f32 0.0, %v3006
        %3008 = vmatmul.bf16.gmra.mxu0 %v1508
        %v3009 = vpop.f32.mrf.mxu0
        %v3010 = vadd.f32 0.0, %v3009
        %v3011 = vpop.f32.mrf.mxu0
        %v3012 = vadd.f32 0.0, %v3011
        %3013 = vmatmul.bf16.gmra.mxu0 %v1509
        %v3014 = vpop.f32.mrf.mxu0
        %v3015 = vadd.f32 0.0, %v3014
        %v3016 = vpop.f32.mrf.mxu0
        %v3017 = vadd.f32 0.0, %v3016
        %3018 = vmatmul.bf16.gmra.mxu0 %v2308
        %v3019 = vpop.f32.mrf.mxu0
        %v3020 = vadd.f32 0.0, %v3019
        %v3021 = vpop.f32.mrf.mxu0
        %v3022 = vadd.f32 0.0, %v3021
        %3023 = vmatmul.bf16.gmra.mxu0 %v1494
        %v3024 = vpop.f32.mrf.mxu0
        %v3025 = vadd.f32 0.0, %v3024
        %v3026 = vpop.f32.mrf.mxu0
        %v3027 = vadd.f32 0.0, %v3026
        %3028 = vdwg.mxu0
        %v3029 = vadd.f32 %v2843, %v2950
        %v3030 = vadd.f32 %v2844, %v2952
        %v3031 = vadd.f32 %v2845, %v2955
        %v3032 = vadd.f32 %v2846, %v2957
        %v3033 = vadd.f32 %v2847, %v2960
        %v3034 = vadd.f32 %v2848, %v2962
        %v3035 = vadd.f32 %v2849, %v2965
        %v3036 = vadd.f32 %v2850, %v2967
        %v3037 = vadd.f32 %v2851, %v2970
        %v3038 = vadd.f32 %v2852, %v2972
        %v3039 = vadd.f32 %v2853, %v2975
        %v3040 = vadd.f32 %v2854, %v2977
        %v3041 = vadd.f32 %v2855, %v2980
        %v3042 = vadd.f32 %v2856, %v2982
        %v3043 = vadd.f32 %v2857, %v2985
        %v3044 = vadd.f32 %v2858, %v2987
        %v3045 = vadd.f32 %v2859, %v2990
        %v3046 = vadd.f32 %v2860, %v2992
        %v3047 = vadd.f32 %v2861, %v2995
        %v3048 = vadd.f32 %v2862, %v2997
        %v3049 = vadd.f32 %v2863, %v3000
        %v3050 = vadd.f32 %v2864, %v3002
        %v3051 = vadd.f32 %v2865, %v3005
        %v3052 = vadd.f32 %v2866, %v3007
        %v3053 = vadd.f32 %v2867, %v3010
        %v3054 = vadd.f32 %v2868, %v3012
        %v3055 = vadd.f32 %v2869, %v3015
        %v3056 = vadd.f32 %v2870, %v3017
        %v3057 = vadd.f32 %v2871, %v3020
        %v3058 = vadd.f32 %v2872, %v3022
        %v3059 = vadd.f32 %v2873, %v3025
        %v3060 = vadd.f32 %v2874, %v3027
        %s3061 = scalar_lea.vmem [#allocation5], 512
        %v3062 = vld [vmem:[%s3061] sm:$0xf]
        %v3063 = vld [vmem:[%s3061 + $0x4] sm:$0xf]
        %v3064 = vld [vmem:[%s3061 + $0x8] sm:$0xf]
        %v3065 = vld [vmem:[%s3061 + $0xc] sm:$0xf]
        %v3066 = vld [vmem:[%s3061 + $0x10] sm:$0xf]
        %v3067 = vld [vmem:[%s3061 + $0x14] sm:$0xf]
        %v3068 = vld [vmem:[%s3061 + $0x18] sm:$0xf]
        %v3069 = vld [vmem:[%s3061 + $0x1c] sm:$0xf]
        %v3070 = vld [vmem:[%s3061 + $0x20] sm:$0xf]
        %v3071 = vld [vmem:[%s3061 + $0x24] sm:$0xf]
        %v3072 = vld [vmem:[%s3061 + $0x28] sm:$0xf]
        %v3073 = vld [vmem:[%s3061 + $0x2c] sm:$0xf]
        %v3074 = vld [vmem:[%s3061 + $0x30] sm:$0xf]
        %v3075 = vld [vmem:[%s3061 + $0x34] sm:$0xf]
        %v3076 = vld [vmem:[%s3061 + $0x38] sm:$0xf]
        %v3077 = vld [vmem:[%s3061 + $0x3c] sm:$0xf]
        %v3094 = vunpack.c.l.b16 %v3062
        %v3095 = vunpack.c.l.b16 %v3063
        %v3096 = vunpack.c.l.b16 %v3064
        %v3097 = vunpack.c.l.b16 %v3065
        %v3098 = vunpack.c.l.b16 %v3066
        %v3099 = vunpack.c.l.b16 %v3067
        %v3100 = vunpack.c.l.b16 %v3068
        %v3101 = vunpack.c.l.b16 %v3069
        %v3102 = vunpack.c.l.b16 %v3070
        %v3103 = vunpack.c.l.b16 %v3071
        %v3104 = vunpack.c.l.b16 %v3072
        %v3105 = vunpack.c.l.b16 %v3073
        %v3106 = vunpack.c.l.b16 %v3074
        %v3107 = vunpack.c.l.b16 %v3075
        %v3108 = vunpack.c.l.b16 %v3076
        %v3109 = vunpack.c.l.b16 %v3077
        %v3110 = vpack.c.b16 %v3095, %v3094
        %v3111 = vpack.c.b16 %v3097, %v3096
        %v3112 = vpack.c.b16 %v3099, %v3098
        %v3113 = vpack.c.b16 %v3101, %v3100
        %v3114 = vpack.c.b16 %v3103, %v3102
        %v3115 = vpack.c.b16 %v3105, %v3104
        %v3116 = vpack.c.b16 %v3107, %v3106
        %v3117 = vpack.c.b16 %v3109, %v3108
        %3126 = vmatpush.bf16.msra.mxu0 %v3117
        %3127 = vmatpush.bf16.msra.mxu0 %v3116
        %3128 = vmatpush.bf16.msra.mxu0 %v3115
        %3129 = vmatpush.bf16.msra.mxu0 %v3114
        %3130 = vmatpush.bf16.msra.mxu0 %v3113
        %3131 = vmatpush.bf16.msra.mxu0 %v3112
        %3132 = vmatpush.bf16.msra.mxu0 %v3111
        %3133 = vmatpush.bf16.msra.mxu0 %v3110
        %3134 = vmatmul.bf16.gmra.mxu0 %v1912
        %v3135 = vpop.f32.mrf.mxu0
        %v3136 = vadd.f32 0.0, %v3135
        %v3137 = vpop.f32.mrf.mxu0
        %v3138 = vadd.f32 0.0, %v3137
        %3139 = vmatmul.bf16.gmra.mxu0 %v1913
        %v3140 = vpop.f32.mrf.mxu0
        %v3141 = vadd.f32 0.0, %v3140
        %v3142 = vpop.f32.mrf.mxu0
        %v3143 = vadd.f32 0.0, %v3142
        %3144 = vmatmul.bf16.gmra.mxu0 %v1914
        %v3145 = vpop.f32.mrf.mxu0
        %v3146 = vadd.f32 0.0, %v3145
        %v3147 = vpop.f32.mrf.mxu0
        %v3148 = vadd.f32 0.0, %v3147
        %3149 = vmatmul.bf16.gmra.mxu0 %v1915
        %v3150 = vpop.f32.mrf.mxu0
        %v3151 = vadd.f32 0.0, %v3150
        %v3152 = vpop.f32.mrf.mxu0
        %v3153 = vadd.f32 0.0, %v3152
        %3154 = vmatmul.bf16.gmra.mxu0 %v1916
        %v3155 = vpop.f32.mrf.mxu0
        %v3156 = vadd.f32 0.0, %v3155
        %v3157 = vpop.f32.mrf.mxu0
        %v3158 = vadd.f32 0.0, %v3157
        %3159 = vmatmul.bf16.gmra.mxu0 %v1917
        %v3160 = vpop.f32.mrf.mxu0
        %v3161 = vadd.f32 0.0, %v3160
        %v3162 = vpop.f32.mrf.mxu0
        %v3163 = vadd.f32 0.0, %v3162
        %3164 = vmatmul.bf16.gmra.mxu0 %v1918
        %v3165 = vpop.f32.mrf.mxu0
        %v3166 = vadd.f32 0.0, %v3165
        %v3167 = vpop.f32.mrf.mxu0
        %v3168 = vadd.f32 0.0, %v3167
        %3169 = vmatmul.bf16.gmra.mxu0 %v1919
        %v3170 = vpop.f32.mrf.mxu0
        %v3171 = vadd.f32 0.0, %v3170
        %v3172 = vpop.f32.mrf.mxu0
        %v3173 = vadd.f32 0.0, %v3172
        %3174 = vmatmul.bf16.gmra.mxu0 %v1920
        %v3175 = vpop.f32.mrf.mxu0
        %v3176 = vadd.f32 0.0, %v3175
        %v3177 = vpop.f32.mrf.mxu0
        %v3178 = vadd.f32 0.0, %v3177
        %3179 = vmatmul.bf16.gmra.mxu0 %v1921
        %v3180 = vpop.f32.mrf.mxu0
        %v3181 = vadd.f32 0.0, %v3180
        %v3182 = vpop.f32.mrf.mxu0
        %v3183 = vadd.f32 0.0, %v3182
        %3184 = vmatmul.bf16.gmra.mxu0 %v1922
        %v3185 = vpop.f32.mrf.mxu0
        %v3186 = vadd.f32 0.0, %v3185
        %v3187 = vpop.f32.mrf.mxu0
        %v3188 = vadd.f32 0.0, %v3187
        %3189 = vmatmul.bf16.gmra.mxu0 %v1923
        %v3190 = vpop.f32.mrf.mxu0
        %v3191 = vadd.f32 0.0, %v3190
        %v3192 = vpop.f32.mrf.mxu0
        %v3193 = vadd.f32 0.0, %v3192
        %3194 = vmatmul.bf16.gmra.mxu0 %v1924
        %v3195 = vpop.f32.mrf.mxu0
        %v3196 = vadd.f32 0.0, %v3195
        %v3197 = vpop.f32.mrf.mxu0
        %v3198 = vadd.f32 0.0, %v3197
        %3199 = vmatmul.bf16.gmra.mxu0 %v1925
        %v3200 = vpop.f32.mrf.mxu0
        %v3201 = vadd.f32 0.0, %v3200
        %v3202 = vpop.f32.mrf.mxu0
        %v3203 = vadd.f32 0.0, %v3202
        %3204 = vmatmul.bf16.gmra.mxu0 %v2502
        %v3205 = vpop.f32.mrf.mxu0
        %v3206 = vadd.f32 0.0, %v3205
        %v3207 = vpop.f32.mrf.mxu0
        %v3208 = vadd.f32 0.0, %v3207
        %3209 = vmatmul.bf16.gmra.mxu0 %v1910
        %v3210 = vpop.f32.mrf.mxu0
        %v3211 = vadd.f32 0.0, %v3210
        %v3212 = vpop.f32.mrf.mxu0
        %v3213 = vadd.f32 0.0, %v3212
        %3214 = vdwg.mxu0
        %v3215 = vadd.f32 %v3029, %v3136
        %v3216 = vadd.f32 %v3030, %v3138
        %v3217 = vadd.f32 %v3031, %v3141
        %v3218 = vadd.f32 %v3032, %v3143
        %v3219 = vadd.f32 %v3033, %v3146
        %v3220 = vadd.f32 %v3034, %v3148
        %v3221 = vadd.f32 %v3035, %v3151
        %v3222 = vadd.f32 %v3036, %v3153
        %v3223 = vadd.f32 %v3037, %v3156
        %v3224 = vadd.f32 %v3038, %v3158
        %v3225 = vadd.f32 %v3039, %v3161
        %v3226 = vadd.f32 %v3040, %v3163
        %v3227 = vadd.f32 %v3041, %v3166
        %v3228 = vadd.f32 %v3042, %v3168
        %v3229 = vadd.f32 %v3043, %v3171
        %v3230 = vadd.f32 %v3044, %v3173
        %v3231 = vadd.f32 %v3045, %v3176
        %v3232 = vadd.f32 %v3046, %v3178
        %v3233 = vadd.f32 %v3047, %v3181
        %v3234 = vadd.f32 %v3048, %v3183
        %v3235 = vadd.f32 %v3049, %v3186
        %v3236 = vadd.f32 %v3050, %v3188
        %v3237 = vadd.f32 %v3051, %v3191
        %v3238 = vadd.f32 %v3052, %v3193
        %v3239 = vadd.f32 %v3053, %v3196
        %v3240 = vadd.f32 %v3054, %v3198
        %v3241 = vadd.f32 %v3055, %v3201
        %v3242 = vadd.f32 %v3056, %v3203
        %v3243 = vadd.f32 %v3057, %v3206
        %v3244 = vadd.f32 %v3058, %v3208
        %v3245 = vadd.f32 %v3059, %v3211
        %v3246 = vadd.f32 %v3060, %v3213
        %v3247 = vld [vmem:[%s4] sm:$0x1]
        %v3249 = vperm.slane %v3247, 0
        %v3251 = vadd.f32 %v3215, %v3249
        %v3252 = vadd.f32 %v3216, %v3249
        %v3253 = vadd.f32 %v3217, %v3249
        %v3254 = vadd.f32 %v3218, %v3249
        %v3255 = vadd.f32 %v3219, %v3249
        %v3256 = vadd.f32 %v3220, %v3249
        %v3257 = vadd.f32 %v3221, %v3249
        %v3258 = vadd.f32 %v3222, %v3249
        %v3259 = vadd.f32 %v3223, %v3249
        %v3260 = vadd.f32 %v3224, %v3249
        %v3261 = vadd.f32 %v3225, %v3249
        %v3262 = vadd.f32 %v3226, %v3249
        %v3263 = vadd.f32 %v3227, %v3249
        %v3264 = vadd.f32 %v3228, %v3249
        %v3265 = vadd.f32 %v3229, %v3249
        %v3266 = vadd.f32 %v3230, %v3249
        %v3267 = vadd.f32 %v3231, %v3249
        %v3268 = vadd.f32 %v3232, %v3249
        %v3269 = vadd.f32 %v3233, %v3249
        %v3270 = vadd.f32 %v3234, %v3249
        %v3271 = vadd.f32 %v3235, %v3249
        %v3272 = vadd.f32 %v3236, %v3249
        %v3273 = vadd.f32 %v3237, %v3249
        %v3274 = vadd.f32 %v3238, %v3249
        %v3275 = vadd.f32 %v3239, %v3249
        %v3276 = vadd.f32 %v3240, %v3249
        %v3277 = vadd.f32 %v3241, %v3249
        %v3278 = vadd.f32 %v3242, %v3249
        %v3279 = vadd.f32 %v3243, %v3249
        %v3280 = vadd.f32 %v3244, %v3249
        %v3281 = vadd.f32 %v3245, %v3249
        %v3282 = vadd.f32 %v3246, %v3249
        %v3283 = vld [vmem:[%s9] sm:$0x1]
        %v3284 = vld [vmem:[%s10] sm:$0x1]
        %v3285 = vadd.f32 %v3251, %v3252
        %v3286 = vadd.f32 %v3285, %v3253
        %v3287 = vadd.f32 %v3286, %v3254
        %v3288 = vadd.f32 %v3287, %v3255
        %v3289 = vadd.f32 %v3288, %v3256
        %v3290 = vadd.f32 %v3289, %v3257
        %v3291 = vadd.f32 %v3290, %v3258
        %v3292 = vadd.f32 %v3291, %v3259
        %v3293 = vadd.f32 %v3292, %v3260
        %v3294 = vadd.f32 %v3293, %v3261
        %v3295 = vadd.f32 %v3294, %v3262
        %v3296 = vadd.f32 %v3295, %v3263
        %v3297 = vadd.f32 %v3296, %v3264
        %v3298 = vadd.f32 %v3297, %v3265
        %v3299 = vadd.f32 %v3298, %v3266
        %v3300 = vadd.f32 %v3299, %v3267
        %v3301 = vadd.f32 %v3300, %v3268
        %v3302 = vadd.f32 %v3301, %v3269
        %v3303 = vadd.f32 %v3302, %v3270
        %v3304 = vadd.f32 %v3303, %v3271
        %v3305 = vadd.f32 %v3304, %v3272
        %v3306 = vadd.f32 %v3305, %v3273
        %v3307 = vadd.f32 %v3306, %v3274
        %v3308 = vadd.f32 %v3307, %v3275
        %v3309 = vadd.f32 %v3308, %v3276
        %v3310 = vadd.f32 %v3309, %v3277
        %v3311 = vadd.f32 %v3310, %v3278
        %v3312 = vadd.f32 %v3311, %v3279
        %v3313 = vadd.f32 %v3312, %v3280
        %v3314 = vadd.f32 %v3313, %v3281
        %v3315 = vadd.f32 %v3314, %v3282
        %v3316 = vrot.slane %v3315, 4
        %v3317 = vadd.f32 %v3315, %v3316
        %v3318 = vrot.slane %v3317, 2
        %v3319 = vadd.f32 %v3317, %v3318
        %v3320 = vrot.slane %v3319, 1
        %v3321 = vadd.f32 %v3319, %v3320
        %3322 = vmatpush.msra.mxu0 %v806
        %3323 = vmatpush.msra.mxu0 %v805
        %3324 = vmatpush.msra.mxu0 %v804
        %3325 = vmatpush.msra.mxu0 %v803
        %3326 = vmatpush.msra.mxu0 %v802
        %3327 = vmatpush.msra.mxu0 %v801
        %3328 = vmatpush.msra.mxu0 %v800
        %3329 = vmatpush.msra.mxu0 %v799
        %3330 = vmatpush.msra.mxu0 %v798
        %3331 = vmatpush.msra.mxu0 %v797
        %3332 = vmatpush.msra.mxu0 %v796
        %3333 = vmatpush.msra.mxu0 %v795
        %3334 = vmatpush.msra.mxu0 %v794
        %3335 = vmatpush.msra.mxu0 %v793
        %3336 = vmatpush.msra.mxu0 %v792
        %3337 = vmatpush.msra.mxu0 %v791
        %3338 = vmatmul.f32.gmra.mxu0 %v3321
        %v3339 = vpop.f32.mrf.mxu0
        %v3340 = vadd.f32 0.0, %v3339
        %3341 = vdwg.mxu0
        %v3342 = vmul.f32 %v3340, %v873
        %v3344 = vsel %vm875, %v3342, 0
        %3346 = vmatpush.msra.mxu0 0.0
        %3347 = vmatpush.msra.mxu0 0.0
        %3348 = vmatpush.msra.mxu0 0.0
        %3349 = vmatpush.msra.mxu0 0.0
        %3350 = vmatpush.msra.mxu0 0.0
        %3351 = vmatpush.msra.mxu0 0.0
        %3352 = vmatpush.msra.mxu0 0.0
        %3353 = vmatpush.msra.mxu0 0.0
        %3354 = vmatpush.msra.mxu0 0.0
        %3355 = vmatpush.msra.mxu0 0.0
        %3356 = vmatpush.msra.mxu0 0.0
        %3357 = vmatpush.msra.mxu0 0.0
        %3358 = vmatpush.msra.mxu0 0.0
        %3359 = vmatpush.msra.mxu0 0.0
        %3360 = vmatpush.msra.mxu0 0.0
        %3361 = vmatpush.msra.mxu0 %v881
        %3362 = vmatmul.f32.gmra.mxu0 %v3344
        %v3363 = vpop.f32.mrf.mxu0
        %v3364 = vadd.f32 0.0, %v3363
        %3365 = vdwg.mxu0
        %v3366 = vperm.slane %v3364, 0
        %v3367 = vsub.f32 %v3251, %v3366
        %v3368 = vsub.f32 %v3252, %v3366
        %v3369 = vsub.f32 %v3253, %v3366
        %v3370 = vsub.f32 %v3254, %v3366
        %v3371 = vsub.f32 %v3255, %v3366
        %v3372 = vsub.f32 %v3256, %v3366
        %v3373 = vsub.f32 %v3257, %v3366
        %v3374 = vsub.f32 %v3258, %v3366
        %v3375 = vsub.f32 %v3259, %v3366
        %v3376 = vsub.f32 %v3260, %v3366
        %v3377 = vsub.f32 %v3261, %v3366
        %v3378 = vsub.f32 %v3262, %v3366
        %v3379 = vsub.f32 %v3263, %v3366
        %v3380 = vsub.f32 %v3264, %v3366
        %v3381 = vsub.f32 %v3265, %v3366
        %v3382 = vsub.f32 %v3266, %v3366
        %v3383 = vsub.f32 %v3267, %v3366
        %v3384 = vsub.f32 %v3268, %v3366
        %v3385 = vsub.f32 %v3269, %v3366
        %v3386 = vsub.f32 %v3270, %v3366
        %v3387 = vsub.f32 %v3271, %v3366
        %v3388 = vsub.f32 %v3272, %v3366
        %v3389 = vsub.f32 %v3273, %v3366
        %v3390 = vsub.f32 %v3274, %v3366
        %v3391 = vsub.f32 %v3275, %v3366
        %v3392 = vsub.f32 %v3276, %v3366
        %v3393 = vsub.f32 %v3277, %v3366
        %v3394 = vsub.f32 %v3278, %v3366
        %v3395 = vsub.f32 %v3279, %v3366
        %v3396 = vsub.f32 %v3280, %v3366
        %v3397 = vsub.f32 %v3281, %v3366
        %v3398 = vsub.f32 %v3282, %v3366
        %v3399 = vmul.f32 %v3367, %v3367
        %v3400 = vmul.f32 %v3368, %v3368
        %v3401 = vmul.f32 %v3369, %v3369
        %v3402 = vmul.f32 %v3370, %v3370
        %v3403 = vmul.f32 %v3371, %v3371
        %v3404 = vmul.f32 %v3372, %v3372
        %v3405 = vmul.f32 %v3373, %v3373
        %v3406 = vmul.f32 %v3374, %v3374
        %v3407 = vmul.f32 %v3375, %v3375
        %v3408 = vmul.f32 %v3376, %v3376
        %v3409 = vmul.f32 %v3377, %v3377
        %v3410 = vmul.f32 %v3378, %v3378
        %v3411 = vmul.f32 %v3379, %v3379
        %v3412 = vmul.f32 %v3380, %v3380
        %v3413 = vmul.f32 %v3381, %v3381
        %v3414 = vmul.f32 %v3382, %v3382
        %v3415 = vmul.f32 %v3383, %v3383
        %v3416 = vmul.f32 %v3384, %v3384
        %v3417 = vmul.f32 %v3385, %v3385
        %v3418 = vmul.f32 %v3386, %v3386
        %v3419 = vmul.f32 %v3387, %v3387
        %v3420 = vmul.f32 %v3388, %v3388
        %v3421 = vmul.f32 %v3389, %v3389
        %v3422 = vmul.f32 %v3390, %v3390
        %v3423 = vmul.f32 %v3391, %v3391
        %v3424 = vmul.f32 %v3392, %v3392
        %v3425 = vmul.f32 %v3393, %v3393
        %v3426 = vmul.f32 %v3394, %v3394
        %v3427 = vmul.f32 %v3395, %v3395
        %v3428 = vmul.f32 %v3396, %v3396
        %v3429 = vmul.f32 %v3397, %v3397
        %v3430 = vmul.f32 %v3398, %v3398
        %v3431 = vadd.f32 %v3399, %v3400
        %v3432 = vadd.f32 %v3431, %v3401
        %v3433 = vadd.f32 %v3432, %v3402
        %v3434 = vadd.f32 %v3433, %v3403
        %v3435 = vadd.f32 %v3434, %v3404
        %v3436 = vadd.f32 %v3435, %v3405
        %v3437 = vadd.f32 %v3436, %v3406
        %v3438 = vadd.f32 %v3437, %v3407
        %v3439 = vadd.f32 %v3438, %v3408
        %v3440 = vadd.f32 %v3439, %v3409
        %v3441 = vadd.f32 %v3440, %v3410
        %v3442 = vadd.f32 %v3441, %v3411
        %v3443 = vadd.f32 %v3442, %v3412
        %v3444 = vadd.f32 %v3443, %v3413
        %v3445 = vadd.f32 %v3444, %v3414
        %v3446 = vadd.f32 %v3445, %v3415
        %v3447 = vadd.f32 %v3446, %v3416
        %v3448 = vadd.f32 %v3447, %v3417
        %v3449 = vadd.f32 %v3448, %v3418
        %v3450 = vadd.f32 %v3449, %v3419
        %v3451 = vadd.f32 %v3450, %v3420
        %v3452 = vadd.f32 %v3451, %v3421
        %v3453 = vadd.f32 %v3452, %v3422
        %v3454 = vadd.f32 %v3453, %v3423
        %v3455 = vadd.f32 %v3454, %v3424
        %v3456 = vadd.f32 %v3455, %v3425
        %v3457 = vadd.f32 %v3456, %v3426
        %v3458 = vadd.f32 %v3457, %v3427
        %v3459 = vadd.f32 %v3458, %v3428
        %v3460 = vadd.f32 %v3459, %v3429
        %v3461 = vadd.f32 %v3460, %v3430
        %v3462 = vrot.slane %v3461, 4
        %v3463 = vadd.f32 %v3461, %v3462
        %v3464 = vrot.slane %v3463, 2
        %v3465 = vadd.f32 %v3463, %v3464
        %v3466 = vrot.slane %v3465, 1
        %v3467 = vadd.f32 %v3465, %v3466
        %3468 = vmatpush.msra.mxu0 %v806
        %3469 = vmatpush.msra.mxu0 %v805
        %3470 = vmatpush.msra.mxu0 %v804
        %3471 = vmatpush.msra.mxu0 %v803
        %3472 = vmatpush.msra.mxu0 %v802
        %3473 = vmatpush.msra.mxu0 %v801
        %3474 = vmatpush.msra.mxu0 %v800
        %3475 = vmatpush.msra.mxu0 %v799
        %3476 = vmatpush.msra.mxu0 %v798
        %3477 = vmatpush.msra.mxu0 %v797
        %3478 = vmatpush.msra.mxu0 %v796
        %3479 = vmatpush.msra.mxu0 %v795
        %3480 = vmatpush.msra.mxu0 %v794
        %3481 = vmatpush.msra.mxu0 %v793
        %3482 = vmatpush.msra.mxu0 %v792
        %3483 = vmatpush.msra.mxu0 %v791
        %3484 = vmatmul.f32.gmra.mxu0 %v3467
        %v3485 = vpop.f32.mrf.mxu0
        %v3486 = vadd.f32 0.0, %v3485
        %3487 = vdwg.mxu0
        %v3488 = vmul.f32 %v3486, %v873
        %v3489 = vadd.f32 %v3488, 1e-05
        %v3490 = vrsqrt.pop %v3489
        %v3491 = vmul.f32 %v3490, %v3489
        %v3492 = vmul.f32 %v3491, %v3490
        %v3493 = vmul.f32 0.5, %v3492
        %v3494 = vsub.f32 1.5, %v3493
        %v3495 = vmul.f32 %v3490, %v3494
        %vm3496 = vweird.f32 %v3489
        %vm3497 = vweird.f32 %v3490
        %vm3498 = vmor %vm3496, %vm3497
        %v3499 = vsel %vm3498, %v3490, %v3495
        %v3501 = vsel %vm875, %v3499, 0
        %3503 = vmatpush.msra.mxu0 0.0
        %3504 = vmatpush.msra.mxu0 0.0
        %3505 = vmatpush.msra.mxu0 0.0
        %3506 = vmatpush.msra.mxu0 0.0
        %3507 = vmatpush.msra.mxu0 0.0
        %3508 = vmatpush.msra.mxu0 0.0
        %3509 = vmatpush.msra.mxu0 0.0
        %3510 = vmatpush.msra.mxu0 0.0
        %3511 = vmatpush.msra.mxu0 0.0
        %3512 = vmatpush.msra.mxu0 0.0
        %3513 = vmatpush.msra.mxu0 0.0
        %3514 = vmatpush.msra.mxu0 0.0
        %3515 = vmatpush.msra.mxu0 0.0
        %3516 = vmatpush.msra.mxu0 0.0
        %3517 = vmatpush.msra.mxu0 0.0
        %3518 = vmatpush.msra.mxu0 %v881
        %3519 = vmatmul.f32.gmra.mxu0 %v3501
        %v3520 = vpop.f32.mrf.mxu0
        %v3521 = vadd.f32 0.0, %v3520
        %3522 = vdwg.mxu0
        %v3523 = vmul.f32 %v3521, %v3283
        %v3524 = vperm.slane %v3523, 0
        %v3525 = vmul.f32 %v3367, %v3524
        %v3526 = vmul.f32 %v3368, %v3524
        %v3527 = vmul.f32 %v3369, %v3524
        %v3528 = vmul.f32 %v3370, %v3524
        %v3529 = vmul.f32 %v3371, %v3524
        %v3530 = vmul.f32 %v3372, %v3524
        %v3531 = vmul.f32 %v3373, %v3524
        %v3532 = vmul.f32 %v3374, %v3524
        %v3533 = vmul.f32 %v3375, %v3524
        %v3534 = vmul.f32 %v3376, %v3524
        %v3535 = vmul.f32 %v3377, %v3524
        %v3536 = vmul.f32 %v3378, %v3524
        %v3537 = vmul.f32 %v3379, %v3524
        %v3538 = vmul.f32 %v3380, %v3524
        %v3539 = vmul.f32 %v3381, %v3524
        %v3540 = vmul.f32 %v3382, %v3524
        %v3541 = vmul.f32 %v3383, %v3524
        %v3542 = vmul.f32 %v3384, %v3524
        %v3543 = vmul.f32 %v3385, %v3524
        %v3544 = vmul.f32 %v3386, %v3524
        %v3545 = vmul.f32 %v3387, %v3524
        %v3546 = vmul.f32 %v3388, %v3524
        %v3547 = vmul.f32 %v3389, %v3524
        %v3548 = vmul.f32 %v3390, %v3524
        %v3549 = vmul.f32 %v3391, %v3524
        %v3550 = vmul.f32 %v3392, %v3524
        %v3551 = vmul.f32 %v3393, %v3524
        %v3552 = vmul.f32 %v3394, %v3524
        %v3553 = vmul.f32 %v3395, %v3524
        %v3554 = vmul.f32 %v3396, %v3524
        %v3555 = vmul.f32 %v3397, %v3524
        %v3556 = vmul.f32 %v3398, %v3524
        %v3558 = vperm.slane %v3284, 0
        %v3560 = vadd.f32 %v3525, %v3558
        %v3561 = vadd.f32 %v3526, %v3558
        %v3562 = vadd.f32 %v3527, %v3558
        %v3563 = vadd.f32 %v3528, %v3558
        %v3564 = vadd.f32 %v3529, %v3558
        %v3565 = vadd.f32 %v3530, %v3558
        %v3566 = vadd.f32 %v3531, %v3558
        %v3567 = vadd.f32 %v3532, %v3558
        %v3568 = vadd.f32 %v3533, %v3558
        %v3569 = vadd.f32 %v3534, %v3558
        %v3570 = vadd.f32 %v3535, %v3558
        %v3571 = vadd.f32 %v3536, %v3558
        %v3572 = vadd.f32 %v3537, %v3558
        %v3573 = vadd.f32 %v3538, %v3558
        %v3574 = vadd.f32 %v3539, %v3558
        %v3575 = vadd.f32 %v3540, %v3558
        %v3576 = vadd.f32 %v3541, %v3558
        %v3577 = vadd.f32 %v3542, %v3558
        %v3578 = vadd.f32 %v3543, %v3558
        %v3579 = vadd.f32 %v3544, %v3558
        %v3580 = vadd.f32 %v3545, %v3558
        %v3581 = vadd.f32 %v3546, %v3558
        %v3582 = vadd.f32 %v3547, %v3558
        %v3583 = vadd.f32 %v3548, %v3558
        %v3584 = vadd.f32 %v3549, %v3558
        %v3585 = vadd.f32 %v3550, %v3558
        %v3586 = vadd.f32 %v3551, %v3558
        %v3587 = vadd.f32 %v3552, %v3558
        %v3588 = vadd.f32 %v3553, %v3558
        %v3589 = vadd.f32 %v3554, %v3558
        %v3590 = vadd.f32 %v3555, %v3558
        %v3591 = vadd.f32 %v3556, %v3558
        %v3592 = vmax.f32 %v3560, 0.0
        %v3593 = vmax.f32 %v3561, 0.0
        %v3594 = vmax.f32 %v3562, 0.0
        %v3595 = vmax.f32 %v3563, 0.0
        %v3596 = vmax.f32 %v3564, 0.0
        %v3597 = vmax.f32 %v3565, 0.0
        %v3598 = vmax.f32 %v3566, 0.0
        %v3599 = vmax.f32 %v3567, 0.0
        %v3600 = vmax.f32 %v3568, 0.0
        %v3601 = vmax.f32 %v3569, 0.0
        %v3602 = vmax.f32 %v3570, 0.0
        %v3603 = vmax.f32 %v3571, 0.0
        %v3604 = vmax.f32 %v3572, 0.0
        %v3605 = vmax.f32 %v3573, 0.0
        %v3606 = vmax.f32 %v3574, 0.0
        %v3607 = vmax.f32 %v3575, 0.0
        %v3608 = vmax.f32 %v3576, 0.0
        %v3609 = vmax.f32 %v3577, 0.0
        %v3610 = vmax.f32 %v3578, 0.0
        %v3611 = vmax.f32 %v3579, 0.0
        %v3612 = vmax.f32 %v3580, 0.0
        %v3613 = vmax.f32 %v3581, 0.0
        %v3614 = vmax.f32 %v3582, 0.0
        %v3615 = vmax.f32 %v3583, 0.0
        %v3616 = vmax.f32 %v3584, 0.0
        %v3617 = vmax.f32 %v3585, 0.0
        %v3618 = vmax.f32 %v3586, 0.0
        %v3619 = vmax.f32 %v3587, 0.0
        %v3620 = vmax.f32 %v3588, 0.0
        %v3621 = vmax.f32 %v3589, 0.0
        %v3622 = vmax.f32 %v3590, 0.0
        %v3623 = vmax.f32 %v3591, 0.0
        %v3624 = vpack.c.bf16 %v3593, %v3592
        %v3625 = vpack.c.bf16 %v3595, %v3594
        %v3626 = vpack.c.bf16 %v3597, %v3596
        %v3627 = vpack.c.bf16 %v3599, %v3598
        %v3628 = vpack.c.bf16 %v3601, %v3600
        %v3629 = vpack.c.bf16 %v3603, %v3602
        %v3630 = vpack.c.bf16 %v3605, %v3604
        %v3631 = vpack.c.bf16 %v3607, %v3606
        %v3632 = vpack.c.bf16 %v3609, %v3608
        %v3633 = vpack.c.bf16 %v3611, %v3610
        %v3634 = vpack.c.bf16 %v3613, %v3612
        %v3635 = vpack.c.bf16 %v3615, %v3614
        %v3636 = vpack.c.bf16 %v3617, %v3616
        %v3637 = vpack.c.bf16 %v3619, %v3618
        %v3638 = vpack.c.bf16 %v3621, %v3620
        %v3639 = vpack.c.bf16 %v3623, %v3622
        %v3640 = vld [vmem:[%s5] sm:$0xf]
        %v3641 = vld [vmem:[%s5 + $0x4] sm:$0xf]
        %v3642 = vld [vmem:[%s5 + $0x8] sm:$0xf]
        %v3643 = vld [vmem:[%s5 + $0xc] sm:$0xf]
        %v3644 = vld [vmem:[%s5 + $0x10] sm:$0xf]
        %v3645 = vld [vmem:[%s5 + $0x14] sm:$0xf]
        %v3646 = vld [vmem:[%s5 + $0x18] sm:$0xf]
        %v3647 = vld [vmem:[%s5 + $0x1c] sm:$0xf]
        %v3648 = vld [vmem:[%s5 + $0x20] sm:$0xf]
        %v3649 = vld [vmem:[%s5 + $0x24] sm:$0xf]
        %v3650 = vld [vmem:[%s5 + $0x28] sm:$0xf]
        %v3651 = vld [vmem:[%s5 + $0x2c] sm:$0xf]
        %v3652 = vld [vmem:[%s5 + $0x30] sm:$0xf]
        %v3653 = vld [vmem:[%s5 + $0x34] sm:$0xf]
        %v3654 = vld [vmem:[%s5 + $0x38] sm:$0xf]
        %v3655 = vld [vmem:[%s5 + $0x3c] sm:$0xf]
        %v3656 = vld [vmem:[%s6] sm:$0x1]
        %v3658 = vperm.slane %v3656, 0
        %v3676 = vunpack.c.l.b16 %v3640
        %v3677 = vunpack.c.l.b16 %v3641
        %v3678 = vunpack.c.l.b16 %v3642
        %v3679 = vunpack.c.l.b16 %v3643
        %v3680 = vunpack.c.l.b16 %v3644
        %v3681 = vunpack.c.l.b16 %v3645
        %v3682 = vunpack.c.l.b16 %v3646
        %v3683 = vunpack.c.l.b16 %v3647
        %v3684 = vunpack.c.l.b16 %v3648
        %v3685 = vunpack.c.l.b16 %v3649
        %v3686 = vunpack.c.l.b16 %v3650
        %v3687 = vunpack.c.l.b16 %v3651
        %v3688 = vunpack.c.l.b16 %v3652
        %v3689 = vunpack.c.l.b16 %v3653
        %v3690 = vunpack.c.l.b16 %v3654
        %v3691 = vunpack.c.l.b16 %v3655
        %v3692 = vpack.c.b16 %v3677, %v3676
        %v3693 = vpack.c.b16 %v3679, %v3678
        %v3694 = vpack.c.b16 %v3681, %v3680
        %v3695 = vpack.c.b16 %v3683, %v3682
        %v3696 = vpack.c.b16 %v3685, %v3684
        %v3697 = vpack.c.b16 %v3687, %v3686
        %v3698 = vpack.c.b16 %v3689, %v3688
        %v3699 = vpack.c.b16 %v3691, %v3690
        %3708 = vmatpush.bf16.msra.mxu0 %v3699
        %3709 = vmatpush.bf16.msra.mxu0 %v3698
        %3710 = vmatpush.bf16.msra.mxu0 %v3697
        %3711 = vmatpush.bf16.msra.mxu0 %v3696
        %3712 = vmatpush.bf16.msra.mxu0 %v3695
        %3713 = vmatpush.bf16.msra.mxu0 %v3694
        %3714 = vmatpush.bf16.msra.mxu0 %v3693
        %3715 = vmatpush.bf16.msra.mxu0 %v3692
        %3716 = vmatmul.bf16.gmra.mxu0 %v3624
        %v3717 = vpop.f32.mrf.mxu0
        %v3718 = vadd.f32 %v3658, %v3717
        %v3719 = vpop.f32.mrf.mxu0
        %v3720 = vadd.f32 %v3658, %v3719
        %3721 = vmatmul.bf16.gmra.mxu0 %v3625
        %v3722 = vpop.f32.mrf.mxu0
        %v3723 = vadd.f32 %v3658, %v3722
        %v3724 = vpop.f32.mrf.mxu0
        %v3725 = vadd.f32 %v3658, %v3724
        %3726 = vmatmul.bf16.gmra.mxu0 %v3626
        %v3727 = vpop.f32.mrf.mxu0
        %v3728 = vadd.f32 %v3658, %v3727
        %v3729 = vpop.f32.mrf.mxu0
        %v3730 = vadd.f32 %v3658, %v3729
        %3731 = vmatmul.bf16.gmra.mxu0 %v3627
        %v3732 = vpop.f32.mrf.mxu0
        %v3733 = vadd.f32 %v3658, %v3732
        %v3734 = vpop.f32.mrf.mxu0
        %v3735 = vadd.f32 %v3658, %v3734
        %3736 = vmatmul.bf16.gmra.mxu0 %v3628
        %v3737 = vpop.f32.mrf.mxu0
        %v3738 = vadd.f32 %v3658, %v3737
        %v3739 = vpop.f32.mrf.mxu0
        %v3740 = vadd.f32 %v3658, %v3739
        %3741 = vmatmul.bf16.gmra.mxu0 %v3629
        %v3742 = vpop.f32.mrf.mxu0
        %v3743 = vadd.f32 %v3658, %v3742
        %v3744 = vpop.f32.mrf.mxu0
        %v3745 = vadd.f32 %v3658, %v3744
        %3746 = vmatmul.bf16.gmra.mxu0 %v3630
        %v3747 = vpop.f32.mrf.mxu0
        %v3748 = vadd.f32 %v3658, %v3747
        %v3749 = vpop.f32.mrf.mxu0
        %v3750 = vadd.f32 %v3658, %v3749
        %3751 = vmatmul.bf16.gmra.mxu0 %v3631
        %v3752 = vpop.f32.mrf.mxu0
        %v3753 = vadd.f32 %v3658, %v3752
        %v3754 = vpop.f32.mrf.mxu0
        %v3755 = vadd.f32 %v3658, %v3754
        %3756 = vmatmul.bf16.gmra.mxu0 %v3632
        %v3757 = vpop.f32.mrf.mxu0
        %v3758 = vadd.f32 %v3658, %v3757
        %v3759 = vpop.f32.mrf.mxu0
        %v3760 = vadd.f32 %v3658, %v3759
        %3761 = vmatmul.bf16.gmra.mxu0 %v3633
        %v3762 = vpop.f32.mrf.mxu0
        %v3763 = vadd.f32 %v3658, %v3762
        %v3764 = vpop.f32.mrf.mxu0
        %v3765 = vadd.f32 %v3658, %v3764
        %3766 = vmatmul.bf16.gmra.mxu0 %v3634
        %v3767 = vpop.f32.mrf.mxu0
        %v3768 = vadd.f32 %v3658, %v3767
        %v3769 = vpop.f32.mrf.mxu0
        %v3770 = vadd.f32 %v3658, %v3769
        %3771 = vmatmul.bf16.gmra.mxu0 %v3635
        %v3772 = vpop.f32.mrf.mxu0
        %v3773 = vadd.f32 %v3658, %v3772
        %v3774 = vpop.f32.mrf.mxu0
        %v3775 = vadd.f32 %v3658, %v3774
        %3776 = vmatmul.bf16.gmra.mxu0 %v3636
        %v3777 = vpop.f32.mrf.mxu0
        %v3778 = vadd.f32 %v3658, %v3777
        %v3779 = vpop.f32.mrf.mxu0
        %v3780 = vadd.f32 %v3658, %v3779
        %3781 = vmatmul.bf16.gmra.mxu0 %v3637
        %v3782 = vpop.f32.mrf.mxu0
        %v3783 = vadd.f32 %v3658, %v3782
        %v3784 = vpop.f32.mrf.mxu0
        %v3785 = vadd.f32 %v3658, %v3784
        %3786 = vmatmul.bf16.gmra.mxu0 %v3638
        %v3787 = vpop.f32.mrf.mxu0
        %v3788 = vadd.f32 %v3658, %v3787
        %v3789 = vpop.f32.mrf.mxu0
        %v3790 = vadd.f32 %v3658, %v3789
        %3791 = vmatmul.bf16.gmra.mxu0 %v3639
        %v3792 = vpop.f32.mrf.mxu0
        %v3793 = vadd.f32 %v3658, %v3792
        %v3794 = vpop.f32.mrf.mxu0
        %v3795 = vadd.f32 %v3658, %v3794
        %3796 = vdwg.mxu0
        %v3797 = vld [vmem:[%s15] sm:$0xff]
        %v3798 = vld [vmem:[%s15 + $0x8] sm:$0xff]
        %v3799 = vld [vmem:[%s15 + $0x10] sm:$0xff]
        %v3800 = vld [vmem:[%s15 + $0x18] sm:$0xff]
        %v3801 = vld [vmem:[%s15 + $0x20] sm:$0xff]
        %v3802 = vld [vmem:[%s15 + $0x28] sm:$0xff]
        %v3803 = vld [vmem:[%s15 + $0x30] sm:$0xff]
        %v3804 = vld [vmem:[%s15 + $0x38] sm:$0xff]
        %v3805 = vld [vmem:[%s15 + $0x40] sm:$0xff]
        %v3806 = vld [vmem:[%s15 + $0x48] sm:$0xff]
        %v3807 = vld [vmem:[%s15 + $0x50] sm:$0xff]
        %v3808 = vld [vmem:[%s15 + $0x58] sm:$0xff]
        %v3809 = vld [vmem:[%s15 + $0x60] sm:$0xff]
        %v3810 = vld [vmem:[%s15 + $0x68] sm:$0xff]
        %v3811 = vld [vmem:[%s15 + $0x70] sm:$0xff]
        %v3812 = vld [vmem:[%s15 + $0x78] sm:$0xff]
        %v3813 = vld [vmem:[%s16] sm:$0xf]
        %v3814 = vld [vmem:[%s11] sm:$0x1]
        %v3815 = vld [vmem:[%s12] sm:$0x1]
        %v3816 = vadd.f32 %v3718, %v3720
        %v3817 = vadd.f32 %v3816, %v3723
        %v3818 = vadd.f32 %v3817, %v3725
        %v3819 = vadd.f32 %v3818, %v3728
        %v3820 = vadd.f32 %v3819, %v3730
        %v3821 = vadd.f32 %v3820, %v3733
        %v3822 = vadd.f32 %v3821, %v3735
        %v3823 = vadd.f32 %v3822, %v3738
        %v3824 = vadd.f32 %v3823, %v3740
        %v3825 = vadd.f32 %v3824, %v3743
        %v3826 = vadd.f32 %v3825, %v3745
        %v3827 = vadd.f32 %v3826, %v3748
        %v3828 = vadd.f32 %v3827, %v3750
        %v3829 = vadd.f32 %v3828, %v3753
        %v3830 = vadd.f32 %v3829, %v3755
        %v3831 = vadd.f32 %v3830, %v3758
        %v3832 = vadd.f32 %v3831, %v3760
        %v3833 = vadd.f32 %v3832, %v3763
        %v3834 = vadd.f32 %v3833, %v3765
        %v3835 = vadd.f32 %v3834, %v3768
        %v3836 = vadd.f32 %v3835, %v3770
        %v3837 = vadd.f32 %v3836, %v3773
        %v3838 = vadd.f32 %v3837, %v3775
        %v3839 = vadd.f32 %v3838, %v3778
        %v3840 = vadd.f32 %v3839, %v3780
        %v3841 = vadd.f32 %v3840, %v3783
        %v3842 = vadd.f32 %v3841, %v3785
        %v3843 = vadd.f32 %v3842, %v3788
        %v3844 = vadd.f32 %v3843, %v3790
        %v3845 = vadd.f32 %v3844, %v3793
        %v3846 = vadd.f32 %v3845, %v3795
        %v3847 = vrot.slane %v3846, 4
        %v3848 = vadd.f32 %v3846, %v3847
        %v3849 = vrot.slane %v3848, 2
        %v3850 = vadd.f32 %v3848, %v3849
        %v3851 = vrot.slane %v3850, 1
        %v3852 = vadd.f32 %v3850, %v3851
        %3853 = vmatpush.msra.mxu0 %v3812
        %3854 = vmatpush.msra.mxu0 %v3811
        %3855 = vmatpush.msra.mxu0 %v3810
        %3856 = vmatpush.msra.mxu0 %v3809
        %3857 = vmatpush.msra.mxu0 %v3808
        %3858 = vmatpush.msra.mxu0 %v3807
        %3859 = vmatpush.msra.mxu0 %v3806
        %3860 = vmatpush.msra.mxu0 %v3805
        %3861 = vmatpush.msra.mxu0 %v3804
        %3862 = vmatpush.msra.mxu0 %v3803
        %3863 = vmatpush.msra.mxu0 %v3802
        %3864 = vmatpush.msra.mxu0 %v3801
        %3865 = vmatpush.msra.mxu0 %v3800
        %3866 = vmatpush.msra.mxu0 %v3799
        %3867 = vmatpush.msra.mxu0 %v3798
        %3868 = vmatpush.msra.mxu0 %v3797
        %3869 = vmatmul.f32.gmra.mxu0 %v3852
        %v3870 = vpop.f32.mrf.mxu0
        %v3871 = vadd.f32 0.0, %v3870
        %3872 = vdwg.mxu0
        %v3873 = vrcp.pop 2048.0
        %v3874 = vmul.f32 2048.0, %v3873
        %v3875 = vsub.f32 1.0, %v3874
        %v3876 = vmul.f32 %v3873, %v3875
        %v3877 = vadd.f32 %v3873, %v3876
        %vm3878 = vweird.f32 %v3873
        %v3879 = vsel %vm3878, %v3873, %v3877
        %v3880 = vmul.f32 %v3871, %v3879
        %v3882 = vsel %vm875, %v3880, 0
        %v3885 = vsel %vm879, %v3813, 0
        %3887 = vmatpush.msra.mxu0 0.0
        %3888 = vmatpush.msra.mxu0 0.0
        %3889 = vmatpush.msra.mxu0 0.0
        %3890 = vmatpush.msra.mxu0 0.0
        %3891 = vmatpush.msra.mxu0 0.0
        %3892 = vmatpush.msra.mxu0 0.0
        %3893 = vmatpush.msra.mxu0 0.0
        %3894 = vmatpush.msra.mxu0 0.0
        %3895 = vmatpush.msra.mxu0 0.0
        %3896 = vmatpush.msra.mxu0 0.0
        %3897 = vmatpush.msra.mxu0 0.0
        %3898 = vmatpush.msra.mxu0 0.0
        %3899 = vmatpush.msra.mxu0 0.0
        %3900 = vmatpush.msra.mxu0 0.0
        %3901 = vmatpush.msra.mxu0 0.0
        %3902 = vmatpush.msra.mxu0 %v3885
        %3903 = vmatmul.f32.gmra.mxu0 %v3882
        %v3904 = vpop.f32.mrf.mxu0
        %v3905 = vadd.f32 0.0, %v3904
        %3906 = vdwg.mxu0
        %v3907 = vperm.slane %v3905, 0
        %v3908 = vsub.f32 %v3718, %v3907
        %v3909 = vsub.f32 %v3720, %v3907
        %v3910 = vsub.f32 %v3723, %v3907
        %v3911 = vsub.f32 %v3725, %v3907
        %v3912 = vsub.f32 %v3728, %v3907
        %v3913 = vsub.f32 %v3730, %v3907
        %v3914 = vsub.f32 %v3733, %v3907
        %v3915 = vsub.f32 %v3735, %v3907
        %v3916 = vsub.f32 %v3738, %v3907
        %v3917 = vsub.f32 %v3740, %v3907
        %v3918 = vsub.f32 %v3743, %v3907
        %v3919 = vsub.f32 %v3745, %v3907
        %v3920 = vsub.f32 %v3748, %v3907
        %v3921 = vsub.f32 %v3750, %v3907
        %v3922 = vsub.f32 %v3753, %v3907
        %v3923 = vsub.f32 %v3755, %v3907
        %v3924 = vsub.f32 %v3758, %v3907
        %v3925 = vsub.f32 %v3760, %v3907
        %v3926 = vsub.f32 %v3763, %v3907
        %v3927 = vsub.f32 %v3765, %v3907
        %v3928 = vsub.f32 %v3768, %v3907
        %v3929 = vsub.f32 %v3770, %v3907
        %v3930 = vsub.f32 %v3773, %v3907
        %v3931 = vsub.f32 %v3775, %v3907
        %v3932 = vsub.f32 %v3778, %v3907
        %v3933 = vsub.f32 %v3780, %v3907
        %v3934 = vsub.f32 %v3783, %v3907
        %v3935 = vsub.f32 %v3785, %v3907
        %v3936 = vsub.f32 %v3788, %v3907
        %v3937 = vsub.f32 %v3790, %v3907
        %v3938 = vsub.f32 %v3793, %v3907
        %v3939 = vsub.f32 %v3795, %v3907
        %v3940 = vmul.f32 %v3908, %v3908
        %v3941 = vmul.f32 %v3909, %v3909
        %v3942 = vmul.f32 %v3910, %v3910
        %v3943 = vmul.f32 %v3911, %v3911
        %v3944 = vmul.f32 %v3912, %v3912
        %v3945 = vmul.f32 %v3913, %v3913
        %v3946 = vmul.f32 %v3914, %v3914
        %v3947 = vmul.f32 %v3915, %v3915
        %v3948 = vmul.f32 %v3916, %v3916
        %v3949 = vmul.f32 %v3917, %v3917
        %v3950 = vmul.f32 %v3918, %v3918
        %v3951 = vmul.f32 %v3919, %v3919
        %v3952 = vmul.f32 %v3920, %v3920
        %v3953 = vmul.f32 %v3921, %v3921
        %v3954 = vmul.f32 %v3922, %v3922
        %v3955 = vmul.f32 %v3923, %v3923
        %v3956 = vmul.f32 %v3924, %v3924
        %v3957 = vmul.f32 %v3925, %v3925
        %v3958 = vmul.f32 %v3926, %v3926
        %v3959 = vmul.f32 %v3927, %v3927
        %v3960 = vmul.f32 %v3928, %v3928
        %v3961 = vmul.f32 %v3929, %v3929
        %v3962 = vmul.f32 %v3930, %v3930
        %v3963 = vmul.f32 %v3931, %v3931
        %v3964 = vmul.f32 %v3932, %v3932
        %v3965 = vmul.f32 %v3933, %v3933
        %v3966 = vmul.f32 %v3934, %v3934
        %v3967 = vmul.f32 %v3935, %v3935
        %v3968 = vmul.f32 %v3936, %v3936
        %v3969 = vmul.f32 %v3937, %v3937
        %v3970 = vmul.f32 %v3938, %v3938
        %v3971 = vmul.f32 %v3939, %v3939
        %v3972 = vadd.f32 %v3940, %v3941
        %v3973 = vadd.f32 %v3972, %v3942
        %v3974 = vadd.f32 %v3973, %v3943
        %v3975 = vadd.f32 %v3974, %v3944
        %v3976 = vadd.f32 %v3975, %v3945
        %v3977 = vadd.f32 %v3976, %v3946
        %v3978 = vadd.f32 %v3977, %v3947
        %v3979 = vadd.f32 %v3978, %v3948
        %v3980 = vadd.f32 %v3979, %v3949
        %v3981 = vadd.f32 %v3980, %v3950
        %v3982 = vadd.f32 %v3981, %v3951
        %v3983 = vadd.f32 %v3982, %v3952
        %v3984 = vadd.f32 %v3983, %v3953
        %v3985 = vadd.f32 %v3984, %v3954
        %v3986 = vadd.f32 %v3985, %v3955
        %v3987 = vadd.f32 %v3986, %v3956
        %v3988 = vadd.f32 %v3987, %v3957
        %v3989 = vadd.f32 %v3988, %v3958
        %v3990 = vadd.f32 %v3989, %v3959
        %v3991 = vadd.f32 %v3990, %v3960
        %v3992 = vadd.f32 %v3991, %v3961
        %v3993 = vadd.f32 %v3992, %v3962
        %v3994 = vadd.f32 %v3993, %v3963
        %v3995 = vadd.f32 %v3994, %v3964
        %v3996 = vadd.f32 %v3995, %v3965
        %v3997 = vadd.f32 %v3996, %v3966
        %v3998 = vadd.f32 %v3997, %v3967
        %v3999 = vadd.f32 %v3998, %v3968
        %v4000 = vadd.f32 %v3999, %v3969
        %v4001 = vadd.f32 %v4000, %v3970
        %v4002 = vadd.f32 %v4001, %v3971
        %v4003 = vrot.slane %v4002, 4
        %v4004 = vadd.f32 %v4002, %v4003
        %v4005 = vrot.slane %v4004, 2
        %v4006 = vadd.f32 %v4004, %v4005
        %v4007 = vrot.slane %v4006, 1
        %v4008 = vadd.f32 %v4006, %v4007
        %4009 = vmatpush.msra.mxu0 %v3812
        %4010 = vmatpush.msra.mxu0 %v3811
        %4011 = vmatpush.msra.mxu0 %v3810
        %4012 = vmatpush.msra.mxu0 %v3809
        %4013 = vmatpush.msra.mxu0 %v3808
        %4014 = vmatpush.msra.mxu0 %v3807
        %4015 = vmatpush.msra.mxu0 %v3806
        %4016 = vmatpush.msra.mxu0 %v3805
        %4017 = vmatpush.msra.mxu0 %v3804
        %4018 = vmatpush.msra.mxu0 %v3803
        %4019 = vmatpush.msra.mxu0 %v3802
        %4020 = vmatpush.msra.mxu0 %v3801
        %4021 = vmatpush.msra.mxu0 %v3800
        %4022 = vmatpush.msra.mxu0 %v3799
        %4023 = vmatpush.msra.mxu0 %v3798
        %4024 = vmatpush.msra.mxu0 %v3797
        %4025 = vmatmul.f32.gmra.mxu0 %v4008
        %v4026 = vpop.f32.mrf.mxu0
        %v4027 = vadd.f32 0.0, %v4026
        %4028 = vdwg.mxu0
        %v4029 = vmul.f32 %v4027, %v3879
        %v4030 = vadd.f32 %v4029, 1e-05
        %v4031 = vrsqrt.pop %v4030
        %v4032 = vmul.f32 %v4031, %v4030
        %v4033 = vmul.f32 %v4032, %v4031
        %v4034 = vmul.f32 0.5, %v4033
        %v4035 = vsub.f32 1.5, %v4034
        %v4036 = vmul.f32 %v4031, %v4035
        %vm4037 = vweird.f32 %v4030
        %vm4038 = vweird.f32 %v4031
        %vm4039 = vmor %vm4037, %vm4038
        %v4040 = vsel %vm4039, %v4031, %v4036
        %v4042 = vsel %vm875, %v4040, 0
        %4044 = vmatpush.msra.mxu0 0.0
        %4045 = vmatpush.msra.mxu0 0.0
        %4046 = vmatpush.msra.mxu0 0.0
        %4047 = vmatpush.msra.mxu0 0.0
        %4048 = vmatpush.msra.mxu0 0.0
        %4049 = vmatpush.msra.mxu0 0.0
        %4050 = vmatpush.msra.mxu0 0.0
        %4051 = vmatpush.msra.mxu0 0.0
        %4052 = vmatpush.msra.mxu0 0.0
        %4053 = vmatpush.msra.mxu0 0.0
        %4054 = vmatpush.msra.mxu0 0.0
        %4055 = vmatpush.msra.mxu0 0.0
        %4056 = vmatpush.msra.mxu0 0.0
        %4057 = vmatpush.msra.mxu0 0.0
        %4058 = vmatpush.msra.mxu0 0.0
        %4059 = vmatpush.msra.mxu0 %v3885
        %4060 = vmatmul.f32.gmra.mxu0 %v4042
        %v4061 = vpop.f32.mrf.mxu0
        %v4062 = vadd.f32 0.0, %v4061
        %4063 = vdwg.mxu0
        %v4064 = vmul.f32 %v4062, %v3814
        %v4065 = vperm.slane %v4064, 0
        %v4066 = vmul.f32 %v3908, %v4065
        %v4067 = vmul.f32 %v3909, %v4065
        %v4068 = vmul.f32 %v3910, %v4065
        %v4069 = vmul.f32 %v3911, %v4065
        %v4070 = vmul.f32 %v3912, %v4065
        %v4071 = vmul.f32 %v3913, %v4065
        %v4072 = vmul.f32 %v3914, %v4065
        %v4073 = vmul.f32 %v3915, %v4065
        %v4074 = vmul.f32 %v3916, %v4065
        %v4075 = vmul.f32 %v3917, %v4065
        %v4076 = vmul.f32 %v3918, %v4065
        %v4077 = vmul.f32 %v3919, %v4065
        %v4078 = vmul.f32 %v3920, %v4065
        %v4079 = vmul.f32 %v3921, %v4065
        %v4080 = vmul.f32 %v3922, %v4065
        %v4081 = vmul.f32 %v3923, %v4065
        %v4082 = vmul.f32 %v3924, %v4065
        %v4083 = vmul.f32 %v3925, %v4065
        %v4084 = vmul.f32 %v3926, %v4065
        %v4085 = vmul.f32 %v3927, %v4065
        %v4086 = vmul.f32 %v3928, %v4065
        %v4087 = vmul.f32 %v3929, %v4065
        %v4088 = vmul.f32 %v3930, %v4065
        %v4089 = vmul.f32 %v3931, %v4065
        %v4090 = vmul.f32 %v3932, %v4065
        %v4091 = vmul.f32 %v3933, %v4065
        %v4092 = vmul.f32 %v3934, %v4065
        %v4093 = vmul.f32 %v3935, %v4065
        %v4094 = vmul.f32 %v3936, %v4065
        %v4095 = vmul.f32 %v3937, %v4065
        %v4096 = vmul.f32 %v3938, %v4065
        %v4097 = vmul.f32 %v3939, %v4065
        %v4099 = vperm.slane %v3815, 0
        %v4101 = vadd.f32 %v4066, %v4099
        %v4102 = vadd.f32 %v4067, %v4099
        %v4103 = vadd.f32 %v4068, %v4099
        %v4104 = vadd.f32 %v4069, %v4099
        %v4105 = vadd.f32 %v4070, %v4099
        %v4106 = vadd.f32 %v4071, %v4099
        %v4107 = vadd.f32 %v4072, %v4099
        %v4108 = vadd.f32 %v4073, %v4099
        %v4109 = vadd.f32 %v4074, %v4099
        %v4110 = vadd.f32 %v4075, %v4099
        %v4111 = vadd.f32 %v4076, %v4099
        %v4112 = vadd.f32 %v4077, %v4099
        %v4113 = vadd.f32 %v4078, %v4099
        %v4114 = vadd.f32 %v4079, %v4099
        %v4115 = vadd.f32 %v4080, %v4099
        %v4116 = vadd.f32 %v4081, %v4099
        %v4117 = vadd.f32 %v4082, %v4099
        %v4118 = vadd.f32 %v4083, %v4099
        %v4119 = vadd.f32 %v4084, %v4099
        %v4120 = vadd.f32 %v4085, %v4099
        %v4121 = vadd.f32 %v4086, %v4099
        %v4122 = vadd.f32 %v4087, %v4099
        %v4123 = vadd.f32 %v4088, %v4099
        %v4124 = vadd.f32 %v4089, %v4099
        %v4125 = vadd.f32 %v4090, %v4099
        %v4126 = vadd.f32 %v4091, %v4099
        %v4127 = vadd.f32 %v4092, %v4099
        %v4128 = vadd.f32 %v4093, %v4099
        %v4129 = vadd.f32 %v4094, %v4099
        %v4130 = vadd.f32 %v4095, %v4099
        %v4131 = vadd.f32 %v4096, %v4099
        %v4132 = vadd.f32 %v4097, %v4099
        %v4133 = vmax.f32 %v4101, 0.0
        %v4134 = vmax.f32 %v4102, 0.0
        %v4135 = vmax.f32 %v4103, 0.0
        %v4136 = vmax.f32 %v4104, 0.0
        %v4137 = vmax.f32 %v4105, 0.0
        %v4138 = vmax.f32 %v4106, 0.0
        %v4139 = vmax.f32 %v4107, 0.0
        %v4140 = vmax.f32 %v4108, 0.0
        %v4141 = vmax.f32 %v4109, 0.0
        %v4142 = vmax.f32 %v4110, 0.0
        %v4143 = vmax.f32 %v4111, 0.0
        %v4144 = vmax.f32 %v4112, 0.0
        %v4145 = vmax.f32 %v4113, 0.0
        %v4146 = vmax.f32 %v4114, 0.0
        %v4147 = vmax.f32 %v4115, 0.0
        %v4148 = vmax.f32 %v4116, 0.0
        %v4149 = vmax.f32 %v4117, 0.0
        %v4150 = vmax.f32 %v4118, 0.0
        %v4151 = vmax.f32 %v4119, 0.0
        %v4152 = vmax.f32 %v4120, 0.0
        %v4153 = vmax.f32 %v4121, 0.0
        %v4154 = vmax.f32 %v4122, 0.0
        %v4155 = vmax.f32 %v4123, 0.0
        %v4156 = vmax.f32 %v4124, 0.0
        %v4157 = vmax.f32 %v4125, 0.0
        %v4158 = vmax.f32 %v4126, 0.0
        %v4159 = vmax.f32 %v4127, 0.0
        %v4160 = vmax.f32 %v4128, 0.0
        %v4161 = vmax.f32 %v4129, 0.0
        %v4162 = vmax.f32 %v4130, 0.0
        %v4163 = vmax.f32 %v4131, 0.0
        %v4164 = vmax.f32 %v4132, 0.0
        %v4165 = vadd.f32 %v586, %v4133
        %v4166 = vadd.f32 %v587, %v4134
        %v4167 = vadd.f32 %v588, %v4135
        %v4168 = vadd.f32 %v589, %v4136
        %v4169 = vadd.f32 %v590, %v4137
        %v4170 = vadd.f32 %v591, %v4138
        %v4171 = vadd.f32 %v592, %v4139
        %v4172 = vadd.f32 %v593, %v4140
        %v4173 = vadd.f32 %v594, %v4141
        %v4174 = vadd.f32 %v595, %v4142
        %v4175 = vadd.f32 %v596, %v4143
        %v4176 = vadd.f32 %v597, %v4144
        %v4177 = vadd.f32 %v598, %v4145
        %v4178 = vadd.f32 %v599, %v4146
        %v4179 = vadd.f32 %v600, %v4147
        %v4180 = vadd.f32 %v601, %v4148
        %v4181 = vadd.f32 %v602, %v4149
        %v4182 = vadd.f32 %v603, %v4150
        %v4183 = vadd.f32 %v604, %v4151
        %v4184 = vadd.f32 %v605, %v4152
        %v4185 = vadd.f32 %v606, %v4153
        %v4186 = vadd.f32 %v607, %v4154
        %v4187 = vadd.f32 %v608, %v4155
        %v4188 = vadd.f32 %v609, %v4156
        %v4189 = vadd.f32 %v610, %v4157
        %v4190 = vadd.f32 %v611, %v4158
        %v4191 = vadd.f32 %v612, %v4159
        %v4192 = vadd.f32 %v613, %v4160
        %v4193 = vadd.f32 %v614, %v4161
        %v4194 = vadd.f32 %v615, %v4162
        %v4195 = vadd.f32 %v616, %v4163
        %v4196 = vadd.f32 %v617, %v4164
        %v4197 = vmax.f32 %v4165, 0.0
        %v4198 = vmax.f32 %v4166, 0.0
        %v4199 = vmax.f32 %v4167, 0.0
        %v4200 = vmax.f32 %v4168, 0.0
        %v4201 = vmax.f32 %v4169, 0.0
        %v4202 = vmax.f32 %v4170, 0.0
        %v4203 = vmax.f32 %v4171, 0.0
        %v4204 = vmax.f32 %v4172, 0.0
        %v4205 = vmax.f32 %v4173, 0.0
        %v4206 = vmax.f32 %v4174, 0.0
        %v4207 = vmax.f32 %v4175, 0.0
        %v4208 = vmax.f32 %v4176, 0.0
        %v4209 = vmax.f32 %v4177, 0.0
        %v4210 = vmax.f32 %v4178, 0.0
        %v4211 = vmax.f32 %v4179, 0.0
        %v4212 = vmax.f32 %v4180, 0.0
        %v4213 = vmax.f32 %v4181, 0.0
        %v4214 = vmax.f32 %v4182, 0.0
        %v4215 = vmax.f32 %v4183, 0.0
        %v4216 = vmax.f32 %v4184, 0.0
        %v4217 = vmax.f32 %v4185, 0.0
        %v4218 = vmax.f32 %v4186, 0.0
        %v4219 = vmax.f32 %v4187, 0.0
        %v4220 = vmax.f32 %v4188, 0.0
        %v4221 = vmax.f32 %v4189, 0.0
        %v4222 = vmax.f32 %v4190, 0.0
        %v4223 = vmax.f32 %v4191, 0.0
        %v4224 = vmax.f32 %v4192, 0.0
        %v4225 = vmax.f32 %v4193, 0.0
        %v4226 = vmax.f32 %v4194, 0.0
        %v4227 = vmax.f32 %v4195, 0.0
        %v4228 = vmax.f32 %v4196, 0.0
        %4229 = vst [vmem:[%s585] sm:$0xff] %v4197
        %4230 = vst [vmem:[%s585 + $0x8] sm:$0xff] %v4198
        %4231 = vst [vmem:[%s585 + $0x10] sm:$0xff] %v4199
        %4232 = vst [vmem:[%s585 + $0x18] sm:$0xff] %v4200
        %4233 = vst [vmem:[%s585 + $0x20] sm:$0xff] %v4201
        %4234 = vst [vmem:[%s585 + $0x28] sm:$0xff] %v4202
        %4235 = vst [vmem:[%s585 + $0x30] sm:$0xff] %v4203
        %4236 = vst [vmem:[%s585 + $0x38] sm:$0xff] %v4204
        %4237 = vst [vmem:[%s585 + $0x40] sm:$0xff] %v4205
        %4238 = vst [vmem:[%s585 + $0x48] sm:$0xff] %v4206
        %4239 = vst [vmem:[%s585 + $0x50] sm:$0xff] %v4207
        %4240 = vst [vmem:[%s585 + $0x58] sm:$0xff] %v4208
        %4241 = vst [vmem:[%s585 + $0x60] sm:$0xff] %v4209
        %4242 = vst [vmem:[%s585 + $0x68] sm:$0xff] %v4210
        %4243 = vst [vmem:[%s585 + $0x70] sm:$0xff] %v4211
        %4244 = vst [vmem:[%s585 + $0x78] sm:$0xff] %v4212
        %4245 = vst [vmem:[%s585 + $0x80] sm:$0xff] %v4213
        %4246 = vst [vmem:[%s585 + $0x88] sm:$0xff] %v4214
        %4247 = vst [vmem:[%s585 + $0x90] sm:$0xff] %v4215
        %4248 = vst [vmem:[%s585 + $0x98] sm:$0xff] %v4216
        %4249 = vst [vmem:[%s585 + $0xa0] sm:$0xff] %v4217
        %4250 = vst [vmem:[%s585 + $0xa8] sm:$0xff] %v4218
        %4251 = vst [vmem:[%s585 + $0xb0] sm:$0xff] %v4219
        %4252 = vst [vmem:[%s585 + $0xb8] sm:$0xff] %v4220
        %4253 = vst [vmem:[%s585 + $0xc0] sm:$0xff] %v4221
        %4254 = vst [vmem:[%s585 + $0xc8] sm:$0xff] %v4222
        %4255 = vst [vmem:[%s585 + $0xd0] sm:$0xff] %v4223
        %4256 = vst [vmem:[%s585 + $0xd8] sm:$0xff] %v4224
        %4257 = vst [vmem:[%s585 + $0xe0] sm:$0xff] %v4225
        %4258 = vst [vmem:[%s585 + $0xe8] sm:$0xff] %v4226
        %4259 = vst [vmem:[%s585 + $0xf0] sm:$0xff] %v4227
        %4260 = vst [vmem:[%s585 + $0xf8] sm:$0xff] %v4228
        %s4261 = sand.u32 %s405, 1
        %s4262 = scalar_lea.sflag [#allocation4], %s4261
        %s4263 = sand.u32 %s405, 1
        %s4264 = smul.addr %s4263, 256
        %s4265 = scalar_lea.vmem [#allocation7], %s4264
        // Predicated region
        $region97: #{tpu_custom_call.1} parent=87 // pred_check
          %p4266 = pneg %p415
        $region98: #{tpu_custom_call.1} parent=87 // pred_check_branch
          %4268 = sbr.rel (%p4266) target = $region100
        $region99: #{tpu_custom_call.1} parent=87 // pred_region
          %4270 = vsyncadd %s4262, 0
          %s4271 = smul.addr %s35, 32
          %s4272 = smul.addr %s4271, 8
          %s4273 = scalar_lea.hbm %s17, %s4272
          %s4274 = sshll.u32 %s4265, 4
          %s4275 = int_to_ptr.vmem [resolvable:$true] %s4274
          %s4276 = sshll.u32 %s4273, 4
          %s4277 = int_to_ptr.hbm [resolvable:$true] %s4276
          %4282 = dma.vmem_to_hbm [thread:$0]  %s4275, 4096, %s4277, %s4262, 128, 128, 8
        $region100: #{tpu_custom_call.1} parent=87 // pred_fallthru
          _
      $region88: #{tpu_custom_call.1} parent=5 // pred_fallthru
        _
      %p4283 = scmp.le.s32.totalorder 2, %s30
      // Predicated region
      $region101: #{tpu_custom_call.1} parent=5 // pred_check
        %p4284 = pneg %p4283
      $region102: #{tpu_custom_call.1} parent=5 // pred_check_branch
        %4286 = sbr.rel (%p4284) target = $region104
      $region103: #{tpu_custom_call.1} parent=5 // pred_region
        %s4287 = ssub.s32 %s30, 2
        // Predicated region
        $region105: #{tpu_custom_call.1} parent=103 // pred_check
          %p4288 = pneg %p421
        $region106: #{tpu_custom_call.1} parent=103 // pred_check_branch
          %4290 = sbr.rel (%p4288) target = $region108
        $region107: #{tpu_custom_call.1} parent=103 // pred_region
          %s4291 = sand.u32 %s406, 1
          %s4292 = scalar_lea.sflag [#allocation4], %s4291
          %s4293 = sand.u32 %s406, 1
          %s4294 = smul.addr %s4293, 256
          %s4295 = scalar_lea.vmem [#allocation7], %s4294
          %4297 = dma.done %s4292, 4096
        $region108: #{tpu_custom_call.1} parent=103 // pred_fallthru
          _
      $region104: #{tpu_custom_call.1} parent=5 // pred_fallthru
        _
    $region6: #{tpu_custom_call.1} parent=1 // loop_footer
      %s34 = sadd.s32 1, %s30
    $region7: #{tpu_custom_call.1} parent=1 // loop_footer_branch
      %29 = sbr.rel target = $region3
    $region8: #{tpu_custom_call.1} parent=1 // loop_exit
      _
    %4298 = vsyncpa [#allocation3], 1
    %s4299 = scalar_lea.sflag [#allocation3], 1
    %4300 = vsyncpa %s4299, 1
    %4301 = vsyncpa [#allocation6], 1
    %4302 = vsyncpa [#allocation4], 1
    %s4303 = scalar_lea.sflag [#allocation4], 1
    %4304 = vsyncpa %s4303, 1

</llo_original>
